<compile_context>
chip_gen: v7x
topology: tpu7x:2x2x1
jax: 0.10.0
libtpu: 0.0.40
codegen_flags: <defaults>
</compile_context>

<pallas_src>
import functools

import jax
import jax.numpy as jnp
from jax import lax
from jax.experimental import pallas as pl
from jax.experimental.pallas import tpu as pltpu

F32 = jnp.float32
VMEM = pltpu.MemorySpace.VMEM
NEG_BIG = 1e30  # large finite negative additive-mask bias


# --------------------------------------------------------------------------
# Fused PointerNet forward kernel
# --------------------------------------------------------------------------
def _pointer_net_kernel(N, E, H,
                        inp_ref,                     # (B*N, 2)
                        emb_w_ref, emb_b_ref,        # (2, E), (1, E)
                        enc_wih_ref, enc_whh_ref, enc_b_ref,   # (E,4H),(H,4H),(1,4H)
                        dec_wih_ref, dec_whh_ref, dec_b_ref,   # (E,4H),(H,4H),(1,4H)
                        att_ctx_w_ref, att_ctx_b_ref,          # (H,H),(1,H)
                        att_v_ref,                             # (1,H)
                        out_wa_ref,                            # (H,H)  hidden_out, attended half
                        hq_w_ref, hq_b_ref,                    # (H,2H),(1,2H) fused [att_inp | out_wb]
                        dec_in0_ref,                           # (1,E)
                        alphas_ref,                  # out: (B, N, N) f32
                        ptrs_ref):                   # out: (B, N)    i32
    BN = inp_ref.shape[0]
    B = BN // N

    # ---------------- embedding: (B*N, 2) @ (2, E) ----------------
    emb2d = (jnp.dot(inp_ref[...], emb_w_ref[...],
                     preferred_element_type=F32) + emb_b_ref[...])    # (B*N, E)

    # ---------------- encoder LSTM ----------------
    # hoist the input projection out of the time loop: one big matmul
    xproj = (jnp.dot(emb2d, enc_wih_ref[...], preferred_element_type=F32)
             + enc_b_ref[...]).reshape(B, N, 4 * H)                   # (B, N, 4H)
    enc_whh = enc_whh_ref[...]

    h = jnp.zeros((B, H), F32)
    c = jnp.zeros((B, H), F32)
    enc_steps = []
    for t in range(N):                       # static, unrolled (N is small)
        gates = xproj[:, t, :] + jnp.dot(h, enc_whh,
                                         preferred_element_type=F32)  # (B, 4H)
        sig = jax.nn.sigmoid(gates)          # full-vreg activations
        tnh = jnp.tanh(gates)
        i_g = sig[:, 0:H]
        f_g = sig[:, H:2 * H]
        g_g = tnh[:, 2 * H:3 * H]
        o_g = sig[:, 3 * H:4 * H]
        c = f_g * c + i_g * g_g
        h = o_g * jnp.tanh(c)
        enc_steps.append(h)
    enc2d = jnp.stack(enc_steps, axis=1).reshape(B * N, H)            # (B*N, H)

    # ---------------- hoisted projections (one matmul each, outside the loop)
    # Conv1d(k=1) context projection == pointwise linear over the feature axis
    ctx2d = (jnp.dot(enc2d, att_ctx_w_ref[...], preferred_element_type=F32)
             + att_ctx_b_ref[...])                                    # (B*N, H)
    ctx3 = ctx2d.reshape(B, N, H)
    # hidden_out's attended half, pre-applied to the context (linear in alpha)
    ctx_out3 = jnp.dot(ctx2d, out_wa_ref[...],
                       preferred_element_type=F32).reshape(B, N, H)   # (B, N, H)
    # decoder input->gates projection for every candidate decoder input
    dec_b = dec_b_ref[...]
    xgate_all = (jnp.dot(emb2d, dec_wih_ref[...], preferred_element_type=F32)
                 + dec_b).reshape(B, N, 4 * H)                        # (B, N, 4H)
    xgate0 = (jnp.dot(dec_in0_ref[...], dec_wih_ref[...],
                      preferred_element_type=F32) + dec_b)            # (1, 4H)

    # ---------------- decoder loop ----------------
    dec_whh = dec_whh_ref[...]
    hq_w = hq_w_ref[...]                     # (H, 2H): [:, :H]=att input_linear, [:, H:]=hidden_out(h_t)
    hq_b = hq_b_ref[...]                     # (1, 2H): [att_inp_b | out_b]
    v = att_v_ref[...].reshape(1, 1, H)

    x_gate = jnp.broadcast_to(xgate0, (B, 4 * H))                     # step-0 input proj
    h_dec, c_dec = h, c                      # decoder hidden0 = encoder (h, c)
    mask = jnp.ones((B, N), F32)
    lane_iota_f = lax.broadcasted_iota(jnp.int32, (B, N), 1).astype(F32)

    alpha_list = []
    idx_list = []
    for _ in range(N):                       # static, unrolled
        # LSTM cell (input projection already folded into x_gate)
        gates = x_gate + jnp.dot(h_dec, dec_whh, preferred_element_type=F32)
        sig = jax.nn.sigmoid(gates)
        tnh = jnp.tanh(gates)
        i_g = sig[:, 0:H]
        f_g = sig[:, H:2 * H]
        g_g = tnh[:, 2 * H:3 * H]
        o_g = sig[:, 3 * H:4 * H]
        c_t = f_g * c_dec + i_g * g_g
        h_t = o_g * jnp.tanh(c_t)                                     # (B, H)

        # fused projections of h_t: attention input_linear + hidden_out(h_t)
        hq = jnp.dot(h_t, hq_w, preferred_element_type=F32) + hq_b    # (B, 2H)
        inp = hq[:, 0:H]
        hout = hq[:, H:2 * H]

        # pointer attention
        tt = jnp.tanh(inp[:, None, :] + ctx3)                         # (B, N, H)
        att = jnp.sum(tt * v, axis=2)                                 # (B, N)

        # masked softmax (finite additive mask bias; exp underflows to 0)
        att = att + (mask - 1.0) * NEG_BIG
        att = att - jnp.max(att, axis=1, keepdims=True)
        e = jnp.exp(att)
        alpha = e / jnp.sum(e, axis=1, keepdims=True)                 # (B, N)

        # attended hidden state already projected through hidden_out's W_a
        h_att = jnp.sum(ctx_out3 * alpha[:, :, None], axis=1)         # (B, H)
        h_new = jnp.tanh(h_att + hout)                                # (B, H)

        # greedy pointer selection (first max index, like torch.max)
        masked = alpha * mask
        mmax = jnp.max(masked, axis=1, keepdims=True)
        idx_f = jnp.min(jnp.where(masked == mmax, lane_iota_f, float(N)),
                        axis=1, keepdims=True)                        # (B, 1)
        one_hot = (lane_iota_f == idx_f).astype(F32)                  # (B, N)
        mask = mask * (1.0 - one_hot)
        # next decoder input: gather the PRE-PROJECTED gate input (lane-dense 4H)
        x_gate = jnp.sum(one_hot[:, :, None] * xgate_all, axis=1)     # (B, 4H)

        h_dec, c_dec = h_new, c_t
        alpha_list.append(alpha)
        idx_list.append(idx_f)

    # single write of both output slabs
    alphas_ref[...] = jnp.stack(alpha_list, axis=1)                   # (B, N, N)
    ptrs_ref[...] = jnp.concatenate(idx_list, axis=1).astype(jnp.int32)  # (B, N)


# --------------------------------------------------------------------------
# Wrapper: one pallas_call for the whole forward pass
# --------------------------------------------------------------------------
def pointer_net_forward(params, inputs):
    B, N, _ = inputs.shape
    E = params["emb_w"].shape[1]
    H = params["att_inp_w"].shape[0]

    # one-time weight plumbing (tiny): split hidden_out, fuse the h_t-side
    # projections so the decode loop runs a single (H, 2H) matmul per step
    out_w = params["out_w"]                              # (2H, H)
    out_wa = out_w[0:H, :]                               # attended-hidden half
    out_wb = out_w[H:2 * H, :]                           # h_t half
    hq_w = jnp.concatenate([params["att_inp_w"], out_wb], axis=1)           # (H, 2H)
    hq_b = jnp.concatenate([params["att_inp_b"], params["out_b"]], axis=1)  # (1, 2H)

    kernel = functools.partial(_pointer_net_kernel, N, E, H)
    alphas, pointers = pl.pallas_call(
        kernel,
        out_shape=(jax.ShapeDtypeStruct((B, N, N), F32),
                   jax.ShapeDtypeStruct((B, N), jnp.int32)),
        in_specs=[pl.BlockSpec(memory_space=VMEM)] * 16,
        out_specs=(pl.BlockSpec(memory_space=VMEM),
                   pl.BlockSpec(memory_space=VMEM)),
    )(inputs.reshape(B * N, 2),
      params["emb_w"], params["emb_b"],
      params["enc_wih"], params["enc_whh"], params["enc_b"],
      params["dec_i2h_w"], params["dec_h2h_w"], params["dec_b"],
      params["att_ctx_w"], params["att_ctx_b"],
      params["att_V"],
      out_wa, hq_w, hq_b,
      params["dec_input0"])
    return alphas, pointers


# --------------------------------------------------------------------------
# Deterministic synthetic parameters
# --------------------------------------------------------------------------
def init_params(key, embedding_dim, hidden_dim):
    E, H = embedding_dim, hidden_dim
    keys = jax.random.split(key, 16)

    def u(k, shape, scale):
        return jax.random.uniform(k, shape, F32, -scale, scale)

    return {
        # nn.Linear(2, E)
        "emb_w": u(keys[0], (2, E), 0.5),
        "emb_b": u(keys[1], (1, E), 0.5),
        # encoder nn.LSTM(E, H, 1)  (weights transposed; both biases summed)
        "enc_wih": u(keys[2], (E, 4 * H), 1.0 / (H ** 0.5)),
        "enc_whh": u(keys[3], (H, 4 * H), 1.0 / (H ** 0.5)),
        "enc_b":   u(keys[4], (1, 4 * H), 1.0 / (H ** 0.5)),
        # decoder LSTM-cell linears (input_to_hidden + hidden_to_hidden)
        "dec_i2h_w": u(keys[5], (E, 4 * H), 1.0 / (E ** 0.5)),
        "dec_h2h_w": u(keys[6], (H, 4 * H), 1.0 / (H ** 0.5)),
        "dec_b":     u(keys[7], (1, 4 * H), 1.0 / (H ** 0.5)),
        # attention
        "att_inp_w": u(keys[8], (H, H), 1.0 / (H ** 0.5)),
        "att_inp_b": u(keys[9], (1, H), 1.0 / (H ** 0.5)),
        "att_ctx_w": u(keys[10], (H, H), 1.0 / (H ** 0.5)),
        "att_ctx_b": u(keys[11], (1, H), 1.0 / (H ** 0.5)),
        "att_V":     u(keys[12], (1, H), 1.0),        # nn.init.uniform_(-1, 1)
        # hidden_out: Linear(2H, H)
        "out_w": u(keys[13], (2 * H, H), 1.0 / ((2 * H) ** 0.5)),
        "out_b": u(keys[14], (1, H), 1.0 / ((2 * H) ** 0.5)),
        # decoder_input0
        "dec_input0": u(keys[15], (1, E), 1.0),
    }


# --------------------------------------------------------------------------
# Pure-JAX reference for the argmax-free prefix (embedding + encoder + ctx +
# first decode step), used to validate the kernel math.
# --------------------------------------------------------------------------
def _reference_first_alpha(params, inputs):
    B, N, _ = inputs.shape
    E = params["emb_w"].shape[1]
    H = params["att_inp_w"].shape[0]

    emb = inputs.reshape(B * N, 2) @ params["emb_w"] + params["emb_b"]
    emb = emb.reshape(B, N, E)

    h = jnp.zeros((B, H), F32)
    c = jnp.zeros((B, H), F32)
    enc = []
    for t in range(N):
        g = emb[:, t, :] @ params["enc_wih"] + h @ params["enc_whh"] + params["enc_b"]
        i_g = jax.nn.sigmoid(g[:, 0:H])
        f_g = jax.nn.sigmoid(g[:, H:2 * H])
        g_g = jnp.tanh(g[:, 2 * H:3 * H])
        o_g = jax.nn.sigmoid(g[:, 3 * H:4 * H])
        c = f_g * c + i_g * g_g
        h = o_g * jnp.tanh(c)
        enc.append(h)
    enc = jnp.stack(enc, axis=1)
    ctx = (enc.reshape(B * N, H) @ params["att_ctx_w"]
           + params["att_ctx_b"]).reshape(B, N, H)

    x = jnp.broadcast_to(params["dec_input0"], (B, E))
    g = x @ params["dec_i2h_w"] + h @ params["dec_h2h_w"] + params["dec_b"]
    i_g = jax.nn.sigmoid(g[:, 0:H])
    f_g = jax.nn.sigmoid(g[:, H:2 * H])
    g_g = jnp.tanh(g[:, 2 * H:3 * H])
    o_g = jax.nn.sigmoid(g[:, 3 * H:4 * H])
    c_t = f_g * c + i_g * g_g
    h_t = o_g * jnp.tanh(c_t)

    inp = h_t @ params["att_inp_w"] + params["att_inp_b"]
    att = jnp.sum(jnp.tanh(inp[:, None, :] + ctx) * params["att_V"][0][None, None, :],
                  axis=2)
    return jax.nn.softmax(att, axis=1)


if __name__ == "__main__":
    B, N, E, H = 2, 8, 32, 32
    key = jax.random.PRNGKey(0)
    pkey, xkey = jax.random.split(key)

    params = init_params(pkey, E, H)
    inputs = jax.random.uniform(xkey, (B, N, 2), F32)   # 2-D points, as in PointerNet

    fwd = jax.jit(pointer_net_forward)
    outputs, pointers = fwd(params, inputs)
    jax.block_until_ready((outputs, pointers))

    # shape / validity checks
    assert outputs.shape == (B, N, N)
    assert pointers.shape == (B, N)
    assert bool(jnp.all(jnp.isfinite(outputs)))
    # every decode step is a probability distribution
    assert bool(jnp.all(jnp.abs(outputs.sum(axis=-1) - 1.0) < 1e-3))
    # greedy masked decoding yields a permutation of the input positions
    assert bool(jnp.all(jnp.sort(pointers, axis=1) ==
                        jnp.arange(N, dtype=jnp.int32)[None, :]))
    # math check against a pure-JAX reference for the argmax-free first step
    ref_alpha0 = _reference_first_alpha(params, inputs)
    assert bool(jnp.all(jnp.abs(outputs[:, 0, :] - ref_alpha0) < 1e-3))

    print("KERNEL_OK")
</pallas_src>

<mosaic_0001>
module attributes {stable_mosaic.version = 11 : i64} {
  func.func @_pointer_net_kernel(%arg0: memref<16x2xf32, #tpu.memory_space<vmem>>, %arg1: memref<2x32xf32, #tpu.memory_space<vmem>>, %arg2: memref<1x32xf32, #tpu.memory_space<vmem>>, %arg3: memref<32x128xf32, #tpu.memory_space<vmem>>, %arg4: memref<32x128xf32, #tpu.memory_space<vmem>>, %arg5: memref<1x128xf32, #tpu.memory_space<vmem>>, %arg6: memref<32x128xf32, #tpu.memory_space<vmem>>, %arg7: memref<32x128xf32, #tpu.memory_space<vmem>>, %arg8: memref<1x128xf32, #tpu.memory_space<vmem>>, %arg9: memref<32x32xf32, #tpu.memory_space<vmem>>, %arg10: memref<1x32xf32, #tpu.memory_space<vmem>>, %arg11: memref<1x32xf32, #tpu.memory_space<vmem>>, %arg12: memref<32x32xf32, #tpu.memory_space<vmem>>, %arg13: memref<32x64xf32, #tpu.memory_space<vmem>>, %arg14: memref<1x64xf32, #tpu.memory_space<vmem>>, %arg15: memref<1x32xf32, #tpu.memory_space<vmem>>, %arg16: memref<2x8x8xf32, #tpu.memory_space<vmem>>, %arg17: memref<2x8xi32, #tpu.memory_space<vmem>>) attributes {dimension_semantics = [], scalar_prefetch = 0 : i64, scratch_operands = 0 : i64, tpu.core_type = #tpu.core_type<tc>} {
    %c0 = arith.constant 0 : index
    %c0_0 = arith.constant 0 : index
    %0 = vector.load %arg0[%c0, %c0_0] : memref<16x2xf32, #tpu.memory_space<vmem>>, vector<16x2xf32>
    %c0_1 = arith.constant 0 : index
    %c0_2 = arith.constant 0 : index
    %1 = vector.load %arg1[%c0_1, %c0_2] : memref<2x32xf32, #tpu.memory_space<vmem>>, vector<2x32xf32>
    %cst = arith.constant dense<0.000000e+00> : vector<16x32xf32>
    %2 = tpu.matmul %0, %1, %cst {dimension_numbers = #tpu.dot_dimension_numbers<[1], [0], [0], [1], [0, 0, 1, 1], [], []>} : vector<16x2xf32>, vector<2x32xf32>, vector<16x32xf32> -> vector<16x32xf32>
    %c0_3 = arith.constant 0 : index
    %c0_4 = arith.constant 0 : index
    %3 = vector.load %arg2[%c0_3, %c0_4] : memref<1x32xf32, #tpu.memory_space<vmem>>, vector<1x32xf32>
    %4 = vector.broadcast %3 : vector<1x32xf32> to vector<16x32xf32>
    %5 = arith.addf %2, %4 : vector<16x32xf32>
    %c0_5 = arith.constant 0 : index
    %c0_6 = arith.constant 0 : index
    %6 = vector.load %arg3[%c0_5, %c0_6] : memref<32x128xf32, #tpu.memory_space<vmem>>, vector<32x128xf32>
    %cst_7 = arith.constant dense<0.000000e+00> : vector<16x128xf32>
    %7 = tpu.matmul %5, %6, %cst_7 {dimension_numbers = #tpu.dot_dimension_numbers<[1], [0], [0], [1], [0, 0, 1, 1], [], []>} : vector<16x32xf32>, vector<32x128xf32>, vector<16x128xf32> -> vector<16x128xf32>
    %c0_8 = arith.constant 0 : index
    %c0_9 = arith.constant 0 : index
    %8 = vector.load %arg5[%c0_8, %c0_9] : memref<1x128xf32, #tpu.memory_space<vmem>>, vector<1x128xf32>
    %9 = vector.broadcast %8 : vector<1x128xf32> to vector<16x128xf32>
    %10 = arith.addf %7, %9 : vector<16x128xf32>
    %11 = vector.shape_cast %10 : vector<16x128xf32> to vector<2x8x128xf32>
    %c0_10 = arith.constant 0 : index
    %c0_11 = arith.constant 0 : index
    %12 = vector.load %arg4[%c0_10, %c0_11] : memref<32x128xf32, #tpu.memory_space<vmem>>, vector<32x128xf32>
    %cst_12 = arith.constant 0.000000e+00 : f32
    %13 = vector.broadcast %cst_12 : f32 to vector<2x32xf32>
    %cst_13 = arith.constant 0.000000e+00 : f32
    %14 = vector.broadcast %cst_13 : f32 to vector<2x32xf32>
    %15 = vector.extract_strided_slice %11 {offsets = [0, 0, 0], sizes = [2, 1, 128], strides = [1, 1, 1]} : vector<2x8x128xf32> to vector<2x1x128xf32>
    %16 = vector.shape_cast %15 : vector<2x1x128xf32> to vector<2x128xf32>
    %cst_14 = arith.constant dense<0.000000e+00> : vector<2x128xf32>
    %17 = tpu.matmul %13, %12, %cst_14 {dimension_numbers = #tpu.dot_dimension_numbers<[1], [0], [0], [1], [0, 0, 1, 1], [], []>} : vector<2x32xf32>, vector<32x128xf32>, vector<2x128xf32> -> vector<2x128xf32>
    %18 = arith.addf %16, %17 : vector<2x128xf32>
    %19 = arith.negf %18 : vector<2x128xf32>
    %20 = math.exp %19 : vector<2x128xf32>
    %cst_15 = arith.constant 1.000000e+00 : f32
    %21 = vector.broadcast %cst_15 : f32 to vector<2x128xf32>
    %22 = arith.addf %21, %20 : vector<2x128xf32>
    %23 = arith.divf %21, %22 : vector<2x128xf32>
    %24 = math.tanh %18 : vector<2x128xf32>
    %25 = vector.extract_strided_slice %23 {offsets = [0, 0], sizes = [2, 32], strides = [1, 1]} : vector<2x128xf32> to vector<2x32xf32>
    %26 = vector.extract_strided_slice %23 {offsets = [0, 32], sizes = [2, 32], strides = [1, 1]} : vector<2x128xf32> to vector<2x32xf32>
    %27 = vector.extract_strided_slice %24 {offsets = [0, 64], sizes = [2, 32], strides = [1, 1]} : vector<2x128xf32> to vector<2x32xf32>
    %28 = vector.extract_strided_slice %23 {offsets = [0, 96], sizes = [2, 32], strides = [1, 1]} : vector<2x128xf32> to vector<2x32xf32>
    %29 = arith.mulf %26, %14 : vector<2x32xf32>
    %30 = arith.mulf %25, %27 : vector<2x32xf32>
    %31 = arith.addf %29, %30 : vector<2x32xf32>
    %32 = math.tanh %31 : vector<2x32xf32>
    %33 = arith.mulf %28, %32 : vector<2x32xf32>
    %34 = vector.extract_strided_slice %11 {offsets = [0, 1, 0], sizes = [2, 1, 128], strides = [1, 1, 1]} : vector<2x8x128xf32> to vector<2x1x128xf32>
    %35 = vector.shape_cast %34 : vector<2x1x128xf32> to vector<2x128xf32>
    %cst_16 = arith.constant dense<0.000000e+00> : vector<2x128xf32>
    %36 = tpu.matmul %33, %12, %cst_16 {dimension_numbers = #tpu.dot_dimension_numbers<[1], [0], [0], [1], [0, 0, 1, 1], [], []>} : vector<2x32xf32>, vector<32x128xf32>, vector<2x128xf32> -> vector<2x128xf32>
    %37 = arith.addf %35, %36 : vector<2x128xf32>
    %38 = arith.negf %37 : vector<2x128xf32>
    %39 = math.exp %38 : vector<2x128xf32>
    %cst_17 = arith.constant 1.000000e+00 : f32
    %40 = vector.broadcast %cst_17 : f32 to vector<2x128xf32>
    %41 = arith.addf %40, %39 : vector<2x128xf32>
    %42 = arith.divf %40, %41 : vector<2x128xf32>
    %43 = math.tanh %37 : vector<2x128xf32>
    %44 = vector.extract_strided_slice %42 {offsets = [0, 0], sizes = [2, 32], strides = [1, 1]} : vector<2x128xf32> to vector<2x32xf32>
    %45 = vector.extract_strided_slice %42 {offsets = [0, 32], sizes = [2, 32], strides = [1, 1]} : vector<2x128xf32> to vector<2x32xf32>
    %46 = vector.extract_strided_slice %43 {offsets = [0, 64], sizes = [2, 32], strides = [1, 1]} : vector<2x128xf32> to vector<2x32xf32>
    %47 = vector.extract_strided_slice %42 {offsets = [0, 96], sizes = [2, 32], strides = [1, 1]} : vector<2x128xf32> to vector<2x32xf32>
    %48 = arith.mulf %45, %31 : vector<2x32xf32>
    %49 = arith.mulf %44, %46 : vector<2x32xf32>
    %50 = arith.addf %48, %49 : vector<2x32xf32>
    %51 = math.tanh %50 : vector<2x32xf32>
    %52 = arith.mulf %47, %51 : vector<2x32xf32>
    %53 = vector.extract_strided_slice %11 {offsets = [0, 2, 0], sizes = [2, 1, 128], strides = [1, 1, 1]} : vector<2x8x128xf32> to vector<2x1x128xf32>
    %54 = vector.shape_cast %53 : vector<2x1x128xf32> to vector<2x128xf32>
    %cst_18 = arith.constant dense<0.000000e+00> : vector<2x128xf32>
    %55 = tpu.matmul %52, %12, %cst_18 {dimension_numbers = #tpu.dot_dimension_numbers<[1], [0], [0], [1], [0, 0, 1, 1], [], []>} : vector<2x32xf32>, vector<32x128xf32>, vector<2x128xf32> -> vector<2x128xf32>
    %56 = arith.addf %54, %55 : vector<2x128xf32>
    %57 = arith.negf %56 : vector<2x128xf32>
    %58 = math.exp %57 : vector<2x128xf32>
    %cst_19 = arith.constant 1.000000e+00 : f32
    %59 = vector.broadcast %cst_19 : f32 to vector<2x128xf32>
    %60 = arith.addf %59, %58 : vector<2x128xf32>
    %61 = arith.divf %59, %60 : vector<2x128xf32>
    %62 = math.tanh %56 : vector<2x128xf32>
    %63 = vector.extract_strided_slice %61 {offsets = [0, 0], sizes = [2, 32], strides = [1, 1]} : vector<2x128xf32> to vector<2x32xf32>
    %64 = vector.extract_strided_slice %61 {offsets = [0, 32], sizes = [2, 32], strides = [1, 1]} : vector<2x128xf32> to vector<2x32xf32>
    %65 = vector.extract_strided_slice %62 {offsets = [0, 64], sizes = [2, 32], strides = [1, 1]} : vector<2x128xf32> to vector<2x32xf32>
    %66 = vector.extract_strided_slice %61 {offsets = [0, 96], sizes = [2, 32], strides = [1, 1]} : vector<2x128xf32> to vector<2x32xf32>
    %67 = arith.mulf %64, %50 : vector<2x32xf32>
    %68 = arith.mulf %63, %65 : vector<2x32xf32>
    %69 = arith.addf %67, %68 : vector<2x32xf32>
    %70 = math.tanh %69 : vector<2x32xf32>
    %71 = arith.mulf %66, %70 : vector<2x32xf32>
    %72 = vector.extract_strided_slice %11 {offsets = [0, 3, 0], sizes = [2, 1, 128], strides = [1, 1, 1]} : vector<2x8x128xf32> to vector<2x1x128xf32>
    %73 = vector.shape_cast %72 : vector<2x1x128xf32> to vector<2x128xf32>
    %cst_20 = arith.constant dense<0.000000e+00> : vector<2x128xf32>
    %74 = tpu.matmul %71, %12, %cst_20 {dimension_numbers = #tpu.dot_dimension_numbers<[1], [0], [0], [1], [0, 0, 1, 1], [], []>} : vector<2x32xf32>, vector<32x128xf32>, vector<2x128xf32> -> vector<2x128xf32>
    %75 = arith.addf %73, %74 : vector<2x128xf32>
    %76 = arith.negf %75 : vector<2x128xf32>
    %77 = math.exp %76 : vector<2x128xf32>
    %cst_21 = arith.constant 1.000000e+00 : f32
    %78 = vector.broadcast %cst_21 : f32 to vector<2x128xf32>
    %79 = arith.addf %78, %77 : vector<2x128xf32>
    %80 = arith.divf %78, %79 : vector<2x128xf32>
    %81 = math.tanh %75 : vector<2x128xf32>
    %82 = vector.extract_strided_slice %80 {offsets = [0, 0], sizes = [2, 32], strides = [1, 1]} : vector<2x128xf32> to vector<2x32xf32>
    %83 = vector.extract_strided_slice %80 {offsets = [0, 32], sizes = [2, 32], strides = [1, 1]} : vector<2x128xf32> to vector<2x32xf32>
    %84 = vector.extract_strided_slice %81 {offsets = [0, 64], sizes = [2, 32], strides = [1, 1]} : vector<2x128xf32> to vector<2x32xf32>
    %85 = vector.extract_strided_slice %80 {offsets = [0, 96], sizes = [2, 32], strides = [1, 1]} : vector<2x128xf32> to vector<2x32xf32>
    %86 = arith.mulf %83, %69 : vector<2x32xf32>
    %87 = arith.mulf %82, %84 : vector<2x32xf32>
    %88 = arith.addf %86, %87 : vector<2x32xf32>
    %89 = math.tanh %88 : vector<2x32xf32>
    %90 = arith.mulf %85, %89 : vector<2x32xf32>
    %91 = vector.extract_strided_slice %11 {offsets = [0, 4, 0], sizes = [2, 1, 128], strides = [1, 1, 1]} : vector<2x8x128xf32> to vector<2x1x128xf32>
    %92 = vector.shape_cast %91 : vector<2x1x128xf32> to vector<2x128xf32>
    %cst_22 = arith.constant dense<0.000000e+00> : vector<2x128xf32>
    %93 = tpu.matmul %90, %12, %cst_22 {dimension_numbers = #tpu.dot_dimension_numbers<[1], [0], [0], [1], [0, 0, 1, 1], [], []>} : vector<2x32xf32>, vector<32x128xf32>, vector<2x128xf32> -> vector<2x128xf32>
    %94 = arith.addf %92, %93 : vector<2x128xf32>
    %95 = arith.negf %94 : vector<2x128xf32>
    %96 = math.exp %95 : vector<2x128xf32>
    %cst_23 = arith.constant 1.000000e+00 : f32
    %97 = vector.broadcast %cst_23 : f32 to vector<2x128xf32>
    %98 = arith.addf %97, %96 : vector<2x128xf32>
    %99 = arith.divf %97, %98 : vector<2x128xf32>
    %100 = math.tanh %94 : vector<2x128xf32>
    %101 = vector.extract_strided_slice %99 {offsets = [0, 0], sizes = [2, 32], strides = [1, 1]} : vector<2x128xf32> to vector<2x32xf32>
    %102 = vector.extract_strided_slice %99 {offsets = [0, 32], sizes = [2, 32], strides = [1, 1]} : vector<2x128xf32> to vector<2x32xf32>
    %103 = vector.extract_strided_slice %100 {offsets = [0, 64], sizes = [2, 32], strides = [1, 1]} : vector<2x128xf32> to vector<2x32xf32>
    %104 = vector.extract_strided_slice %99 {offsets = [0, 96], sizes = [2, 32], strides = [1, 1]} : vector<2x128xf32> to vector<2x32xf32>
    %105 = arith.mulf %102, %88 : vector<2x32xf32>
    %106 = arith.mulf %101, %103 : vector<2x32xf32>
    %107 = arith.addf %105, %106 : vector<2x32xf32>
    %108 = math.tanh %107 : vector<2x32xf32>
    %109 = arith.mulf %104, %108 : vector<2x32xf32>
    %110 = vector.extract_strided_slice %11 {offsets = [0, 5, 0], sizes = [2, 1, 128], strides = [1, 1, 1]} : vector<2x8x128xf32> to vector<2x1x128xf32>
    %111 = vector.shape_cast %110 : vector<2x1x128xf32> to vector<2x128xf32>
    %cst_24 = arith.constant dense<0.000000e+00> : vector<2x128xf32>
    %112 = tpu.matmul %109, %12, %cst_24 {dimension_numbers = #tpu.dot_dimension_numbers<[1], [0], [0], [1], [0, 0, 1, 1], [], []>} : vector<2x32xf32>, vector<32x128xf32>, vector<2x128xf32> -> vector<2x128xf32>
    %113 = arith.addf %111, %112 : vector<2x128xf32>
    %114 = arith.negf %113 : vector<2x128xf32>
    %115 = math.exp %114 : vector<2x128xf32>
    %cst_25 = arith.constant 1.000000e+00 : f32
    %116 = vector.broadcast %cst_25 : f32 to vector<2x128xf32>
    %117 = arith.addf %116, %115 : vector<2x128xf32>
    %118 = arith.divf %116, %117 : vector<2x128xf32>
    %119 = math.tanh %113 : vector<2x128xf32>
    %120 = vector.extract_strided_slice %118 {offsets = [0, 0], sizes = [2, 32], strides = [1, 1]} : vector<2x128xf32> to vector<2x32xf32>
    %121 = vector.extract_strided_slice %118 {offsets = [0, 32], sizes = [2, 32], strides = [1, 1]} : vector<2x128xf32> to vector<2x32xf32>
    %122 = vector.extract_strided_slice %119 {offsets = [0, 64], sizes = [2, 32], strides = [1, 1]} : vector<2x128xf32> to vector<2x32xf32>
    %123 = vector.extract_strided_slice %118 {offsets = [0, 96], sizes = [2, 32], strides = [1, 1]} : vector<2x128xf32> to vector<2x32xf32>
    %124 = arith.mulf %121, %107 : vector<2x32xf32>
    %125 = arith.mulf %120, %122 : vector<2x32xf32>
    %126 = arith.addf %124, %125 : vector<2x32xf32>
    %127 = math.tanh %126 : vector<2x32xf32>
    %128 = arith.mulf %123, %127 : vector<2x32xf32>
    %129 = vector.extract_strided_slice %11 {offsets = [0, 6, 0], sizes = [2, 1, 128], strides = [1, 1, 1]} : vector<2x8x128xf32> to vector<2x1x128xf32>
    %130 = vector.shape_cast %129 : vector<2x1x128xf32> to vector<2x128xf32>
    %cst_26 = arith.constant dense<0.000000e+00> : vector<2x128xf32>
    %131 = tpu.matmul %128, %12, %cst_26 {dimension_numbers = #tpu.dot_dimension_numbers<[1], [0], [0], [1], [0, 0, 1, 1], [], []>} : vector<2x32xf32>, vector<32x128xf32>, vector<2x128xf32> -> vector<2x128xf32>
    %132 = arith.addf %130, %131 : vector<2x128xf32>
    %133 = arith.negf %132 : vector<2x128xf32>
    %134 = math.exp %133 : vector<2x128xf32>
    %cst_27 = arith.constant 1.000000e+00 : f32
    %135 = vector.broadcast %cst_27 : f32 to vector<2x128xf32>
    %136 = arith.addf %135, %134 : vector<2x128xf32>
    %137 = arith.divf %135, %136 : vector<2x128xf32>
    %138 = math.tanh %132 : vector<2x128xf32>
    %139 = vector.extract_strided_slice %137 {offsets = [0, 0], sizes = [2, 32], strides = [1, 1]} : vector<2x128xf32> to vector<2x32xf32>
    %140 = vector.extract_strided_slice %137 {offsets = [0, 32], sizes = [2, 32], strides = [1, 1]} : vector<2x128xf32> to vector<2x32xf32>
    %141 = vector.extract_strided_slice %138 {offsets = [0, 64], sizes = [2, 32], strides = [1, 1]} : vector<2x128xf32> to vector<2x32xf32>
    %142 = vector.extract_strided_slice %137 {offsets = [0, 96], sizes = [2, 32], strides = [1, 1]} : vector<2x128xf32> to vector<2x32xf32>
    %143 = arith.mulf %140, %126 : vector<2x32xf32>
    %144 = arith.mulf %139, %141 : vector<2x32xf32>
    %145 = arith.addf %143, %144 : vector<2x32xf32>
    %146 = math.tanh %145 : vector<2x32xf32>
    %147 = arith.mulf %142, %146 : vector<2x32xf32>
    %148 = vector.extract_strided_slice %11 {offsets = [0, 7, 0], sizes = [2, 1, 128], strides = [1, 1, 1]} : vector<2x8x128xf32> to vector<2x1x128xf32>
    %149 = vector.shape_cast %148 : vector<2x1x128xf32> to vector<2x128xf32>
    %cst_28 = arith.constant dense<0.000000e+00> : vector<2x128xf32>
    %150 = tpu.matmul %147, %12, %cst_28 {dimension_numbers = #tpu.dot_dimension_numbers<[1], [0], [0], [1], [0, 0, 1, 1], [], []>} : vector<2x32xf32>, vector<32x128xf32>, vector<2x128xf32> -> vector<2x128xf32>
    %151 = arith.addf %149, %150 : vector<2x128xf32>
    %152 = arith.negf %151 : vector<2x128xf32>
    %153 = math.exp %152 : vector<2x128xf32>
    %cst_29 = arith.constant 1.000000e+00 : f32
    %154 = vector.broadcast %cst_29 : f32 to vector<2x128xf32>
    %155 = arith.addf %154, %153 : vector<2x128xf32>
    %156 = arith.divf %154, %155 : vector<2x128xf32>
    %157 = math.tanh %151 : vector<2x128xf32>
    %158 = vector.extract_strided_slice %156 {offsets = [0, 0], sizes = [2, 32], strides = [1, 1]} : vector<2x128xf32> to vector<2x32xf32>
    %159 = vector.extract_strided_slice %156 {offsets = [0, 32], sizes = [2, 32], strides = [1, 1]} : vector<2x128xf32> to vector<2x32xf32>
    %160 = vector.extract_strided_slice %157 {offsets = [0, 64], sizes = [2, 32], strides = [1, 1]} : vector<2x128xf32> to vector<2x32xf32>
    %161 = vector.extract_strided_slice %156 {offsets = [0, 96], sizes = [2, 32], strides = [1, 1]} : vector<2x128xf32> to vector<2x32xf32>
    %162 = arith.mulf %159, %145 : vector<2x32xf32>
    %163 = arith.mulf %158, %160 : vector<2x32xf32>
    %164 = arith.addf %162, %163 : vector<2x32xf32>
    %165 = math.tanh %164 : vector<2x32xf32>
    %166 = arith.mulf %161, %165 : vector<2x32xf32>
    %167 = vector.shape_cast %33 : vector<2x32xf32> to vector<2x1x32xf32>
    %168 = vector.shape_cast %52 : vector<2x32xf32> to vector<2x1x32xf32>
    %169 = vector.shape_cast %71 : vector<2x32xf32> to vector<2x1x32xf32>
    %170 = vector.shape_cast %90 : vector<2x32xf32> to vector<2x1x32xf32>
    %171 = vector.shape_cast %109 : vector<2x32xf32> to vector<2x1x32xf32>
    %172 = vector.shape_cast %128 : vector<2x32xf32> to vector<2x1x32xf32>
    %173 = vector.shape_cast %147 : vector<2x32xf32> to vector<2x1x32xf32>
    %174 = vector.shape_cast %166 : vector<2x32xf32> to vector<2x1x32xf32>
    %175 = tpu.concatenate %167, %168, %169, %170, %171, %172, %173, %174 in 1 : vector<2x1x32xf32>, vector<2x1x32xf32>, vector<2x1x32xf32>, vector<2x1x32xf32>, vector<2x1x32xf32>, vector<2x1x32xf32>, vector<2x1x32xf32>, vector<2x1x32xf32> -> vector<2x8x32xf32>
    %176 = vector.shape_cast %175 : vector<2x8x32xf32> to vector<16x32xf32>
    %c0_30 = arith.constant 0 : index
    %c0_31 = arith.constant 0 : index
    %177 = vector.load %arg9[%c0_30, %c0_31] : memref<32x32xf32, #tpu.memory_space<vmem>>, vector<32x32xf32>
    %cst_32 = arith.constant dense<0.000000e+00> : vector<16x32xf32>
    %178 = tpu.matmul %176, %177, %cst_32 {dimension_numbers = #tpu.dot_dimension_numbers<[1], [0], [0], [1], [0, 0, 1, 1], [], []>} : vector<16x32xf32>, vector<32x32xf32>, vector<16x32xf32> -> vector<16x32xf32>
    %c0_33 = arith.constant 0 : index
    %c0_34 = arith.constant 0 : index
    %179 = vector.load %arg10[%c0_33, %c0_34] : memref<1x32xf32, #tpu.memory_space<vmem>>, vector<1x32xf32>
    %180 = vector.broadcast %179 : vector<1x32xf32> to vector<16x32xf32>
    %181 = arith.addf %178, %180 : vector<16x32xf32>
    %182 = vector.shape_cast %181 : vector<16x32xf32> to vector<2x8x32xf32>
    %c0_35 = arith.constant 0 : index
    %c0_36 = arith.constant 0 : index
    %183 = vector.load %arg12[%c0_35, %c0_36] : memref<32x32xf32, #tpu.memory_space<vmem>>, vector<32x32xf32>
    %cst_37 = arith.constant dense<0.000000e+00> : vector<16x32xf32>
    %184 = tpu.matmul %181, %183, %cst_37 {dimension_numbers = #tpu.dot_dimension_numbers<[1], [0], [0], [1], [0, 0, 1, 1], [], []>} : vector<16x32xf32>, vector<32x32xf32>, vector<16x32xf32> -> vector<16x32xf32>
    %185 = vector.shape_cast %184 : vector<16x32xf32> to vector<2x8x32xf32>
    %c0_38 = arith.constant 0 : index
    %c0_39 = arith.constant 0 : index
    %186 = vector.load %arg8[%c0_38, %c0_39] : memref<1x128xf32, #tpu.memory_space<vmem>>, vector<1x128xf32>
    %c0_40 = arith.constant 0 : index
    %c0_41 = arith.constant 0 : index
    %187 = vector.load %arg6[%c0_40, %c0_41] : memref<32x128xf32, #tpu.memory_space<vmem>>, vector<32x128xf32>
    %cst_42 = arith.constant dense<0.000000e+00> : vector<16x128xf32>
    %188 = tpu.matmul %5, %187, %cst_42 {dimension_numbers = #tpu.dot_dimension_numbers<[1], [0], [0], [1], [0, 0, 1, 1], [], []>} : vector<16x32xf32>, vector<32x128xf32>, vector<16x128xf32> -> vector<16x128xf32>
    %189 = vector.broadcast %186 : vector<1x128xf32> to vector<16x128xf32>
    %190 = arith.addf %188, %189 : vector<16x128xf32>
    %191 = vector.shape_cast %190 : vector<16x128xf32> to vector<2x8x128xf32>
    %c0_43 = arith.constant 0 : index
    %c0_44 = arith.constant 0 : index
    %192 = vector.load %arg15[%c0_43, %c0_44] : memref<1x32xf32, #tpu.memory_space<vmem>>, vector<1x32xf32>
    %c0_45 = arith.constant 0 : index
    %c0_46 = arith.constant 0 : index
    %193 = vector.load %arg6[%c0_45, %c0_46] : memref<32x128xf32, #tpu.memory_space<vmem>>, vector<32x128xf32>
    %cst_47 = arith.constant dense<0.000000e+00> : vector<1x128xf32>
    %194 = tpu.matmul %192, %193, %cst_47 {dimension_numbers = #tpu.dot_dimension_numbers<[1], [0], [0], [1], [0, 0, 1, 1], [], []>} : vector<1x32xf32>, vector<32x128xf32>, vector<1x128xf32> -> vector<1x128xf32>
    %195 = arith.addf %194, %186 : vector<1x128xf32>
    %c0_48 = arith.constant 0 : index
    %c0_49 = arith.constant 0 : index
    %196 = vector.load %arg7[%c0_48, %c0_49] : memref<32x128xf32, #tpu.memory_space<vmem>>, vector<32x128xf32>
    %c0_50 = arith.constant 0 : index
    %c0_51 = arith.constant 0 : index
    %197 = vector.load %arg13[%c0_50, %c0_51] : memref<32x64xf32, #tpu.memory_space<vmem>>, vector<32x64xf32>
    %c0_52 = arith.constant 0 : index
    %c0_53 = arith.constant 0 : index
    %198 = vector.load %arg14[%c0_52, %c0_53] : memref<1x64xf32, #tpu.memory_space<vmem>>, vector<1x64xf32>
    %c0_54 = arith.constant 0 : index
    %c0_55 = arith.constant 0 : index
    %199 = vector.load %arg11[%c0_54, %c0_55] : memref<1x32xf32, #tpu.memory_space<vmem>>, vector<1x32xf32>
    %200 = vector.shape_cast %199 : vector<1x32xf32> to vector<1x1x32xf32>
    %201 = vector.shape_cast %195 : vector<1x128xf32> to vector<1x128xf32>
    %202 = vector.broadcast %201 : vector<1x128xf32> to vector<2x128xf32>
    %cst_56 = arith.constant 1.000000e+00 : f32
    %203 = vector.broadcast %cst_56 : f32 to vector<2x8xf32>
    %204 = tpu.iota {dimensions = array<i32: 1>} : vector<2x8xi32>
    %205 = arith.sitofp %204 : vector<2x8xi32> to vector<2x8xf32>
    %cst_57 = arith.constant dense<0.000000e+00> : vector<2x128xf32>
    %206 = tpu.matmul %166, %196, %cst_57 {dimension_numbers = #tpu.dot_dimension_numbers<[1], [0], [0], [1], [0, 0, 1, 1], [], []>} : vector<2x32xf32>, vector<32x128xf32>, vector<2x128xf32> -> vector<2x128xf32>
    %207 = arith.addf %202, %206 : vector<2x128xf32>
    %208 = arith.negf %207 : vector<2x128xf32>
    %209 = math.exp %208 : vector<2x128xf32>
    %cst_58 = arith.constant 1.000000e+00 : f32
    %210 = vector.broadcast %cst_58 : f32 to vector<2x128xf32>
    %211 = arith.addf %210, %209 : vector<2x128xf32>
    %212 = arith.divf %210, %211 : vector<2x128xf32>
    %213 = math.tanh %207 : vector<2x128xf32>
    %214 = vector.extract_strided_slice %212 {offsets = [0, 0], sizes = [2, 32], strides = [1, 1]} : vector<2x128xf32> to vector<2x32xf32>
    %215 = vector.extract_strided_slice %212 {offsets = [0, 32], sizes = [2, 32], strides = [1, 1]} : vector<2x128xf32> to vector<2x32xf32>
    %216 = vector.extract_strided_slice %213 {offsets = [0, 64], sizes = [2, 32], strides = [1, 1]} : vector<2x128xf32> to vector<2x32xf32>
    %217 = vector.extract_strided_slice %212 {offsets = [0, 96], sizes = [2, 32], strides = [1, 1]} : vector<2x128xf32> to vector<2x32xf32>
    %218 = arith.mulf %215, %164 : vector<2x32xf32>
    %219 = arith.mulf %214, %216 : vector<2x32xf32>
    %220 = arith.addf %218, %219 : vector<2x32xf32>
    %221 = math.tanh %220 : vector<2x32xf32>
    %222 = arith.mulf %217, %221 : vector<2x32xf32>
    %cst_59 = arith.constant dense<0.000000e+00> : vector<2x64xf32>
    %223 = tpu.matmul %222, %197, %cst_59 {dimension_numbers = #tpu.dot_dimension_numbers<[1], [0], [0], [1], [0, 0, 1, 1], [], []>} : vector<2x32xf32>, vector<32x64xf32>, vector<2x64xf32> -> vector<2x64xf32>
    %224 = vector.broadcast %198 : vector<1x64xf32> to vector<2x64xf32>
    %225 = arith.addf %223, %224 : vector<2x64xf32>
    %226 = vector.extract_strided_slice %225 {offsets = [0, 0], sizes = [2, 32], strides = [1, 1]} : vector<2x64xf32> to vector<2x32xf32>
    %227 = vector.extract_strided_slice %225 {offsets = [0, 32], sizes = [2, 32], strides = [1, 1]} : vector<2x64xf32> to vector<2x32xf32>
    %228 = vector.shape_cast %226 : vector<2x32xf32> to vector<2x1x32xf32>
    %229 = vector.broadcast %228 : vector<2x1x32xf32> to vector<2x8x32xf32>
    %230 = arith.addf %229, %182 : vector<2x8x32xf32>
    %231 = math.tanh %230 : vector<2x8x32xf32>
    %232 = vector.broadcast %200 : vector<1x1x32xf32> to vector<2x8x32xf32>
    %233 = arith.mulf %231, %232 : vector<2x8x32xf32>
    %cst_60 = arith.constant dense<0.000000e+00> : vector<2x8xf32>
    %234 = vector.multi_reduction <add>, %233, %cst_60 [2] : vector<2x8x32xf32> to vector<2x8xf32>
    %cst_61 = arith.constant 1.000000e+00 : f32
    %235 = vector.broadcast %cst_61 : f32 to vector<2x8xf32>
    %236 = arith.subf %203, %235 : vector<2x8xf32>
    %cst_62 = arith.constant 1.000000e+30 : f32
    %237 = vector.broadcast %cst_62 : f32 to vector<2x8xf32>
    %238 = arith.mulf %236, %237 : vector<2x8xf32>
    %239 = arith.addf %234, %238 : vector<2x8xf32>
    %cst_63 = arith.constant dense<0xFF800000> : vector<2xf32>
    %240 = vector.multi_reduction <maximumf>, %239, %cst_63 [1] : vector<2x8xf32> to vector<2xf32>
    %241 = vector.shape_cast %240 : vector<2xf32> to vector<2x1xf32>
    %242 = vector.broadcast %241 : vector<2x1xf32> to vector<2x8xf32>
    %243 = arith.subf %239, %242 : vector<2x8xf32>
    %244 = math.exp %243 : vector<2x8xf32>
    %cst_64 = arith.constant dense<0.000000e+00> : vector<2xf32>
    %245 = vector.multi_reduction <add>, %244, %cst_64 [1] : vector<2x8xf32> to vector<2xf32>
    %246 = vector.shape_cast %245 : vector<2xf32> to vector<2x1xf32>
    %247 = vector.broadcast %246 : vector<2x1xf32> to vector<2x8xf32>
    %248 = arith.divf %244, %247 : vector<2x8xf32>
    %249 = vector.shape_cast %248 : vector<2x8xf32> to vector<2x8x1xf32>
    %250 = vector.broadcast %249 : vector<2x8x1xf32> to vector<2x8x32xf32>
    %251 = arith.mulf %185, %250 : vector<2x8x32xf32>
    %cst_65 = arith.constant dense<0.000000e+00> : vector<2x32xf32>
    %252 = vector.multi_reduction <add>, %251, %cst_65 [1] : vector<2x8x32xf32> to vector<2x32xf32>
    %253 = arith.addf %252, %227 : vector<2x32xf32>
    %254 = math.tanh %253 : vector<2x32xf32>
    %255 = arith.mulf %248, %203 : vector<2x8xf32>
    %cst_66 = arith.constant dense<0xFF800000> : vector<2xf32>
    %256 = vector.multi_reduction <maximumf>, %255, %cst_66 [1] : vector<2x8xf32> to vector<2xf32>
    %257 = vector.shape_cast %256 : vector<2xf32> to vector<2x1xf32>
    %258 = vector.broadcast %257 : vector<2x1xf32> to vector<2x8xf32>
    %259 = arith.cmpf oeq, %255, %258 : vector<2x8xf32>
    %cst_67 = arith.constant 8.000000e+00 : f32
    %260 = vector.broadcast %cst_67 : f32 to vector<2x8xf32>
    %261 = arith.select %259, %205, %260 : vector<2x8xi1>, vector<2x8xf32>
    %cst_68 = arith.constant dense<0x7F800000> : vector<2xf32>
    %262 = vector.multi_reduction <minimumf>, %261, %cst_68 [1] : vector<2x8xf32> to vector<2xf32>
    %263 = vector.shape_cast %262 : vector<2xf32> to vector<2x1xf32>
    %264 = vector.broadcast %263 : vector<2x1xf32> to vector<2x8xf32>
    %265 = arith.cmpf oeq, %205, %264 : vector<2x8xf32>
    %266 = arith.extui %265 : vector<2x8xi1> to vector<2x8xi32>
    %267 = arith.sitofp %266 : vector<2x8xi32> to vector<2x8xf32>
    %cst_69 = arith.constant 1.000000e+00 : f32
    %268 = vector.broadcast %cst_69 : f32 to vector<2x8xf32>
    %269 = arith.subf %268, %267 : vector<2x8xf32>
    %270 = arith.mulf %203, %269 : vector<2x8xf32>
    %271 = vector.shape_cast %267 : vector<2x8xf32> to vector<2x8x1xf32>
    %272 = vector.broadcast %271 : vector<2x8x1xf32> to vector<2x8x128xf32>
    %273 = arith.mulf %272, %191 : vector<2x8x128xf32>
    %cst_70 = arith.constant dense<0.000000e+00> : vector<2x128xf32>
    %274 = vector.multi_reduction <add>, %273, %cst_70 [1] : vector<2x8x128xf32> to vector<2x128xf32>
    %cst_71 = arith.constant dense<0.000000e+00> : vector<2x128xf32>
    %275 = tpu.matmul %254, %196, %cst_71 {dimension_numbers = #tpu.dot_dimension_numbers<[1], [0], [0], [1], [0, 0, 1, 1], [], []>} : vector<2x32xf32>, vector<32x128xf32>, vector<2x128xf32> -> vector<2x128xf32>
    %276 = arith.addf %274, %275 : vector<2x128xf32>
    %277 = arith.negf %276 : vector<2x128xf32>
    %278 = math.exp %277 : vector<2x128xf32>
    %cst_72 = arith.constant 1.000000e+00 : f32
    %279 = vector.broadcast %cst_72 : f32 to vector<2x128xf32>
    %280 = arith.addf %279, %278 : vector<2x128xf32>
    %281 = arith.divf %279, %280 : vector<2x128xf32>
    %282 = math.tanh %276 : vector<2x128xf32>
    %283 = vector.extract_strided_slice %281 {offsets = [0, 0], sizes = [2, 32], strides = [1, 1]} : vector<2x128xf32> to vector<2x32xf32>
    %284 = vector.extract_strided_slice %281 {offsets = [0, 32], sizes = [2, 32], strides = [1, 1]} : vector<2x128xf32> to vector<2x32xf32>
    %285 = vector.extract_strided_slice %282 {offsets = [0, 64], sizes = [2, 32], strides = [1, 1]} : vector<2x128xf32> to vector<2x32xf32>
    %286 = vector.extract_strided_slice %281 {offsets = [0, 96], sizes = [2, 32], strides = [1, 1]} : vector<2x128xf32> to vector<2x32xf32>
    %287 = arith.mulf %284, %220 : vector<2x32xf32>
    %288 = arith.mulf %283, %285 : vector<2x32xf32>
    %289 = arith.addf %287, %288 : vector<2x32xf32>
    %290 = math.tanh %289 : vector<2x32xf32>
    %291 = arith.mulf %286, %290 : vector<2x32xf32>
    %cst_73 = arith.constant dense<0.000000e+00> : vector<2x64xf32>
    %292 = tpu.matmul %291, %197, %cst_73 {dimension_numbers = #tpu.dot_dimension_numbers<[1], [0], [0], [1], [0, 0, 1, 1], [], []>} : vector<2x32xf32>, vector<32x64xf32>, vector<2x64xf32> -> vector<2x64xf32>
    %293 = vector.broadcast %198 : vector<1x64xf32> to vector<2x64xf32>
    %294 = arith.addf %292, %293 : vector<2x64xf32>
    %295 = vector.extract_strided_slice %294 {offsets = [0, 0], sizes = [2, 32], strides = [1, 1]} : vector<2x64xf32> to vector<2x32xf32>
    %296 = vector.extract_strided_slice %294 {offsets = [0, 32], sizes = [2, 32], strides = [1, 1]} : vector<2x64xf32> to vector<2x32xf32>
    %297 = vector.shape_cast %295 : vector<2x32xf32> to vector<2x1x32xf32>
    %298 = vector.broadcast %297 : vector<2x1x32xf32> to vector<2x8x32xf32>
    %299 = arith.addf %298, %182 : vector<2x8x32xf32>
    %300 = math.tanh %299 : vector<2x8x32xf32>
    %301 = vector.broadcast %200 : vector<1x1x32xf32> to vector<2x8x32xf32>
    %302 = arith.mulf %300, %301 : vector<2x8x32xf32>
    %cst_74 = arith.constant dense<0.000000e+00> : vector<2x8xf32>
    %303 = vector.multi_reduction <add>, %302, %cst_74 [2] : vector<2x8x32xf32> to vector<2x8xf32>
    %cst_75 = arith.constant 1.000000e+00 : f32
    %304 = vector.broadcast %cst_75 : f32 to vector<2x8xf32>
    %305 = arith.subf %270, %304 : vector<2x8xf32>
    %cst_76 = arith.constant 1.000000e+30 : f32
    %306 = vector.broadcast %cst_76 : f32 to vector<2x8xf32>
    %307 = arith.mulf %305, %306 : vector<2x8xf32>
    %308 = arith.addf %303, %307 : vector<2x8xf32>
    %cst_77 = arith.constant dense<0xFF800000> : vector<2xf32>
    %309 = vector.multi_reduction <maximumf>, %308, %cst_77 [1] : vector<2x8xf32> to vector<2xf32>
    %310 = vector.shape_cast %309 : vector<2xf32> to vector<2x1xf32>
    %311 = vector.broadcast %310 : vector<2x1xf32> to vector<2x8xf32>
    %312 = arith.subf %308, %311 : vector<2x8xf32>
    %313 = math.exp %312 : vector<2x8xf32>
    %cst_78 = arith.constant dense<0.000000e+00> : vector<2xf32>
    %314 = vector.multi_reduction <add>, %313, %cst_78 [1] : vector<2x8xf32> to vector<2xf32>
    %315 = vector.shape_cast %314 : vector<2xf32> to vector<2x1xf32>
    %316 = vector.broadcast %315 : vector<2x1xf32> to vector<2x8xf32>
    %317 = arith.divf %313, %316 : vector<2x8xf32>
    %318 = vector.shape_cast %317 : vector<2x8xf32> to vector<2x8x1xf32>
    %319 = vector.broadcast %318 : vector<2x8x1xf32> to vector<2x8x32xf32>
    %320 = arith.mulf %185, %319 : vector<2x8x32xf32>
    %cst_79 = arith.constant dense<0.000000e+00> : vector<2x32xf32>
    %321 = vector.multi_reduction <add>, %320, %cst_79 [1] : vector<2x8x32xf32> to vector<2x32xf32>
    %322 = arith.addf %321, %296 : vector<2x32xf32>
    %323 = math.tanh %322 : vector<2x32xf32>
    %324 = arith.mulf %317, %270 : vector<2x8xf32>
    %cst_80 = arith.constant dense<0xFF800000> : vector<2xf32>
    %325 = vector.multi_reduction <maximumf>, %324, %cst_80 [1] : vector<2x8xf32> to vector<2xf32>
    %326 = vector.shape_cast %325 : vector<2xf32> to vector<2x1xf32>
    %327 = vector.broadcast %326 : vector<2x1xf32> to vector<2x8xf32>
    %328 = arith.cmpf oeq, %324, %327 : vector<2x8xf32>
    %cst_81 = arith.constant 8.000000e+00 : f32
    %329 = vector.broadcast %cst_81 : f32 to vector<2x8xf32>
    %330 = arith.select %328, %205, %329 : vector<2x8xi1>, vector<2x8xf32>
    %cst_82 = arith.constant dense<0x7F800000> : vector<2xf32>
    %331 = vector.multi_reduction <minimumf>, %330, %cst_82 [1] : vector<2x8xf32> to vector<2xf32>
    %332 = vector.shape_cast %331 : vector<2xf32> to vector<2x1xf32>
    %333 = vector.broadcast %332 : vector<2x1xf32> to vector<2x8xf32>
    %334 = arith.cmpf oeq, %205, %333 : vector<2x8xf32>
    %335 = arith.extui %334 : vector<2x8xi1> to vector<2x8xi32>
    %336 = arith.sitofp %335 : vector<2x8xi32> to vector<2x8xf32>
    %cst_83 = arith.constant 1.000000e+00 : f32
    %337 = vector.broadcast %cst_83 : f32 to vector<2x8xf32>
    %338 = arith.subf %337, %336 : vector<2x8xf32>
    %339 = arith.mulf %270, %338 : vector<2x8xf32>
    %340 = vector.shape_cast %336 : vector<2x8xf32> to vector<2x8x1xf32>
    %341 = vector.broadcast %340 : vector<2x8x1xf32> to vector<2x8x128xf32>
    %342 = arith.mulf %341, %191 : vector<2x8x128xf32>
    %cst_84 = arith.constant dense<0.000000e+00> : vector<2x128xf32>
    %343 = vector.multi_reduction <add>, %342, %cst_84 [1] : vector<2x8x128xf32> to vector<2x128xf32>
    %cst_85 = arith.constant dense<0.000000e+00> : vector<2x128xf32>
    %344 = tpu.matmul %323, %196, %cst_85 {dimension_numbers = #tpu.dot_dimension_numbers<[1], [0], [0], [1], [0, 0, 1, 1], [], []>} : vector<2x32xf32>, vector<32x128xf32>, vector<2x128xf32> -> vector<2x128xf32>
    %345 = arith.addf %343, %344 : vector<2x128xf32>
    %346 = arith.negf %345 : vector<2x128xf32>
    %347 = math.exp %346 : vector<2x128xf32>
    %cst_86 = arith.constant 1.000000e+00 : f32
    %348 = vector.broadcast %cst_86 : f32 to vector<2x128xf32>
    %349 = arith.addf %348, %347 : vector<2x128xf32>
    %350 = arith.divf %348, %349 : vector<2x128xf32>
    %351 = math.tanh %345 : vector<2x128xf32>
    %352 = vector.extract_strided_slice %350 {offsets = [0, 0], sizes = [2, 32], strides = [1, 1]} : vector<2x128xf32> to vector<2x32xf32>
    %353 = vector.extract_strided_slice %350 {offsets = [0, 32], sizes = [2, 32], strides = [1, 1]} : vector<2x128xf32> to vector<2x32xf32>
    %354 = vector.extract_strided_slice %351 {offsets = [0, 64], sizes = [2, 32], strides = [1, 1]} : vector<2x128xf32> to vector<2x32xf32>
    %355 = vector.extract_strided_slice %350 {offsets = [0, 96], sizes = [2, 32], strides = [1, 1]} : vector<2x128xf32> to vector<2x32xf32>
    %356 = arith.mulf %353, %289 : vector<2x32xf32>
    %357 = arith.mulf %352, %354 : vector<2x32xf32>
    %358 = arith.addf %356, %357 : vector<2x32xf32>
    %359 = math.tanh %358 : vector<2x32xf32>
    %360 = arith.mulf %355, %359 : vector<2x32xf32>
    %cst_87 = arith.constant dense<0.000000e+00> : vector<2x64xf32>
    %361 = tpu.matmul %360, %197, %cst_87 {dimension_numbers = #tpu.dot_dimension_numbers<[1], [0], [0], [1], [0, 0, 1, 1], [], []>} : vector<2x32xf32>, vector<32x64xf32>, vector<2x64xf32> -> vector<2x64xf32>
    %362 = vector.broadcast %198 : vector<1x64xf32> to vector<2x64xf32>
    %363 = arith.addf %361, %362 : vector<2x64xf32>
    %364 = vector.extract_strided_slice %363 {offsets = [0, 0], sizes = [2, 32], strides = [1, 1]} : vector<2x64xf32> to vector<2x32xf32>
    %365 = vector.extract_strided_slice %363 {offsets = [0, 32], sizes = [2, 32], strides = [1, 1]} : vector<2x64xf32> to vector<2x32xf32>
    %366 = vector.shape_cast %364 : vector<2x32xf32> to vector<2x1x32xf32>
    %367 = vector.broadcast %366 : vector<2x1x32xf32> to vector<2x8x32xf32>
    %368 = arith.addf %367, %182 : vector<2x8x32xf32>
    %369 = math.tanh %368 : vector<2x8x32xf32>
    %370 = vector.broadcast %200 : vector<1x1x32xf32> to vector<2x8x32xf32>
    %371 = arith.mulf %369, %370 : vector<2x8x32xf32>
    %cst_88 = arith.constant dense<0.000000e+00> : vector<2x8xf32>
    %372 = vector.multi_reduction <add>, %371, %cst_88 [2] : vector<2x8x32xf32> to vector<2x8xf32>
    %cst_89 = arith.constant 1.000000e+00 : f32
    %373 = vector.broadcast %cst_89 : f32 to vector<2x8xf32>
    %374 = arith.subf %339, %373 : vector<2x8xf32>
    %cst_90 = arith.constant 1.000000e+30 : f32
    %375 = vector.broadcast %cst_90 : f32 to vector<2x8xf32>
    %376 = arith.mulf %374, %375 : vector<2x8xf32>
    %377 = arith.addf %372, %376 : vector<2x8xf32>
    %cst_91 = arith.constant dense<0xFF800000> : vector<2xf32>
    %378 = vector.multi_reduction <maximumf>, %377, %cst_91 [1] : vector<2x8xf32> to vector<2xf32>
    %379 = vector.shape_cast %378 : vector<2xf32> to vector<2x1xf32>
    %380 = vector.broadcast %379 : vector<2x1xf32> to vector<2x8xf32>
    %381 = arith.subf %377, %380 : vector<2x8xf32>
    %382 = math.exp %381 : vector<2x8xf32>
    %cst_92 = arith.constant dense<0.000000e+00> : vector<2xf32>
    %383 = vector.multi_reduction <add>, %382, %cst_92 [1] : vector<2x8xf32> to vector<2xf32>
    %384 = vector.shape_cast %383 : vector<2xf32> to vector<2x1xf32>
    %385 = vector.broadcast %384 : vector<2x1xf32> to vector<2x8xf32>
    %386 = arith.divf %382, %385 : vector<2x8xf32>
    %387 = vector.shape_cast %386 : vector<2x8xf32> to vector<2x8x1xf32>
    %388 = vector.broadcast %387 : vector<2x8x1xf32> to vector<2x8x32xf32>
    %389 = arith.mulf %185, %388 : vector<2x8x32xf32>
    %cst_93 = arith.constant dense<0.000000e+00> : vector<2x32xf32>
    %390 = vector.multi_reduction <add>, %389, %cst_93 [1] : vector<2x8x32xf32> to vector<2x32xf32>
    %391 = arith.addf %390, %365 : vector<2x32xf32>
    %392 = math.tanh %391 : vector<2x32xf32>
    %393 = arith.mulf %386, %339 : vector<2x8xf32>
    %cst_94 = arith.constant dense<0xFF800000> : vector<2xf32>
    %394 = vector.multi_reduction <maximumf>, %393, %cst_94 [1] : vector<2x8xf32> to vector<2xf32>
    %395 = vector.shape_cast %394 : vector<2xf32> to vector<2x1xf32>
    %396 = vector.broadcast %395 : vector<2x1xf32> to vector<2x8xf32>
    %397 = arith.cmpf oeq, %393, %396 : vector<2x8xf32>
    %cst_95 = arith.constant 8.000000e+00 : f32
    %398 = vector.broadcast %cst_95 : f32 to vector<2x8xf32>
    %399 = arith.select %397, %205, %398 : vector<2x8xi1>, vector<2x8xf32>
    %cst_96 = arith.constant dense<0x7F800000> : vector<2xf32>
    %400 = vector.multi_reduction <minimumf>, %399, %cst_96 [1] : vector<2x8xf32> to vector<2xf32>
    %401 = vector.shape_cast %400 : vector<2xf32> to vector<2x1xf32>
    %402 = vector.broadcast %401 : vector<2x1xf32> to vector<2x8xf32>
    %403 = arith.cmpf oeq, %205, %402 : vector<2x8xf32>
    %404 = arith.extui %403 : vector<2x8xi1> to vector<2x8xi32>
    %405 = arith.sitofp %404 : vector<2x8xi32> to vector<2x8xf32>
    %cst_97 = arith.constant 1.000000e+00 : f32
    %406 = vector.broadcast %cst_97 : f32 to vector<2x8xf32>
    %407 = arith.subf %406, %405 : vector<2x8xf32>
    %408 = arith.mulf %339, %407 : vector<2x8xf32>
    %409 = vector.shape_cast %405 : vector<2x8xf32> to vector<2x8x1xf32>
    %410 = vector.broadcast %409 : vector<2x8x1xf32> to vector<2x8x128xf32>
    %411 = arith.mulf %410, %191 : vector<2x8x128xf32>
    %cst_98 = arith.constant dense<0.000000e+00> : vector<2x128xf32>
    %412 = vector.multi_reduction <add>, %411, %cst_98 [1] : vector<2x8x128xf32> to vector<2x128xf32>
    %cst_99 = arith.constant dense<0.000000e+00> : vector<2x128xf32>
    %413 = tpu.matmul %392, %196, %cst_99 {dimension_numbers = #tpu.dot_dimension_numbers<[1], [0], [0], [1], [0, 0, 1, 1], [], []>} : vector<2x32xf32>, vector<32x128xf32>, vector<2x128xf32> -> vector<2x128xf32>
    %414 = arith.addf %412, %413 : vector<2x128xf32>
    %415 = arith.negf %414 : vector<2x128xf32>
    %416 = math.exp %415 : vector<2x128xf32>
    %cst_100 = arith.constant 1.000000e+00 : f32
    %417 = vector.broadcast %cst_100 : f32 to vector<2x128xf32>
    %418 = arith.addf %417, %416 : vector<2x128xf32>
    %419 = arith.divf %417, %418 : vector<2x128xf32>
    %420 = math.tanh %414 : vector<2x128xf32>
    %421 = vector.extract_strided_slice %419 {offsets = [0, 0], sizes = [2, 32], strides = [1, 1]} : vector<2x128xf32> to vector<2x32xf32>
    %422 = vector.extract_strided_slice %419 {offsets = [0, 32], sizes = [2, 32], strides = [1, 1]} : vector<2x128xf32> to vector<2x32xf32>
    %423 = vector.extract_strided_slice %420 {offsets = [0, 64], sizes = [2, 32], strides = [1, 1]} : vector<2x128xf32> to vector<2x32xf32>
    %424 = vector.extract_strided_slice %419 {offsets = [0, 96], sizes = [2, 32], strides = [1, 1]} : vector<2x128xf32> to vector<2x32xf32>
    %425 = arith.mulf %422, %358 : vector<2x32xf32>
    %426 = arith.mulf %421, %423 : vector<2x32xf32>
    %427 = arith.addf %425, %426 : vector<2x32xf32>
    %428 = math.tanh %427 : vector<2x32xf32>
    %429 = arith.mulf %424, %428 : vector<2x32xf32>
    %cst_101 = arith.constant dense<0.000000e+00> : vector<2x64xf32>
    %430 = tpu.matmul %429, %197, %cst_101 {dimension_numbers = #tpu.dot_dimension_numbers<[1], [0], [0], [1], [0, 0, 1, 1], [], []>} : vector<2x32xf32>, vector<32x64xf32>, vector<2x64xf32> -> vector<2x64xf32>
    %431 = vector.broadcast %198 : vector<1x64xf32> to vector<2x64xf32>
    %432 = arith.addf %430, %431 : vector<2x64xf32>
    %433 = vector.extract_strided_slice %432 {offsets = [0, 0], sizes = [2, 32], strides = [1, 1]} : vector<2x64xf32> to vector<2x32xf32>
    %434 = vector.extract_strided_slice %432 {offsets = [0, 32], sizes = [2, 32], strides = [1, 1]} : vector<2x64xf32> to vector<2x32xf32>
    %435 = vector.shape_cast %433 : vector<2x32xf32> to vector<2x1x32xf32>
    %436 = vector.broadcast %435 : vector<2x1x32xf32> to vector<2x8x32xf32>
    %437 = arith.addf %436, %182 : vector<2x8x32xf32>
    %438 = math.tanh %437 : vector<2x8x32xf32>
    %439 = vector.broadcast %200 : vector<1x1x32xf32> to vector<2x8x32xf32>
    %440 = arith.mulf %438, %439 : vector<2x8x32xf32>
    %cst_102 = arith.constant dense<0.000000e+00> : vector<2x8xf32>
    %441 = vector.multi_reduction <add>, %440, %cst_102 [2] : vector<2x8x32xf32> to vector<2x8xf32>
    %cst_103 = arith.constant 1.000000e+00 : f32
    %442 = vector.broadcast %cst_103 : f32 to vector<2x8xf32>
    %443 = arith.subf %408, %442 : vector<2x8xf32>
    %cst_104 = arith.constant 1.000000e+30 : f32
    %444 = vector.broadcast %cst_104 : f32 to vector<2x8xf32>
    %445 = arith.mulf %443, %444 : vector<2x8xf32>
    %446 = arith.addf %441, %445 : vector<2x8xf32>
    %cst_105 = arith.constant dense<0xFF800000> : vector<2xf32>
    %447 = vector.multi_reduction <maximumf>, %446, %cst_105 [1] : vector<2x8xf32> to vector<2xf32>
    %448 = vector.shape_cast %447 : vector<2xf32> to vector<2x1xf32>
    %449 = vector.broadcast %448 : vector<2x1xf32> to vector<2x8xf32>
    %450 = arith.subf %446, %449 : vector<2x8xf32>
    %451 = math.exp %450 : vector<2x8xf32>
    %cst_106 = arith.constant dense<0.000000e+00> : vector<2xf32>
    %452 = vector.multi_reduction <add>, %451, %cst_106 [1] : vector<2x8xf32> to vector<2xf32>
    %453 = vector.shape_cast %452 : vector<2xf32> to vector<2x1xf32>
    %454 = vector.broadcast %453 : vector<2x1xf32> to vector<2x8xf32>
    %455 = arith.divf %451, %454 : vector<2x8xf32>
    %456 = vector.shape_cast %455 : vector<2x8xf32> to vector<2x8x1xf32>
    %457 = vector.broadcast %456 : vector<2x8x1xf32> to vector<2x8x32xf32>
    %458 = arith.mulf %185, %457 : vector<2x8x32xf32>
    %cst_107 = arith.constant dense<0.000000e+00> : vector<2x32xf32>
    %459 = vector.multi_reduction <add>, %458, %cst_107 [1] : vector<2x8x32xf32> to vector<2x32xf32>
    %460 = arith.addf %459, %434 : vector<2x32xf32>
    %461 = math.tanh %460 : vector<2x32xf32>
    %462 = arith.mulf %455, %408 : vector<2x8xf32>
    %cst_108 = arith.constant dense<0xFF800000> : vector<2xf32>
    %463 = vector.multi_reduction <maximumf>, %462, %cst_108 [1] : vector<2x8xf32> to vector<2xf32>
    %464 = vector.shape_cast %463 : vector<2xf32> to vector<2x1xf32>
    %465 = vector.broadcast %464 : vector<2x1xf32> to vector<2x8xf32>
    %466 = arith.cmpf oeq, %462, %465 : vector<2x8xf32>
    %cst_109 = arith.constant 8.000000e+00 : f32
    %467 = vector.broadcast %cst_109 : f32 to vector<2x8xf32>
    %468 = arith.select %466, %205, %467 : vector<2x8xi1>, vector<2x8xf32>
    %cst_110 = arith.constant dense<0x7F800000> : vector<2xf32>
    %469 = vector.multi_reduction <minimumf>, %468, %cst_110 [1] : vector<2x8xf32> to vector<2xf32>
    %470 = vector.shape_cast %469 : vector<2xf32> to vector<2x1xf32>
    %471 = vector.broadcast %470 : vector<2x1xf32> to vector<2x8xf32>
    %472 = arith.cmpf oeq, %205, %471 : vector<2x8xf32>
    %473 = arith.extui %472 : vector<2x8xi1> to vector<2x8xi32>
    %474 = arith.sitofp %473 : vector<2x8xi32> to vector<2x8xf32>
    %cst_111 = arith.constant 1.000000e+00 : f32
    %475 = vector.broadcast %cst_111 : f32 to vector<2x8xf32>
    %476 = arith.subf %475, %474 : vector<2x8xf32>
    %477 = arith.mulf %408, %476 : vector<2x8xf32>
    %478 = vector.shape_cast %474 : vector<2x8xf32> to vector<2x8x1xf32>
    %479 = vector.broadcast %478 : vector<2x8x1xf32> to vector<2x8x128xf32>
    %480 = arith.mulf %479, %191 : vector<2x8x128xf32>
    %cst_112 = arith.constant dense<0.000000e+00> : vector<2x128xf32>
    %481 = vector.multi_reduction <add>, %480, %cst_112 [1] : vector<2x8x128xf32> to vector<2x128xf32>
    %cst_113 = arith.constant dense<0.000000e+00> : vector<2x128xf32>
    %482 = tpu.matmul %461, %196, %cst_113 {dimension_numbers = #tpu.dot_dimension_numbers<[1], [0], [0], [1], [0, 0, 1, 1], [], []>} : vector<2x32xf32>, vector<32x128xf32>, vector<2x128xf32> -> vector<2x128xf32>
    %483 = arith.addf %481, %482 : vector<2x128xf32>
    %484 = arith.negf %483 : vector<2x128xf32>
    %485 = math.exp %484 : vector<2x128xf32>
    %cst_114 = arith.constant 1.000000e+00 : f32
    %486 = vector.broadcast %cst_114 : f32 to vector<2x128xf32>
    %487 = arith.addf %486, %485 : vector<2x128xf32>
    %488 = arith.divf %486, %487 : vector<2x128xf32>
    %489 = math.tanh %483 : vector<2x128xf32>
    %490 = vector.extract_strided_slice %488 {offsets = [0, 0], sizes = [2, 32], strides = [1, 1]} : vector<2x128xf32> to vector<2x32xf32>
    %491 = vector.extract_strided_slice %488 {offsets = [0, 32], sizes = [2, 32], strides = [1, 1]} : vector<2x128xf32> to vector<2x32xf32>
    %492 = vector.extract_strided_slice %489 {offsets = [0, 64], sizes = [2, 32], strides = [1, 1]} : vector<2x128xf32> to vector<2x32xf32>
    %493 = vector.extract_strided_slice %488 {offsets = [0, 96], sizes = [2, 32], strides = [1, 1]} : vector<2x128xf32> to vector<2x32xf32>
    %494 = arith.mulf %491, %427 : vector<2x32xf32>
    %495 = arith.mulf %490, %492 : vector<2x32xf32>
    %496 = arith.addf %494, %495 : vector<2x32xf32>
    %497 = math.tanh %496 : vector<2x32xf32>
    %498 = arith.mulf %493, %497 : vector<2x32xf32>
    %cst_115 = arith.constant dense<0.000000e+00> : vector<2x64xf32>
    %499 = tpu.matmul %498, %197, %cst_115 {dimension_numbers = #tpu.dot_dimension_numbers<[1], [0], [0], [1], [0, 0, 1, 1], [], []>} : vector<2x32xf32>, vector<32x64xf32>, vector<2x64xf32> -> vector<2x64xf32>
    %500 = vector.broadcast %198 : vector<1x64xf32> to vector<2x64xf32>
    %501 = arith.addf %499, %500 : vector<2x64xf32>
    %502 = vector.extract_strided_slice %501 {offsets = [0, 0], sizes = [2, 32], strides = [1, 1]} : vector<2x64xf32> to vector<2x32xf32>
    %503 = vector.extract_strided_slice %501 {offsets = [0, 32], sizes = [2, 32], strides = [1, 1]} : vector<2x64xf32> to vector<2x32xf32>
    %504 = vector.shape_cast %502 : vector<2x32xf32> to vector<2x1x32xf32>
    %505 = vector.broadcast %504 : vector<2x1x32xf32> to vector<2x8x32xf32>
    %506 = arith.addf %505, %182 : vector<2x8x32xf32>
    %507 = math.tanh %506 : vector<2x8x32xf32>
    %508 = vector.broadcast %200 : vector<1x1x32xf32> to vector<2x8x32xf32>
    %509 = arith.mulf %507, %508 : vector<2x8x32xf32>
    %cst_116 = arith.constant dense<0.000000e+00> : vector<2x8xf32>
    %510 = vector.multi_reduction <add>, %509, %cst_116 [2] : vector<2x8x32xf32> to vector<2x8xf32>
    %cst_117 = arith.constant 1.000000e+00 : f32
    %511 = vector.broadcast %cst_117 : f32 to vector<2x8xf32>
    %512 = arith.subf %477, %511 : vector<2x8xf32>
    %cst_118 = arith.constant 1.000000e+30 : f32
    %513 = vector.broadcast %cst_118 : f32 to vector<2x8xf32>
    %514 = arith.mulf %512, %513 : vector<2x8xf32>
    %515 = arith.addf %510, %514 : vector<2x8xf32>
    %cst_119 = arith.constant dense<0xFF800000> : vector<2xf32>
    %516 = vector.multi_reduction <maximumf>, %515, %cst_119 [1] : vector<2x8xf32> to vector<2xf32>
    %517 = vector.shape_cast %516 : vector<2xf32> to vector<2x1xf32>
    %518 = vector.broadcast %517 : vector<2x1xf32> to vector<2x8xf32>
    %519 = arith.subf %515, %518 : vector<2x8xf32>
    %520 = math.exp %519 : vector<2x8xf32>
    %cst_120 = arith.constant dense<0.000000e+00> : vector<2xf32>
    %521 = vector.multi_reduction <add>, %520, %cst_120 [1] : vector<2x8xf32> to vector<2xf32>
    %522 = vector.shape_cast %521 : vector<2xf32> to vector<2x1xf32>
    %523 = vector.broadcast %522 : vector<2x1xf32> to vector<2x8xf32>
    %524 = arith.divf %520, %523 : vector<2x8xf32>
    %525 = vector.shape_cast %524 : vector<2x8xf32> to vector<2x8x1xf32>
    %526 = vector.broadcast %525 : vector<2x8x1xf32> to vector<2x8x32xf32>
    %527 = arith.mulf %185, %526 : vector<2x8x32xf32>
    %cst_121 = arith.constant dense<0.000000e+00> : vector<2x32xf32>
    %528 = vector.multi_reduction <add>, %527, %cst_121 [1] : vector<2x8x32xf32> to vector<2x32xf32>
    %529 = arith.addf %528, %503 : vector<2x32xf32>
    %530 = math.tanh %529 : vector<2x32xf32>
    %531 = arith.mulf %524, %477 : vector<2x8xf32>
    %cst_122 = arith.constant dense<0xFF800000> : vector<2xf32>
    %532 = vector.multi_reduction <maximumf>, %531, %cst_122 [1] : vector<2x8xf32> to vector<2xf32>
    %533 = vector.shape_cast %532 : vector<2xf32> to vector<2x1xf32>
    %534 = vector.broadcast %533 : vector<2x1xf32> to vector<2x8xf32>
    %535 = arith.cmpf oeq, %531, %534 : vector<2x8xf32>
    %cst_123 = arith.constant 8.000000e+00 : f32
    %536 = vector.broadcast %cst_123 : f32 to vector<2x8xf32>
    %537 = arith.select %535, %205, %536 : vector<2x8xi1>, vector<2x8xf32>
    %cst_124 = arith.constant dense<0x7F800000> : vector<2xf32>
    %538 = vector.multi_reduction <minimumf>, %537, %cst_124 [1] : vector<2x8xf32> to vector<2xf32>
    %539 = vector.shape_cast %538 : vector<2xf32> to vector<2x1xf32>
    %540 = vector.broadcast %539 : vector<2x1xf32> to vector<2x8xf32>
    %541 = arith.cmpf oeq, %205, %540 : vector<2x8xf32>
    %542 = arith.extui %541 : vector<2x8xi1> to vector<2x8xi32>
    %543 = arith.sitofp %542 : vector<2x8xi32> to vector<2x8xf32>
    %cst_125 = arith.constant 1.000000e+00 : f32
    %544 = vector.broadcast %cst_125 : f32 to vector<2x8xf32>
    %545 = arith.subf %544, %543 : vector<2x8xf32>
    %546 = arith.mulf %477, %545 : vector<2x8xf32>
    %547 = vector.shape_cast %543 : vector<2x8xf32> to vector<2x8x1xf32>
    %548 = vector.broadcast %547 : vector<2x8x1xf32> to vector<2x8x128xf32>
    %549 = arith.mulf %548, %191 : vector<2x8x128xf32>
    %cst_126 = arith.constant dense<0.000000e+00> : vector<2x128xf32>
    %550 = vector.multi_reduction <add>, %549, %cst_126 [1] : vector<2x8x128xf32> to vector<2x128xf32>
    %cst_127 = arith.constant dense<0.000000e+00> : vector<2x128xf32>
    %551 = tpu.matmul %530, %196, %cst_127 {dimension_numbers = #tpu.dot_dimension_numbers<[1], [0], [0], [1], [0, 0, 1, 1], [], []>} : vector<2x32xf32>, vector<32x128xf32>, vector<2x128xf32> -> vector<2x128xf32>
    %552 = arith.addf %550, %551 : vector<2x128xf32>
    %553 = arith.negf %552 : vector<2x128xf32>
    %554 = math.exp %553 : vector<2x128xf32>
    %cst_128 = arith.constant 1.000000e+00 : f32
    %555 = vector.broadcast %cst_128 : f32 to vector<2x128xf32>
    %556 = arith.addf %555, %554 : vector<2x128xf32>
    %557 = arith.divf %555, %556 : vector<2x128xf32>
    %558 = math.tanh %552 : vector<2x128xf32>
    %559 = vector.extract_strided_slice %557 {offsets = [0, 0], sizes = [2, 32], strides = [1, 1]} : vector<2x128xf32> to vector<2x32xf32>
    %560 = vector.extract_strided_slice %557 {offsets = [0, 32], sizes = [2, 32], strides = [1, 1]} : vector<2x128xf32> to vector<2x32xf32>
    %561 = vector.extract_strided_slice %558 {offsets = [0, 64], sizes = [2, 32], strides = [1, 1]} : vector<2x128xf32> to vector<2x32xf32>
    %562 = vector.extract_strided_slice %557 {offsets = [0, 96], sizes = [2, 32], strides = [1, 1]} : vector<2x128xf32> to vector<2x32xf32>
    %563 = arith.mulf %560, %496 : vector<2x32xf32>
    %564 = arith.mulf %559, %561 : vector<2x32xf32>
    %565 = arith.addf %563, %564 : vector<2x32xf32>
    %566 = math.tanh %565 : vector<2x32xf32>
    %567 = arith.mulf %562, %566 : vector<2x32xf32>
    %cst_129 = arith.constant dense<0.000000e+00> : vector<2x64xf32>
    %568 = tpu.matmul %567, %197, %cst_129 {dimension_numbers = #tpu.dot_dimension_numbers<[1], [0], [0], [1], [0, 0, 1, 1], [], []>} : vector<2x32xf32>, vector<32x64xf32>, vector<2x64xf32> -> vector<2x64xf32>
    %569 = vector.broadcast %198 : vector<1x64xf32> to vector<2x64xf32>
    %570 = arith.addf %568, %569 : vector<2x64xf32>
    %571 = vector.extract_strided_slice %570 {offsets = [0, 0], sizes = [2, 32], strides = [1, 1]} : vector<2x64xf32> to vector<2x32xf32>
    %572 = vector.extract_strided_slice %570 {offsets = [0, 32], sizes = [2, 32], strides = [1, 1]} : vector<2x64xf32> to vector<2x32xf32>
    %573 = vector.shape_cast %571 : vector<2x32xf32> to vector<2x1x32xf32>
    %574 = vector.broadcast %573 : vector<2x1x32xf32> to vector<2x8x32xf32>
    %575 = arith.addf %574, %182 : vector<2x8x32xf32>
    %576 = math.tanh %575 : vector<2x8x32xf32>
    %577 = vector.broadcast %200 : vector<1x1x32xf32> to vector<2x8x32xf32>
    %578 = arith.mulf %576, %577 : vector<2x8x32xf32>
    %cst_130 = arith.constant dense<0.000000e+00> : vector<2x8xf32>
    %579 = vector.multi_reduction <add>, %578, %cst_130 [2] : vector<2x8x32xf32> to vector<2x8xf32>
    %cst_131 = arith.constant 1.000000e+00 : f32
    %580 = vector.broadcast %cst_131 : f32 to vector<2x8xf32>
    %581 = arith.subf %546, %580 : vector<2x8xf32>
    %cst_132 = arith.constant 1.000000e+30 : f32
    %582 = vector.broadcast %cst_132 : f32 to vector<2x8xf32>
    %583 = arith.mulf %581, %582 : vector<2x8xf32>
    %584 = arith.addf %579, %583 : vector<2x8xf32>
    %cst_133 = arith.constant dense<0xFF800000> : vector<2xf32>
    %585 = vector.multi_reduction <maximumf>, %584, %cst_133 [1] : vector<2x8xf32> to vector<2xf32>
    %586 = vector.shape_cast %585 : vector<2xf32> to vector<2x1xf32>
    %587 = vector.broadcast %586 : vector<2x1xf32> to vector<2x8xf32>
    %588 = arith.subf %584, %587 : vector<2x8xf32>
    %589 = math.exp %588 : vector<2x8xf32>
    %cst_134 = arith.constant dense<0.000000e+00> : vector<2xf32>
    %590 = vector.multi_reduction <add>, %589, %cst_134 [1] : vector<2x8xf32> to vector<2xf32>
    %591 = vector.shape_cast %590 : vector<2xf32> to vector<2x1xf32>
    %592 = vector.broadcast %591 : vector<2x1xf32> to vector<2x8xf32>
    %593 = arith.divf %589, %592 : vector<2x8xf32>
    %594 = vector.shape_cast %593 : vector<2x8xf32> to vector<2x8x1xf32>
    %595 = vector.broadcast %594 : vector<2x8x1xf32> to vector<2x8x32xf32>
    %596 = arith.mulf %185, %595 : vector<2x8x32xf32>
    %cst_135 = arith.constant dense<0.000000e+00> : vector<2x32xf32>
    %597 = vector.multi_reduction <add>, %596, %cst_135 [1] : vector<2x8x32xf32> to vector<2x32xf32>
    %598 = arith.addf %597, %572 : vector<2x32xf32>
    %599 = math.tanh %598 : vector<2x32xf32>
    %600 = arith.mulf %593, %546 : vector<2x8xf32>
    %cst_136 = arith.constant dense<0xFF800000> : vector<2xf32>
    %601 = vector.multi_reduction <maximumf>, %600, %cst_136 [1] : vector<2x8xf32> to vector<2xf32>
    %602 = vector.shape_cast %601 : vector<2xf32> to vector<2x1xf32>
    %603 = vector.broadcast %602 : vector<2x1xf32> to vector<2x8xf32>
    %604 = arith.cmpf oeq, %600, %603 : vector<2x8xf32>
    %cst_137 = arith.constant 8.000000e+00 : f32
    %605 = vector.broadcast %cst_137 : f32 to vector<2x8xf32>
    %606 = arith.select %604, %205, %605 : vector<2x8xi1>, vector<2x8xf32>
    %cst_138 = arith.constant dense<0x7F800000> : vector<2xf32>
    %607 = vector.multi_reduction <minimumf>, %606, %cst_138 [1] : vector<2x8xf32> to vector<2xf32>
    %608 = vector.shape_cast %607 : vector<2xf32> to vector<2x1xf32>
    %609 = vector.broadcast %608 : vector<2x1xf32> to vector<2x8xf32>
    %610 = arith.cmpf oeq, %205, %609 : vector<2x8xf32>
    %611 = arith.extui %610 : vector<2x8xi1> to vector<2x8xi32>
    %612 = arith.sitofp %611 : vector<2x8xi32> to vector<2x8xf32>
    %cst_139 = arith.constant 1.000000e+00 : f32
    %613 = vector.broadcast %cst_139 : f32 to vector<2x8xf32>
    %614 = arith.subf %613, %612 : vector<2x8xf32>
    %615 = arith.mulf %546, %614 : vector<2x8xf32>
    %616 = vector.shape_cast %612 : vector<2x8xf32> to vector<2x8x1xf32>
    %617 = vector.broadcast %616 : vector<2x8x1xf32> to vector<2x8x128xf32>
    %618 = arith.mulf %617, %191 : vector<2x8x128xf32>
    %cst_140 = arith.constant dense<0.000000e+00> : vector<2x128xf32>
    %619 = vector.multi_reduction <add>, %618, %cst_140 [1] : vector<2x8x128xf32> to vector<2x128xf32>
    %cst_141 = arith.constant dense<0.000000e+00> : vector<2x128xf32>
    %620 = tpu.matmul %599, %196, %cst_141 {dimension_numbers = #tpu.dot_dimension_numbers<[1], [0], [0], [1], [0, 0, 1, 1], [], []>} : vector<2x32xf32>, vector<32x128xf32>, vector<2x128xf32> -> vector<2x128xf32>
    %621 = arith.addf %619, %620 : vector<2x128xf32>
    %622 = arith.negf %621 : vector<2x128xf32>
    %623 = math.exp %622 : vector<2x128xf32>
    %cst_142 = arith.constant 1.000000e+00 : f32
    %624 = vector.broadcast %cst_142 : f32 to vector<2x128xf32>
    %625 = arith.addf %624, %623 : vector<2x128xf32>
    %626 = arith.divf %624, %625 : vector<2x128xf32>
    %627 = math.tanh %621 : vector<2x128xf32>
    %628 = vector.extract_strided_slice %626 {offsets = [0, 0], sizes = [2, 32], strides = [1, 1]} : vector<2x128xf32> to vector<2x32xf32>
    %629 = vector.extract_strided_slice %626 {offsets = [0, 32], sizes = [2, 32], strides = [1, 1]} : vector<2x128xf32> to vector<2x32xf32>
    %630 = vector.extract_strided_slice %627 {offsets = [0, 64], sizes = [2, 32], strides = [1, 1]} : vector<2x128xf32> to vector<2x32xf32>
    %631 = vector.extract_strided_slice %626 {offsets = [0, 96], sizes = [2, 32], strides = [1, 1]} : vector<2x128xf32> to vector<2x32xf32>
    %632 = arith.mulf %629, %565 : vector<2x32xf32>
    %633 = arith.mulf %628, %630 : vector<2x32xf32>
    %634 = arith.addf %632, %633 : vector<2x32xf32>
    %635 = math.tanh %634 : vector<2x32xf32>
    %636 = arith.mulf %631, %635 : vector<2x32xf32>
    %cst_143 = arith.constant dense<0.000000e+00> : vector<2x64xf32>
    %637 = tpu.matmul %636, %197, %cst_143 {dimension_numbers = #tpu.dot_dimension_numbers<[1], [0], [0], [1], [0, 0, 1, 1], [], []>} : vector<2x32xf32>, vector<32x64xf32>, vector<2x64xf32> -> vector<2x64xf32>
    %638 = vector.broadcast %198 : vector<1x64xf32> to vector<2x64xf32>
    %639 = arith.addf %637, %638 : vector<2x64xf32>
    %640 = vector.extract_strided_slice %639 {offsets = [0, 0], sizes = [2, 32], strides = [1, 1]} : vector<2x64xf32> to vector<2x32xf32>
    %641 = vector.extract_strided_slice %639 {offsets = [0, 32], sizes = [2, 32], strides = [1, 1]} : vector<2x64xf32> to vector<2x32xf32>
    %642 = vector.shape_cast %640 : vector<2x32xf32> to vector<2x1x32xf32>
    %643 = vector.broadcast %642 : vector<2x1x32xf32> to vector<2x8x32xf32>
    %644 = arith.addf %643, %182 : vector<2x8x32xf32>
    %645 = math.tanh %644 : vector<2x8x32xf32>
    %646 = vector.broadcast %200 : vector<1x1x32xf32> to vector<2x8x32xf32>
    %647 = arith.mulf %645, %646 : vector<2x8x32xf32>
    %cst_144 = arith.constant dense<0.000000e+00> : vector<2x8xf32>
    %648 = vector.multi_reduction <add>, %647, %cst_144 [2] : vector<2x8x32xf32> to vector<2x8xf32>
    %cst_145 = arith.constant 1.000000e+00 : f32
    %649 = vector.broadcast %cst_145 : f32 to vector<2x8xf32>
    %650 = arith.subf %615, %649 : vector<2x8xf32>
    %cst_146 = arith.constant 1.000000e+30 : f32
    %651 = vector.broadcast %cst_146 : f32 to vector<2x8xf32>
    %652 = arith.mulf %650, %651 : vector<2x8xf32>
    %653 = arith.addf %648, %652 : vector<2x8xf32>
    %cst_147 = arith.constant dense<0xFF800000> : vector<2xf32>
    %654 = vector.multi_reduction <maximumf>, %653, %cst_147 [1] : vector<2x8xf32> to vector<2xf32>
    %655 = vector.shape_cast %654 : vector<2xf32> to vector<2x1xf32>
    %656 = vector.broadcast %655 : vector<2x1xf32> to vector<2x8xf32>
    %657 = arith.subf %653, %656 : vector<2x8xf32>
    %658 = math.exp %657 : vector<2x8xf32>
    %cst_148 = arith.constant dense<0.000000e+00> : vector<2xf32>
    %659 = vector.multi_reduction <add>, %658, %cst_148 [1] : vector<2x8xf32> to vector<2xf32>
    %660 = vector.shape_cast %659 : vector<2xf32> to vector<2x1xf32>
    %661 = vector.broadcast %660 : vector<2x1xf32> to vector<2x8xf32>
    %662 = arith.divf %658, %661 : vector<2x8xf32>
    %663 = vector.shape_cast %662 : vector<2x8xf32> to vector<2x8x1xf32>
    %664 = vector.broadcast %663 : vector<2x8x1xf32> to vector<2x8x32xf32>
    %665 = arith.mulf %185, %664 : vector<2x8x32xf32>
    %cst_149 = arith.constant dense<0.000000e+00> : vector<2x32xf32>
    %666 = vector.multi_reduction <add>, %665, %cst_149 [1] : vector<2x8x32xf32> to vector<2x32xf32>
    %667 = arith.addf %666, %641 : vector<2x32xf32>
    %668 = math.tanh %667 : vector<2x32xf32>
    %669 = arith.mulf %662, %615 : vector<2x8xf32>
    %cst_150 = arith.constant dense<0xFF800000> : vector<2xf32>
    %670 = vector.multi_reduction <maximumf>, %669, %cst_150 [1] : vector<2x8xf32> to vector<2xf32>
    %671 = vector.shape_cast %670 : vector<2xf32> to vector<2x1xf32>
    %672 = vector.broadcast %671 : vector<2x1xf32> to vector<2x8xf32>
    %673 = arith.cmpf oeq, %669, %672 : vector<2x8xf32>
    %cst_151 = arith.constant 8.000000e+00 : f32
    %674 = vector.broadcast %cst_151 : f32 to vector<2x8xf32>
    %675 = arith.select %673, %205, %674 : vector<2x8xi1>, vector<2x8xf32>
    %cst_152 = arith.constant dense<0x7F800000> : vector<2xf32>
    %676 = vector.multi_reduction <minimumf>, %675, %cst_152 [1] : vector<2x8xf32> to vector<2xf32>
    %677 = vector.shape_cast %676 : vector<2xf32> to vector<2x1xf32>
    %678 = vector.broadcast %677 : vector<2x1xf32> to vector<2x8xf32>
    %679 = arith.cmpf oeq, %205, %678 : vector<2x8xf32>
    %680 = arith.extui %679 : vector<2x8xi1> to vector<2x8xi32>
    %681 = arith.sitofp %680 : vector<2x8xi32> to vector<2x8xf32>
    %cst_153 = arith.constant 1.000000e+00 : f32
    %682 = vector.broadcast %cst_153 : f32 to vector<2x8xf32>
    %683 = arith.subf %682, %681 : vector<2x8xf32>
    %684 = arith.mulf %615, %683 : vector<2x8xf32>
    %685 = vector.shape_cast %681 : vector<2x8xf32> to vector<2x8x1xf32>
    %686 = vector.broadcast %685 : vector<2x8x1xf32> to vector<2x8x128xf32>
    %687 = arith.mulf %686, %191 : vector<2x8x128xf32>
    %cst_154 = arith.constant dense<0.000000e+00> : vector<2x128xf32>
    %688 = vector.multi_reduction <add>, %687, %cst_154 [1] : vector<2x8x128xf32> to vector<2x128xf32>
    %cst_155 = arith.constant dense<0.000000e+00> : vector<2x128xf32>
    %689 = tpu.matmul %668, %196, %cst_155 {dimension_numbers = #tpu.dot_dimension_numbers<[1], [0], [0], [1], [0, 0, 1, 1], [], []>} : vector<2x32xf32>, vector<32x128xf32>, vector<2x128xf32> -> vector<2x128xf32>
    %690 = arith.addf %688, %689 : vector<2x128xf32>
    %691 = arith.negf %690 : vector<2x128xf32>
    %692 = math.exp %691 : vector<2x128xf32>
    %cst_156 = arith.constant 1.000000e+00 : f32
    %693 = vector.broadcast %cst_156 : f32 to vector<2x128xf32>
    %694 = arith.addf %693, %692 : vector<2x128xf32>
    %695 = arith.divf %693, %694 : vector<2x128xf32>
    %696 = math.tanh %690 : vector<2x128xf32>
    %697 = vector.extract_strided_slice %695 {offsets = [0, 0], sizes = [2, 32], strides = [1, 1]} : vector<2x128xf32> to vector<2x32xf32>
    %698 = vector.extract_strided_slice %695 {offsets = [0, 32], sizes = [2, 32], strides = [1, 1]} : vector<2x128xf32> to vector<2x32xf32>
    %699 = vector.extract_strided_slice %696 {offsets = [0, 64], sizes = [2, 32], strides = [1, 1]} : vector<2x128xf32> to vector<2x32xf32>
    %700 = vector.extract_strided_slice %695 {offsets = [0, 96], sizes = [2, 32], strides = [1, 1]} : vector<2x128xf32> to vector<2x32xf32>
    %701 = arith.mulf %698, %634 : vector<2x32xf32>
    %702 = arith.mulf %697, %699 : vector<2x32xf32>
    %703 = arith.addf %701, %702 : vector<2x32xf32>
    %704 = math.tanh %703 : vector<2x32xf32>
    %705 = arith.mulf %700, %704 : vector<2x32xf32>
    %cst_157 = arith.constant dense<0.000000e+00> : vector<2x64xf32>
    %706 = tpu.matmul %705, %197, %cst_157 {dimension_numbers = #tpu.dot_dimension_numbers<[1], [0], [0], [1], [0, 0, 1, 1], [], []>} : vector<2x32xf32>, vector<32x64xf32>, vector<2x64xf32> -> vector<2x64xf32>
    %707 = vector.broadcast %198 : vector<1x64xf32> to vector<2x64xf32>
    %708 = arith.addf %706, %707 : vector<2x64xf32>
    %709 = vector.extract_strided_slice %708 {offsets = [0, 0], sizes = [2, 32], strides = [1, 1]} : vector<2x64xf32> to vector<2x32xf32>
    %710 = vector.shape_cast %709 : vector<2x32xf32> to vector<2x1x32xf32>
    %711 = vector.broadcast %710 : vector<2x1x32xf32> to vector<2x8x32xf32>
    %712 = arith.addf %711, %182 : vector<2x8x32xf32>
    %713 = math.tanh %712 : vector<2x8x32xf32>
    %714 = vector.broadcast %200 : vector<1x1x32xf32> to vector<2x8x32xf32>
    %715 = arith.mulf %713, %714 : vector<2x8x32xf32>
    %cst_158 = arith.constant dense<0.000000e+00> : vector<2x8xf32>
    %716 = vector.multi_reduction <add>, %715, %cst_158 [2] : vector<2x8x32xf32> to vector<2x8xf32>
    %cst_159 = arith.constant 1.000000e+00 : f32
    %717 = vector.broadcast %cst_159 : f32 to vector<2x8xf32>
    %718 = arith.subf %684, %717 : vector<2x8xf32>
    %cst_160 = arith.constant 1.000000e+30 : f32
    %719 = vector.broadcast %cst_160 : f32 to vector<2x8xf32>
    %720 = arith.mulf %718, %719 : vector<2x8xf32>
    %721 = arith.addf %716, %720 : vector<2x8xf32>
    %cst_161 = arith.constant dense<0xFF800000> : vector<2xf32>
    %722 = vector.multi_reduction <maximumf>, %721, %cst_161 [1] : vector<2x8xf32> to vector<2xf32>
    %723 = vector.shape_cast %722 : vector<2xf32> to vector<2x1xf32>
    %724 = vector.broadcast %723 : vector<2x1xf32> to vector<2x8xf32>
    %725 = arith.subf %721, %724 : vector<2x8xf32>
    %726 = math.exp %725 : vector<2x8xf32>
    %cst_162 = arith.constant dense<0.000000e+00> : vector<2xf32>
    %727 = vector.multi_reduction <add>, %726, %cst_162 [1] : vector<2x8xf32> to vector<2xf32>
    %728 = vector.shape_cast %727 : vector<2xf32> to vector<2x1xf32>
    %729 = vector.broadcast %728 : vector<2x1xf32> to vector<2x8xf32>
    %730 = arith.divf %726, %729 : vector<2x8xf32>
    %731 = arith.mulf %730, %684 : vector<2x8xf32>
    %cst_163 = arith.constant dense<0xFF800000> : vector<2xf32>
    %732 = vector.multi_reduction <maximumf>, %731, %cst_163 [1] : vector<2x8xf32> to vector<2xf32>
    %733 = vector.shape_cast %732 : vector<2xf32> to vector<2x1xf32>
    %734 = vector.broadcast %733 : vector<2x1xf32> to vector<2x8xf32>
    %735 = arith.cmpf oeq, %731, %734 : vector<2x8xf32>
    %cst_164 = arith.constant 8.000000e+00 : f32
    %736 = vector.broadcast %cst_164 : f32 to vector<2x8xf32>
    %737 = arith.select %735, %205, %736 : vector<2x8xi1>, vector<2x8xf32>
    %cst_165 = arith.constant dense<0x7F800000> : vector<2xf32>
    %738 = vector.multi_reduction <minimumf>, %737, %cst_165 [1] : vector<2x8xf32> to vector<2xf32>
    %739 = vector.shape_cast %738 : vector<2xf32> to vector<2x1xf32>
    %740 = vector.shape_cast %248 : vector<2x8xf32> to vector<2x1x8xf32>
    %741 = vector.shape_cast %317 : vector<2x8xf32> to vector<2x1x8xf32>
    %742 = vector.shape_cast %386 : vector<2x8xf32> to vector<2x1x8xf32>
    %743 = vector.shape_cast %455 : vector<2x8xf32> to vector<2x1x8xf32>
    %744 = vector.shape_cast %524 : vector<2x8xf32> to vector<2x1x8xf32>
    %745 = vector.shape_cast %593 : vector<2x8xf32> to vector<2x1x8xf32>
    %746 = vector.shape_cast %662 : vector<2x8xf32> to vector<2x1x8xf32>
    %747 = vector.shape_cast %730 : vector<2x8xf32> to vector<2x1x8xf32>
    %748 = tpu.concatenate %740, %741, %742, %743, %744, %745, %746, %747 in 1 : vector<2x1x8xf32>, vector<2x1x8xf32>, vector<2x1x8xf32>, vector<2x1x8xf32>, vector<2x1x8xf32>, vector<2x1x8xf32>, vector<2x1x8xf32>, vector<2x1x8xf32> -> vector<2x8x8xf32>
    %c0_166 = arith.constant 0 : index
    %c0_167 = arith.constant 0 : index
    %c0_168 = arith.constant 0 : index
    %749 = vector.load %arg16[%c0_166, %c0_167, %c0_168] : memref<2x8x8xf32, #tpu.memory_space<vmem>>, vector<2x8x8xf32>
    tpu.vector_store %arg16[%c0_166, %c0_167, %c0_168], %748 {strides = array<i32>} : memref<2x8x8xf32, #tpu.memory_space<vmem>>, vector<2x8x8xf32>,
    %750 = tpu.concatenate %263, %332, %401, %470, %539, %608, %677, %739 in 1 : vector<2x1xf32>, vector<2x1xf32>, vector<2x1xf32>, vector<2x1xf32>, vector<2x1xf32>, vector<2x1xf32>, vector<2x1xf32>, vector<2x1xf32> -> vector<2x8xf32>
    %751 = arith.fptosi %750 : vector<2x8xf32> to vector<2x8xi32>
    %c0_169 = arith.constant 0 : index
    %c0_170 = arith.constant 0 : index
    %752 = vector.load %arg17[%c0_169, %c0_170] : memref<2x8xi32, #tpu.memory_space<vmem>>, vector<2x8xi32>
    tpu.vector_store %arg17[%c0_169, %c0_170], %751 {strides = array<i32>} : memref<2x8xi32, #tpu.memory_space<vmem>>, vector<2x8xi32>,
    return
  }
}

</mosaic_0001>

<llo_original>
// kernel: pointer_net_forward.1
$region0: #{pointer_net_forward.1}
  #allocation0 [shape = 'u32[]', space=smem, size = 0x4, offset = 0x4, fixed_abs, tag = 'smem constant byte address 0x4 - core index']
  #allocation1 [shape = 'u32[144,128]{1,0:T(1,128)}', space=vmem, size = 0x12000, scoped, tag = 'internal scratch']
  %s0 = inlined_call_operand.vmem [shape: f32[16,2], index: 0, kind: input, shape index: {}]
  %s1 = inlined_call_operand.vmem [shape: f32[2,32], index: 1, kind: input, shape index: {}]
  %s2 = inlined_call_operand.vmem [shape: f32[1,32], index: 2, kind: input, shape index: {}]
  %s3 = inlined_call_operand.vmem [shape: f32[32,128], index: 3, kind: input, shape index: {}]
  %s4 = inlined_call_operand.vmem [shape: f32[32,128], index: 4, kind: input, shape index: {}]
  %s5 = inlined_call_operand.vmem [shape: f32[1,128], index: 5, kind: input, shape index: {}]
  %s6 = inlined_call_operand.vmem [shape: f32[32,128], index: 6, kind: input, shape index: {}]
  %s7 = inlined_call_operand.vmem [shape: f32[32,128], index: 7, kind: input, shape index: {}]
  %s8 = inlined_call_operand.vmem [shape: f32[1,128], index: 8, kind: input, shape index: {}]
  %s9 = inlined_call_operand.vmem [shape: f32[32,32], index: 9, kind: input, shape index: {}]
  %s10 = inlined_call_operand.vmem [shape: f32[1,32], index: 10, kind: input, shape index: {}]
  %s11 = inlined_call_operand.vmem [shape: f32[1,32], index: 11, kind: input, shape index: {}]
  %s12 = inlined_call_operand.vmem [shape: f32[32,32], index: 12, kind: input, shape index: {}]
  %s13 = inlined_call_operand.vmem [shape: f32[32,64], index: 13, kind: input, shape index: {}]
  %s14 = inlined_call_operand.vmem [shape: f32[1,64], index: 14, kind: input, shape index: {}]
  %s15 = inlined_call_operand.vmem [shape: f32[1,32], index: 15, kind: input, shape index: {}]
  %s16 = inlined_call_operand.hbm [shape: f32[2,8,8], index: 16, kind: output, shape index: {0}]
  %s17 = inlined_call_operand.hbm [shape: s32[2,8], index: 17, kind: output, shape index: {1}]
  %18 = xla_tuple %s16, %s17
  %s19 = sld [smem:[#allocation0]]
  $region82: #{pointer_net_forward.1} parent=0
    _
  %s21 = ssub.s32 1, %s19
  %s22 = scalar_select 0, %s21, %s19
  $region1: #{pointer_net_forward.1} parent=0
    #allocation2 [shape = 'u8[8192]{0}', space=vmem, size = 0x2000, scoped, tag = 'output window, operand 0, single buffered']
    #allocation3 [shape = 's32[1]{0}', space=sflag, size = 0x4, scoped, tag = 'scoped memory for pointer_net_forward.1']
    #allocation4 [shape = 'u8[1024]{0}', space=vmem, size = 0x400, scoped, tag = 'output window, operand 1, single buffered']
    #allocation5 [shape = 's32[1]{0}', space=sflag, size = 0x4, scoped, tag = 'scoped memory for pointer_net_forward.1']
    %23 = vsyncpa [#allocation3], 0
    %24 = vsyncpa [#allocation5], 0
    // Predicated region
    $region2: #{pointer_net_forward.1} parent=1 // pred_check
      _
    $region3: #{pointer_net_forward.1} parent=1 // pred_check_branch
      %26 = sbr.rel (0) target = $region5
    $region4: #{pointer_net_forward.1} parent=1 // pred_region
      _
    $region5: #{pointer_net_forward.1} parent=1 // pred_fallthru
      _
    // Predicated region
    $region6: #{pointer_net_forward.1} parent=1 // pred_check
      _
    $region7: #{pointer_net_forward.1} parent=1 // pred_check_branch
      %28 = sbr.rel (0) target = $region9
    $region8: #{pointer_net_forward.1} parent=1 // pred_region
      _
    $region9: #{pointer_net_forward.1} parent=1 // pred_fallthru
      _
    // Predicated region
    $region10: #{pointer_net_forward.1} parent=1 // pred_check
      _
    $region11: #{pointer_net_forward.1} parent=1 // pred_check_branch
      %30 = sbr.rel (0) target = $region13
    $region12: #{pointer_net_forward.1} parent=1 // pred_region
      _
    $region13: #{pointer_net_forward.1} parent=1 // pred_fallthru
      _
    // Predicated region
    $region14: #{pointer_net_forward.1} parent=1 // pred_check
      _
    $region15: #{pointer_net_forward.1} parent=1 // pred_check_branch
      %32 = sbr.rel (0) target = $region17
    $region16: #{pointer_net_forward.1} parent=1 // pred_region
      _
    $region17: #{pointer_net_forward.1} parent=1 // pred_fallthru
      _
    // Predicated region
    $region18: #{pointer_net_forward.1} parent=1 // pred_check
      _
    $region19: #{pointer_net_forward.1} parent=1 // pred_check_branch
      %34 = sbr.rel (0) target = $region21
    $region20: #{pointer_net_forward.1} parent=1 // pred_region
      _
    $region21: #{pointer_net_forward.1} parent=1 // pred_fallthru
      _
    // Predicated region
    $region22: #{pointer_net_forward.1} parent=1 // pred_check
      _
    $region23: #{pointer_net_forward.1} parent=1 // pred_check_branch
      %36 = sbr.rel (0) target = $region25
    $region24: #{pointer_net_forward.1} parent=1 // pred_region
      _
    $region25: #{pointer_net_forward.1} parent=1 // pred_fallthru
      _
    // Predicated region
    $region26: #{pointer_net_forward.1} parent=1 // pred_check
      _
    $region27: #{pointer_net_forward.1} parent=1 // pred_check_branch
      %38 = sbr.rel (0) target = $region29
    $region28: #{pointer_net_forward.1} parent=1 // pred_region
      _
    $region29: #{pointer_net_forward.1} parent=1 // pred_fallthru
      _
    // Predicated region
    $region30: #{pointer_net_forward.1} parent=1 // pred_check
      _
    $region31: #{pointer_net_forward.1} parent=1 // pred_check_branch
      %40 = sbr.rel (0) target = $region33
    $region32: #{pointer_net_forward.1} parent=1 // pred_region
      _
    $region33: #{pointer_net_forward.1} parent=1 // pred_fallthru
      _
    // Predicated region
    $region34: #{pointer_net_forward.1} parent=1 // pred_check
      _
    $region35: #{pointer_net_forward.1} parent=1 // pred_check_branch
      %42 = sbr.rel (0) target = $region37
    $region36: #{pointer_net_forward.1} parent=1 // pred_region
      _
    $region37: #{pointer_net_forward.1} parent=1 // pred_fallthru
      _
    // Predicated region
    $region38: #{pointer_net_forward.1} parent=1 // pred_check
      _
    $region39: #{pointer_net_forward.1} parent=1 // pred_check_branch
      %44 = sbr.rel (0) target = $region41
    $region40: #{pointer_net_forward.1} parent=1 // pred_region
      _
    $region41: #{pointer_net_forward.1} parent=1 // pred_fallthru
      _
    // Predicated region
    $region42: #{pointer_net_forward.1} parent=1 // pred_check
      _
    $region43: #{pointer_net_forward.1} parent=1 // pred_check_branch
      %46 = sbr.rel (0) target = $region45
    $region44: #{pointer_net_forward.1} parent=1 // pred_region
      _
    $region45: #{pointer_net_forward.1} parent=1 // pred_fallthru
      _
    // Predicated region
    $region46: #{pointer_net_forward.1} parent=1 // pred_check
      _
    $region47: #{pointer_net_forward.1} parent=1 // pred_check_branch
      %48 = sbr.rel (0) target = $region49
    $region48: #{pointer_net_forward.1} parent=1 // pred_region
      _
    $region49: #{pointer_net_forward.1} parent=1 // pred_fallthru
      _
    // Predicated region
    $region50: #{pointer_net_forward.1} parent=1 // pred_check
      _
    $region51: #{pointer_net_forward.1} parent=1 // pred_check_branch
      %50 = sbr.rel (0) target = $region53
    $region52: #{pointer_net_forward.1} parent=1 // pred_region
      _
    $region53: #{pointer_net_forward.1} parent=1 // pred_fallthru
      _
    // Predicated region
    $region54: #{pointer_net_forward.1} parent=1 // pred_check
      _
    $region55: #{pointer_net_forward.1} parent=1 // pred_check_branch
      %52 = sbr.rel (0) target = $region57
    $region56: #{pointer_net_forward.1} parent=1 // pred_region
      _
    $region57: #{pointer_net_forward.1} parent=1 // pred_fallthru
      _
    // Predicated region
    $region58: #{pointer_net_forward.1} parent=1 // pred_check
      _
    $region59: #{pointer_net_forward.1} parent=1 // pred_check_branch
      %54 = sbr.rel (0) target = $region61
    $region60: #{pointer_net_forward.1} parent=1 // pred_region
      _
    $region61: #{pointer_net_forward.1} parent=1 // pred_fallthru
      _
    // Predicated region
    $region62: #{pointer_net_forward.1} parent=1 // pred_check
      _
    $region63: #{pointer_net_forward.1} parent=1 // pred_check_branch
      %56 = sbr.rel (0) target = $region65
    $region64: #{pointer_net_forward.1} parent=1 // pred_region
      _
    $region65: #{pointer_net_forward.1} parent=1 // pred_fallthru
      _
    %v57 = vld [vmem:[%s0] sm:$0xff]
    %v58 = vld [vmem:[%s0 + $0x8] sm:$0xff]
    %v59 = vld [vmem:[%s1] sm:$0x3]
    %v60 = vld [vmem:[%s2] sm:$0x1]
    %v62 = vlaneseq
    %v63 = vshrl.u32 %v62, 7
    %v64 = vsub.s32 0, %v63
    %v65 = vrot.slane %v60, %v64
    %vm67 = vcmask 15360
    %v69 = vsel %vm67, %v57, 0
    %v72 = vsel %vm67, %v58, 0
    %vm74 = vcmask 1041408
    %v76 = vsel %vm74, %v59, 0
    %78 = vmatprep.subr.mxu0 0.0
    %79 = vmatpush1.msra.mxu0 %v76
    %80 = vmatprep.subr.mxu0 0.0
    %81 = vmatpush1.msra.mxu0 0.0
    %82 = vmatprep.subr.mxu0 0.0
    %83 = vmatpush1.msra.mxu0 0.0
    %84 = vmatprep.subr.mxu0 0.0
    %85 = vmatpush1.msra.mxu0 0.0
    %86 = vmatprep.subr.mxu0 0.0
    %87 = vmatpush1.msra.mxu0 0.0
    %88 = vmatprep.subr.mxu0 0.0
    %89 = vmatpush1.msra.mxu0 0.0
    %90 = vmatprep.subr.mxu0 0.0
    %91 = vmatpush1.msra.mxu0 0.0
    %92 = vmatprep.subr.mxu0 0.0
    %93 = vmatpush1.msra.mxu0 0.0
    %94 = vmatprep.subr.mxu0 0.0
    %95 = vmatpush1.msra.mxu0 0.0
    %96 = vmatprep.subr.mxu0 0.0
    %97 = vmatpush1.msra.mxu0 0.0
    %98 = vmatprep.subr.mxu0 0.0
    %99 = vmatpush1.msra.mxu0 0.0
    %100 = vmatprep.subr.mxu0 0.0
    %101 = vmatpush1.msra.mxu0 0.0
    %102 = vmatprep.subr.mxu0 0.0
    %103 = vmatpush1.msra.mxu0 0.0
    %104 = vmatprep.subr.mxu0 0.0
    %105 = vmatpush1.msra.mxu0 0.0
    %106 = vmatprep.subr.mxu0 0.0
    %107 = vmatpush1.msra.mxu0 0.0
    %108 = vmatprep.subr.mxu0 0.0
    %109 = vmatpush1.msra.mxu0 0.0
    %110 = vmatprep.subr.mxu0 0.0
    %111 = vmatpush1.msra.mxu0 0.0
    %112 = vmatprep.subr.mxu0 0.0
    %113 = vmatpush1.msra.mxu0 0.0
    %114 = vmatprep.subr.mxu0 0.0
    %115 = vmatpush1.msra.mxu0 0.0
    %116 = vmatprep.subr.mxu0 0.0
    %117 = vmatpush1.msra.mxu0 0.0
    %118 = vmatprep.subr.mxu0 0.0
    %119 = vmatpush1.msra.mxu0 0.0
    %120 = vmatprep.subr.mxu0 0.0
    %121 = vmatpush1.msra.mxu0 0.0
    %122 = vmatprep.subr.mxu0 0.0
    %123 = vmatpush1.msra.mxu0 0.0
    %124 = vmatprep.subr.mxu0 0.0
    %125 = vmatpush1.msra.mxu0 0.0
    %126 = vmatprep.subr.mxu0 0.0
    %127 = vmatpush1.msra.mxu0 0.0
    %128 = vmatprep.subr.mxu0 0.0
    %129 = vmatpush1.msra.mxu0 0.0
    %130 = vmatprep.subr.mxu0 0.0
    %131 = vmatpush1.msra.mxu0 0.0
    %132 = vmatprep.subr.mxu0 0.0
    %133 = vmatpush1.msra.mxu0 0.0
    %134 = vmatprep.subr.mxu0 0.0
    %135 = vmatpush1.msra.mxu0 0.0
    %136 = vmatprep.subr.mxu0 0.0
    %137 = vmatpush1.msra.mxu0 0.0
    %138 = vmatprep.subr.mxu0 0.0
    %139 = vmatpush1.msra.mxu0 0.0
    %140 = vmatprep.subr.mxu0 0.0
    %141 = vmatpush1.msra.mxu0 0.0
    %142 = vmatprep.mubr.f32.mxu0 0.0
    %143 = vmatmul.mubr.f32.gmra.mrb[0].mxu0 %v69
    %v144 = vpop.f32.mrb[0].mxu0
    %v145 = vadd.f32 %v65, %v144
    %v146 = vpop.f32.mrb[0].mxu0
    %147 = vmatprep.mubr.f32.mxu0 0.0
    %148 = vmatmul.mubr.f32.gmra.mrb[0].mxu0 %v72
    %v149 = vpop.f32.mrb[0].mxu0
    %v150 = vadd.f32 %v65, %v149
    %v151 = vpop.f32.mrb[0].mxu0
    %152 = vdwg.mxu0
    %v153 = vld [vmem:[%s3] sm:$0xff]
    %v154 = vld [vmem:[%s3 + $0x8] sm:$0xff]
    %v155 = vld [vmem:[%s3 + $0x10] sm:$0xff]
    %v156 = vld [vmem:[%s3 + $0x18] sm:$0xff]
    %v157 = vld [vmem:[%s5] sm:$0x1]
    %v159 = vlaneseq
    %v160 = vshrl.u32 %v159, 7
    %v161 = vsub.s32 0, %v160
    %v162 = vrot.slane %v157, %v161
    %vm164 = vcmask 261120
    %v166 = vsel %vm164, %v145, 0
    %v169 = vsel %vm164, %v150, 0
    %171 = vmatprep.subr.mxu0 0.0
    %172 = vmatpush1.msra.mxu0 %v153
    %173 = vmatprep.subr.mxu0 0.0
    %174 = vmatpush1.msra.mxu0 %v154
    %175 = vmatprep.subr.mxu0 0.0
    %176 = vmatpush1.msra.mxu0 %v155
    %177 = vmatprep.subr.mxu0 0.0
    %178 = vmatpush1.msra.mxu0 %v156
    %179 = vmatprep.subr.mxu0 0.0
    %180 = vmatpush1.msra.mxu0 0.0
    %181 = vmatprep.subr.mxu0 0.0
    %182 = vmatpush1.msra.mxu0 0.0
    %183 = vmatprep.subr.mxu0 0.0
    %184 = vmatpush1.msra.mxu0 0.0
    %185 = vmatprep.subr.mxu0 0.0
    %186 = vmatpush1.msra.mxu0 0.0
    %187 = vmatprep.subr.mxu0 0.0
    %188 = vmatpush1.msra.mxu0 0.0
    %189 = vmatprep.subr.mxu0 0.0
    %190 = vmatpush1.msra.mxu0 0.0
    %191 = vmatprep.subr.mxu0 0.0
    %192 = vmatpush1.msra.mxu0 0.0
    %193 = vmatprep.subr.mxu0 0.0
    %194 = vmatpush1.msra.mxu0 0.0
    %195 = vmatprep.subr.mxu0 0.0
    %196 = vmatpush1.msra.mxu0 0.0
    %197 = vmatprep.subr.mxu0 0.0
    %198 = vmatpush1.msra.mxu0 0.0
    %199 = vmatprep.subr.mxu0 0.0
    %200 = vmatpush1.msra.mxu0 0.0
    %201 = vmatprep.subr.mxu0 0.0
    %202 = vmatpush1.msra.mxu0 0.0
    %203 = vmatprep.subr.mxu0 0.0
    %204 = vmatpush1.msra.mxu0 0.0
    %205 = vmatprep.subr.mxu0 0.0
    %206 = vmatpush1.msra.mxu0 0.0
    %207 = vmatprep.subr.mxu0 0.0
    %208 = vmatpush1.msra.mxu0 0.0
    %209 = vmatprep.subr.mxu0 0.0
    %210 = vmatpush1.msra.mxu0 0.0
    %211 = vmatprep.subr.mxu0 0.0
    %212 = vmatpush1.msra.mxu0 0.0
    %213 = vmatprep.subr.mxu0 0.0
    %214 = vmatpush1.msra.mxu0 0.0
    %215 = vmatprep.subr.mxu0 0.0
    %216 = vmatpush1.msra.mxu0 0.0
    %217 = vmatprep.subr.mxu0 0.0
    %218 = vmatpush1.msra.mxu0 0.0
    %219 = vmatprep.subr.mxu0 0.0
    %220 = vmatpush1.msra.mxu0 0.0
    %221 = vmatprep.subr.mxu0 0.0
    %222 = vmatpush1.msra.mxu0 0.0
    %223 = vmatprep.subr.mxu0 0.0
    %224 = vmatpush1.msra.mxu0 0.0
    %225 = vmatprep.subr.mxu0 0.0
    %226 = vmatpush1.msra.mxu0 0.0
    %227 = vmatprep.subr.mxu0 0.0
    %228 = vmatpush1.msra.mxu0 0.0
    %229 = vmatprep.subr.mxu0 0.0
    %230 = vmatpush1.msra.mxu0 0.0
    %231 = vmatprep.subr.mxu0 0.0
    %232 = vmatpush1.msra.mxu0 0.0
    %233 = vmatprep.subr.mxu0 0.0
    %234 = vmatpush1.msra.mxu0 0.0
    %235 = vmatprep.mubr.f32.mxu0 0.0
    %236 = vmatmul.mubr.f32.gmra.mrb[0].mxu0 %v166
    %v237 = vpop.f32.mrb[0].mxu0
    %v238 = vadd.f32 %v162, %v237
    %v239 = vpop.f32.mrb[0].mxu0
    %240 = vmatprep.mubr.f32.mxu0 0.0
    %241 = vmatmul.mubr.f32.gmra.mrb[0].mxu0 %v169
    %v242 = vpop.f32.mrb[0].mxu0
    %v243 = vadd.f32 %v162, %v242
    %v244 = vpop.f32.mrb[0].mxu0
    %245 = vdwg.mxu0
    %v246 = vld [vmem:[%s4] sm:$0xff]
    %v247 = vld [vmem:[%s4 + $0x8] sm:$0xff]
    %v248 = vld [vmem:[%s4 + $0x10] sm:$0xff]
    %v249 = vld [vmem:[%s4 + $0x18] sm:$0xff]
    %v251 = vsel %vm164, 0.0, 0
    %253 = vmatprep.subr.mxu0 0.0
    %254 = vmatpush1.msra.mxu0 %v246
    %255 = vmatprep.subr.mxu0 0.0
    %256 = vmatpush1.msra.mxu0 %v247
    %257 = vmatprep.subr.mxu0 0.0
    %258 = vmatpush1.msra.mxu0 %v248
    %259 = vmatprep.subr.mxu0 0.0
    %260 = vmatpush1.msra.mxu0 %v249
    %261 = vmatprep.subr.mxu0 0.0
    %262 = vmatpush1.msra.mxu0 0.0
    %263 = vmatprep.subr.mxu0 0.0
    %264 = vmatpush1.msra.mxu0 0.0
    %265 = vmatprep.subr.mxu0 0.0
    %266 = vmatpush1.msra.mxu0 0.0
    %267 = vmatprep.subr.mxu0 0.0
    %268 = vmatpush1.msra.mxu0 0.0
    %269 = vmatprep.subr.mxu0 0.0
    %270 = vmatpush1.msra.mxu0 0.0
    %271 = vmatprep.subr.mxu0 0.0
    %272 = vmatpush1.msra.mxu0 0.0
    %273 = vmatprep.subr.mxu0 0.0
    %274 = vmatpush1.msra.mxu0 0.0
    %275 = vmatprep.subr.mxu0 0.0
    %276 = vmatpush1.msra.mxu0 0.0
    %277 = vmatprep.subr.mxu0 0.0
    %278 = vmatpush1.msra.mxu0 0.0
    %279 = vmatprep.subr.mxu0 0.0
    %280 = vmatpush1.msra.mxu0 0.0
    %281 = vmatprep.subr.mxu0 0.0
    %282 = vmatpush1.msra.mxu0 0.0
    %283 = vmatprep.subr.mxu0 0.0
    %284 = vmatpush1.msra.mxu0 0.0
    %285 = vmatprep.subr.mxu0 0.0
    %286 = vmatpush1.msra.mxu0 0.0
    %287 = vmatprep.subr.mxu0 0.0
    %288 = vmatpush1.msra.mxu0 0.0
    %289 = vmatprep.subr.mxu0 0.0
    %290 = vmatpush1.msra.mxu0 0.0
    %291 = vmatprep.subr.mxu0 0.0
    %292 = vmatpush1.msra.mxu0 0.0
    %293 = vmatprep.subr.mxu0 0.0
    %294 = vmatpush1.msra.mxu0 0.0
    %295 = vmatprep.subr.mxu0 0.0
    %296 = vmatpush1.msra.mxu0 0.0
    %297 = vmatprep.subr.mxu0 0.0
    %298 = vmatpush1.msra.mxu0 0.0
    %299 = vmatprep.subr.mxu0 0.0
    %300 = vmatpush1.msra.mxu0 0.0
    %301 = vmatprep.subr.mxu0 0.0
    %302 = vmatpush1.msra.mxu0 0.0
    %303 = vmatprep.subr.mxu0 0.0
    %304 = vmatpush1.msra.mxu0 0.0
    %305 = vmatprep.subr.mxu0 0.0
    %306 = vmatpush1.msra.mxu0 0.0
    %307 = vmatprep.subr.mxu0 0.0
    %308 = vmatpush1.msra.mxu0 0.0
    %309 = vmatprep.subr.mxu0 0.0
    %310 = vmatpush1.msra.mxu0 0.0
    %311 = vmatprep.subr.mxu0 0.0
    %312 = vmatpush1.msra.mxu0 0.0
    %313 = vmatprep.subr.mxu0 0.0
    %314 = vmatpush1.msra.mxu0 0.0
    %315 = vmatprep.subr.mxu0 0.0
    %316 = vmatpush1.msra.mxu0 0.0
    %317 = vmatprep.mubr.f32.mxu0 0.0
    %318 = vmatmul.mubr.f32.gmra.mrb[0].mxu0 %v251
    %v319 = vpop.f32.mrb[0].mxu0
    %v320 = vadd.f32 0.0, %v319
    %v321 = vpop.f32.mrb[0].mxu0
    %322 = vdwg.mxu0
    %v324 = vrot.slane %v320, 1
    %v327 = vadd.f32 %v238, %v320
    %v328 = vadd.f32 %v243, %v324
    %v329 = vxor.u32 %v327, 2147483648
    %v330 = vxor.u32 %v328, 2147483648
    %v331 = vmul.f32 %v329, 1.442695
    %v332 = vpow.pop %v331
    %v333 = vmul.f32 %v330, 1.442695
    %v334 = vpow.pop %v333
    %v335 = vadd.f32 %v332, 1.0
    %v336 = vadd.f32 %v334, 1.0
    %v337 = vrcp.pop %v335
    %v338 = vmul.f32 1.0, %v337
    %v339 = vrcp.pop %v336
    %v340 = vmul.f32 1.0, %v339
    %v341 = vtanh.pop %v327
    %v342 = vtanh.pop %v328
    %v343 = vmul.f32 %v338, 0.0
    %v344 = vmul.f32 %v340, 0.0
    %347 = vrot.lane.b32.xlu0 %v341, 64
    %v348 = vpop.permute.xlu0 %347
    %349 = vrot.lane.b32.xlu0 %v342, 64
    %v350 = vpop.permute.xlu0 %349
    %v353 = vmul.f32 %v338, %v348
    %v354 = vmul.f32 %v340, %v350
    %357 = vrot.lane.b32.xlu0 %v353, 32
    %v358 = vpop.permute.xlu0 %357
    %359 = vrot.lane.b32.xlu0 %v354, 32
    %v360 = vpop.permute.xlu0 %359
    %v363 = vadd.f32 %v343, %v358
    %v364 = vadd.f32 %v344, %v360
    %v365 = vtanh.pop %v363
    %v366 = vtanh.pop %v364
    %369 = vrot.lane.b32.xlu0 %v365, 64
    %v370 = vpop.permute.xlu0 %369
    %371 = vrot.lane.b32.xlu0 %v366, 64
    %v372 = vpop.permute.xlu0 %371
    %v375 = vmul.f32 %v338, %v370
    %v376 = vmul.f32 %v340, %v372
    %v379 = vrot.slane %v376, 7
    %vm380 = vcmask 1041409
    %v381 = vsel %vm380, %v379, %v375
    %382 = vrot.lane.b32.xlu0 %v381, 32
    %v383 = vpop.permute.xlu0 %382
    %v384 = vsel %vm164, %v383, 0
    %386 = vmatprep.subr.mxu0 0.0
    %387 = vmatpush1.msra.mxu0 %v246
    %388 = vmatprep.subr.mxu0 0.0
    %389 = vmatpush1.msra.mxu0 %v247
    %390 = vmatprep.subr.mxu0 0.0
    %391 = vmatpush1.msra.mxu0 %v248
    %392 = vmatprep.subr.mxu0 0.0
    %393 = vmatpush1.msra.mxu0 %v249
    %394 = vmatprep.subr.mxu0 0.0
    %395 = vmatpush1.msra.mxu0 0.0
    %396 = vmatprep.subr.mxu0 0.0
    %397 = vmatpush1.msra.mxu0 0.0
    %398 = vmatprep.subr.mxu0 0.0
    %399 = vmatpush1.msra.mxu0 0.0
    %400 = vmatprep.subr.mxu0 0.0
    %401 = vmatpush1.msra.mxu0 0.0
    %402 = vmatprep.subr.mxu0 0.0
    %403 = vmatpush1.msra.mxu0 0.0
    %404 = vmatprep.subr.mxu0 0.0
    %405 = vmatpush1.msra.mxu0 0.0
    %406 = vmatprep.subr.mxu0 0.0
    %407 = vmatpush1.msra.mxu0 0.0
    %408 = vmatprep.subr.mxu0 0.0
    %409 = vmatpush1.msra.mxu0 0.0
    %410 = vmatprep.subr.mxu0 0.0
    %411 = vmatpush1.msra.mxu0 0.0
    %412 = vmatprep.subr.mxu0 0.0
    %413 = vmatpush1.msra.mxu0 0.0
    %414 = vmatprep.subr.mxu0 0.0
    %415 = vmatpush1.msra.mxu0 0.0
    %416 = vmatprep.subr.mxu0 0.0
    %417 = vmatpush1.msra.mxu0 0.0
    %418 = vmatprep.subr.mxu0 0.0
    %419 = vmatpush1.msra.mxu0 0.0
    %420 = vmatprep.subr.mxu0 0.0
    %421 = vmatpush1.msra.mxu0 0.0
    %422 = vmatprep.subr.mxu0 0.0
    %423 = vmatpush1.msra.mxu0 0.0
    %424 = vmatprep.subr.mxu0 0.0
    %425 = vmatpush1.msra.mxu0 0.0
    %426 = vmatprep.subr.mxu0 0.0
    %427 = vmatpush1.msra.mxu0 0.0
    %428 = vmatprep.subr.mxu0 0.0
    %429 = vmatpush1.msra.mxu0 0.0
    %430 = vmatprep.subr.mxu0 0.0
    %431 = vmatpush1.msra.mxu0 0.0
    %432 = vmatprep.subr.mxu0 0.0
    %433 = vmatpush1.msra.mxu0 0.0
    %434 = vmatprep.subr.mxu0 0.0
    %435 = vmatpush1.msra.mxu0 0.0
    %436 = vmatprep.subr.mxu0 0.0
    %437 = vmatpush1.msra.mxu0 0.0
    %438 = vmatprep.subr.mxu0 0.0
    %439 = vmatpush1.msra.mxu0 0.0
    %440 = vmatprep.subr.mxu0 0.0
    %441 = vmatpush1.msra.mxu0 0.0
    %442 = vmatprep.subr.mxu0 0.0
    %443 = vmatpush1.msra.mxu0 0.0
    %444 = vmatprep.subr.mxu0 0.0
    %445 = vmatpush1.msra.mxu0 0.0
    %446 = vmatprep.subr.mxu0 0.0
    %447 = vmatpush1.msra.mxu0 0.0
    %448 = vmatprep.subr.mxu0 0.0
    %449 = vmatpush1.msra.mxu0 0.0
    %450 = vmatprep.mubr.f32.mxu0 0.0
    %451 = vmatmul.mubr.f32.gmra.mrb[0].mxu0 %v384
    %v452 = vpop.f32.mrb[0].mxu0
    %v453 = vadd.f32 0.0, %v452
    %v454 = vpop.f32.mrb[0].mxu0
    %455 = vdwg.mxu0
    %v457 = vrot.slane %v453, 7
    %v460 = vadd.f32 %v238, %v457
    %v461 = vadd.f32 %v243, %v453
    %v462 = vxor.u32 %v460, 2147483648
    %v463 = vxor.u32 %v461, 2147483648
    %v464 = vmul.f32 %v462, 1.442695
    %v465 = vpow.pop %v464
    %v466 = vmul.f32 %v463, 1.442695
    %v467 = vpow.pop %v466
    %v468 = vadd.f32 %v465, 1.0
    %v469 = vadd.f32 %v467, 1.0
    %v470 = vrcp.pop %v468
    %v471 = vmul.f32 1.0, %v470
    %v472 = vrcp.pop %v469
    %v473 = vmul.f32 1.0, %v472
    %v474 = vtanh.pop %v460
    %v475 = vtanh.pop %v461
    %v478 = vrot.slane %v363, 7
    %v479 = vrot.slane %v364, 7
    %v482 = vmul.f32 %v471, %v478
    %v483 = vmul.f32 %v473, %v479
    %486 = vrot.lane.b32.xlu0 %v474, 64
    %v487 = vpop.permute.xlu0 %486
    %488 = vrot.lane.b32.xlu0 %v475, 64
    %v489 = vpop.permute.xlu0 %488
    %v492 = vmul.f32 %v471, %v487
    %v493 = vmul.f32 %v473, %v489
    %496 = vrot.lane.b32.xlu0 %v492, 32
    %v497 = vpop.permute.xlu0 %496
    %498 = vrot.lane.b32.xlu0 %v493, 32
    %v499 = vpop.permute.xlu0 %498
    %v502 = vadd.f32 %v482, %v497
    %v503 = vadd.f32 %v483, %v499
    %v504 = vtanh.pop %v502
    %v505 = vtanh.pop %v503
    %508 = vrot.lane.b32.xlu0 %v504, 64
    %v509 = vpop.permute.xlu0 %508
    %510 = vrot.lane.b32.xlu0 %v505, 64
    %v511 = vpop.permute.xlu0 %510
    %v514 = vmul.f32 %v471, %v509
    %v515 = vmul.f32 %v473, %v511
    %v518 = vrot.slane %v514, 1
    %v519 = vsel %vm380, %v515, %v518
    %520 = vrot.lane.b32.xlu0 %v519, 32
    %v521 = vpop.permute.xlu0 %520
    %v522 = vsel %vm164, %v521, 0
    %524 = vmatprep.subr.mxu0 0.0
    %525 = vmatpush1.msra.mxu0 %v246
    %526 = vmatprep.subr.mxu0 0.0
    %527 = vmatpush1.msra.mxu0 %v247
    %528 = vmatprep.subr.mxu0 0.0
    %529 = vmatpush1.msra.mxu0 %v248
    %530 = vmatprep.subr.mxu0 0.0
    %531 = vmatpush1.msra.mxu0 %v249
    %532 = vmatprep.subr.mxu0 0.0
    %533 = vmatpush1.msra.mxu0 0.0
    %534 = vmatprep.subr.mxu0 0.0
    %535 = vmatpush1.msra.mxu0 0.0
    %536 = vmatprep.subr.mxu0 0.0
    %537 = vmatpush1.msra.mxu0 0.0
    %538 = vmatprep.subr.mxu0 0.0
    %539 = vmatpush1.msra.mxu0 0.0
    %540 = vmatprep.subr.mxu0 0.0
    %541 = vmatpush1.msra.mxu0 0.0
    %542 = vmatprep.subr.mxu0 0.0
    %543 = vmatpush1.msra.mxu0 0.0
    %544 = vmatprep.subr.mxu0 0.0
    %545 = vmatpush1.msra.mxu0 0.0
    %546 = vmatprep.subr.mxu0 0.0
    %547 = vmatpush1.msra.mxu0 0.0
    %548 = vmatprep.subr.mxu0 0.0
    %549 = vmatpush1.msra.mxu0 0.0
    %550 = vmatprep.subr.mxu0 0.0
    %551 = vmatpush1.msra.mxu0 0.0
    %552 = vmatprep.subr.mxu0 0.0
    %553 = vmatpush1.msra.mxu0 0.0
    %554 = vmatprep.subr.mxu0 0.0
    %555 = vmatpush1.msra.mxu0 0.0
    %556 = vmatprep.subr.mxu0 0.0
    %557 = vmatpush1.msra.mxu0 0.0
    %558 = vmatprep.subr.mxu0 0.0
    %559 = vmatpush1.msra.mxu0 0.0
    %560 = vmatprep.subr.mxu0 0.0
    %561 = vmatpush1.msra.mxu0 0.0
    %562 = vmatprep.subr.mxu0 0.0
    %563 = vmatpush1.msra.mxu0 0.0
    %564 = vmatprep.subr.mxu0 0.0
    %565 = vmatpush1.msra.mxu0 0.0
    %566 = vmatprep.subr.mxu0 0.0
    %567 = vmatpush1.msra.mxu0 0.0
    %568 = vmatprep.subr.mxu0 0.0
    %569 = vmatpush1.msra.mxu0 0.0
    %570 = vmatprep.subr.mxu0 0.0
    %571 = vmatpush1.msra.mxu0 0.0
    %572 = vmatprep.subr.mxu0 0.0
    %573 = vmatpush1.msra.mxu0 0.0
    %574 = vmatprep.subr.mxu0 0.0
    %575 = vmatpush1.msra.mxu0 0.0
    %576 = vmatprep.subr.mxu0 0.0
    %577 = vmatpush1.msra.mxu0 0.0
    %578 = vmatprep.subr.mxu0 0.0
    %579 = vmatpush1.msra.mxu0 0.0
    %580 = vmatprep.subr.mxu0 0.0
    %581 = vmatpush1.msra.mxu0 0.0
    %582 = vmatprep.subr.mxu0 0.0
    %583 = vmatpush1.msra.mxu0 0.0
    %584 = vmatprep.subr.mxu0 0.0
    %585 = vmatpush1.msra.mxu0 0.0
    %586 = vmatprep.subr.mxu0 0.0
    %587 = vmatpush1.msra.mxu0 0.0
    %588 = vmatprep.mubr.f32.mxu0 0.0
    %589 = vmatmul.mubr.f32.gmra.mrb[0].mxu0 %v522
    %v590 = vpop.f32.mrb[0].mxu0
    %v591 = vadd.f32 0.0, %v590
    %v592 = vpop.f32.mrb[0].mxu0
    %593 = vdwg.mxu0
    %v595 = vrot.slane %v591, 6
    %v596 = vrot.slane %v591, 7
    %v599 = vadd.f32 %v238, %v595
    %v600 = vadd.f32 %v243, %v596
    %v601 = vxor.u32 %v599, 2147483648
    %v602 = vxor.u32 %v600, 2147483648
    %v603 = vmul.f32 %v601, 1.442695
    %v604 = vpow.pop %v603
    %v605 = vmul.f32 %v602, 1.442695
    %v606 = vpow.pop %v605
    %v607 = vadd.f32 %v604, 1.0
    %v608 = vadd.f32 %v606, 1.0
    %v609 = vrcp.pop %v607
    %v610 = vmul.f32 1.0, %v609
    %v611 = vrcp.pop %v608
    %v612 = vmul.f32 1.0, %v611
    %v613 = vtanh.pop %v599
    %v614 = vtanh.pop %v600
    %v617 = vrot.slane %v502, 7
    %v618 = vrot.slane %v503, 7
    %v621 = vmul.f32 %v610, %v617
    %v622 = vmul.f32 %v612, %v618
    %625 = vrot.lane.b32.xlu0 %v613, 64
    %v626 = vpop.permute.xlu0 %625
    %627 = vrot.lane.b32.xlu0 %v614, 64
    %v628 = vpop.permute.xlu0 %627
    %v631 = vmul.f32 %v610, %v626
    %v632 = vmul.f32 %v612, %v628
    %635 = vrot.lane.b32.xlu0 %v631, 32
    %v636 = vpop.permute.xlu0 %635
    %637 = vrot.lane.b32.xlu0 %v632, 32
    %v638 = vpop.permute.xlu0 %637
    %v641 = vadd.f32 %v621, %v636
    %v642 = vadd.f32 %v622, %v638
    %v643 = vtanh.pop %v641
    %v644 = vtanh.pop %v642
    %647 = vrot.lane.b32.xlu0 %v643, 64
    %v648 = vpop.permute.xlu0 %647
    %649 = vrot.lane.b32.xlu0 %v644, 64
    %v650 = vpop.permute.xlu0 %649
    %v653 = vmul.f32 %v610, %v648
    %v654 = vmul.f32 %v612, %v650
    %v657 = vrot.slane %v653, 2
    %v658 = vrot.slane %v654, 1
    %v659 = vsel %vm380, %v658, %v657
    %660 = vrot.lane.b32.xlu0 %v659, 32
    %v661 = vpop.permute.xlu0 %660
    %v662 = vsel %vm164, %v661, 0
    %664 = vmatprep.subr.mxu0 0.0
    %665 = vmatpush1.msra.mxu0 %v246
    %666 = vmatprep.subr.mxu0 0.0
    %667 = vmatpush1.msra.mxu0 %v247
    %668 = vmatprep.subr.mxu0 0.0
    %669 = vmatpush1.msra.mxu0 %v248
    %670 = vmatprep.subr.mxu0 0.0
    %671 = vmatpush1.msra.mxu0 %v249
    %672 = vmatprep.subr.mxu0 0.0
    %673 = vmatpush1.msra.mxu0 0.0
    %674 = vmatprep.subr.mxu0 0.0
    %675 = vmatpush1.msra.mxu0 0.0
    %676 = vmatprep.subr.mxu0 0.0
    %677 = vmatpush1.msra.mxu0 0.0
    %678 = vmatprep.subr.mxu0 0.0
    %679 = vmatpush1.msra.mxu0 0.0
    %680 = vmatprep.subr.mxu0 0.0
    %681 = vmatpush1.msra.mxu0 0.0
    %682 = vmatprep.subr.mxu0 0.0
    %683 = vmatpush1.msra.mxu0 0.0
    %684 = vmatprep.subr.mxu0 0.0
    %685 = vmatpush1.msra.mxu0 0.0
    %686 = vmatprep.subr.mxu0 0.0
    %687 = vmatpush1.msra.mxu0 0.0
    %688 = vmatprep.subr.mxu0 0.0
    %689 = vmatpush1.msra.mxu0 0.0
    %690 = vmatprep.subr.mxu0 0.0
    %691 = vmatpush1.msra.mxu0 0.0
    %692 = vmatprep.subr.mxu0 0.0
    %693 = vmatpush1.msra.mxu0 0.0
    %694 = vmatprep.subr.mxu0 0.0
    %695 = vmatpush1.msra.mxu0 0.0
    %696 = vmatprep.subr.mxu0 0.0
    %697 = vmatpush1.msra.mxu0 0.0
    %698 = vmatprep.subr.mxu0 0.0
    %699 = vmatpush1.msra.mxu0 0.0
    %700 = vmatprep.subr.mxu0 0.0
    %701 = vmatpush1.msra.mxu0 0.0
    %702 = vmatprep.subr.mxu0 0.0
    %703 = vmatpush1.msra.mxu0 0.0
    %704 = vmatprep.subr.mxu0 0.0
    %705 = vmatpush1.msra.mxu0 0.0
    %706 = vmatprep.subr.mxu0 0.0
    %707 = vmatpush1.msra.mxu0 0.0
    %708 = vmatprep.subr.mxu0 0.0
    %709 = vmatpush1.msra.mxu0 0.0
    %710 = vmatprep.subr.mxu0 0.0
    %711 = vmatpush1.msra.mxu0 0.0
    %712 = vmatprep.subr.mxu0 0.0
    %713 = vmatpush1.msra.mxu0 0.0
    %714 = vmatprep.subr.mxu0 0.0
    %715 = vmatpush1.msra.mxu0 0.0
    %716 = vmatprep.subr.mxu0 0.0
    %717 = vmatpush1.msra.mxu0 0.0
    %718 = vmatprep.subr.mxu0 0.0
    %719 = vmatpush1.msra.mxu0 0.0
    %720 = vmatprep.subr.mxu0 0.0
    %721 = vmatpush1.msra.mxu0 0.0
    %722 = vmatprep.subr.mxu0 0.0
    %723 = vmatpush1.msra.mxu0 0.0
    %724 = vmatprep.subr.mxu0 0.0
    %725 = vmatpush1.msra.mxu0 0.0
    %726 = vmatprep.subr.mxu0 0.0
    %727 = vmatpush1.msra.mxu0 0.0
    %728 = vmatprep.mubr.f32.mxu0 0.0
    %729 = vmatmul.mubr.f32.gmra.mrb[0].mxu0 %v662
    %v730 = vpop.f32.mrb[0].mxu0
    %v731 = vadd.f32 0.0, %v730
    %v732 = vpop.f32.mrb[0].mxu0
    %733 = vdwg.mxu0
    %v735 = vrot.slane %v731, 5
    %v736 = vrot.slane %v731, 6
    %v739 = vadd.f32 %v238, %v735
    %v740 = vadd.f32 %v243, %v736
    %v741 = vxor.u32 %v739, 2147483648
    %v742 = vxor.u32 %v740, 2147483648
    %v743 = vmul.f32 %v741, 1.442695
    %v744 = vpow.pop %v743
    %v745 = vmul.f32 %v742, 1.442695
    %v746 = vpow.pop %v745
    %v747 = vadd.f32 %v744, 1.0
    %v748 = vadd.f32 %v746, 1.0
    %v749 = vrcp.pop %v747
    %v750 = vmul.f32 1.0, %v749
    %v751 = vrcp.pop %v748
    %v752 = vmul.f32 1.0, %v751
    %v753 = vtanh.pop %v739
    %v754 = vtanh.pop %v740
    %v757 = vrot.slane %v641, 7
    %v758 = vrot.slane %v642, 7
    %v761 = vmul.f32 %v750, %v757
    %v762 = vmul.f32 %v752, %v758
    %765 = vrot.lane.b32.xlu0 %v753, 64
    %v766 = vpop.permute.xlu0 %765
    %767 = vrot.lane.b32.xlu0 %v754, 64
    %v768 = vpop.permute.xlu0 %767
    %v771 = vmul.f32 %v750, %v766
    %v772 = vmul.f32 %v752, %v768
    %775 = vrot.lane.b32.xlu0 %v771, 32
    %v776 = vpop.permute.xlu0 %775
    %777 = vrot.lane.b32.xlu0 %v772, 32
    %v778 = vpop.permute.xlu0 %777
    %v781 = vadd.f32 %v761, %v776
    %v782 = vadd.f32 %v762, %v778
    %v783 = vtanh.pop %v781
    %v784 = vtanh.pop %v782
    %787 = vrot.lane.b32.xlu0 %v783, 64
    %v788 = vpop.permute.xlu0 %787
    %789 = vrot.lane.b32.xlu0 %v784, 64
    %v790 = vpop.permute.xlu0 %789
    %v793 = vmul.f32 %v750, %v788
    %v794 = vmul.f32 %v752, %v790
    %v797 = vrot.slane %v793, 3
    %v798 = vrot.slane %v794, 2
    %v799 = vsel %vm380, %v798, %v797
    %800 = vrot.lane.b32.xlu0 %v799, 32
    %v801 = vpop.permute.xlu0 %800
    %v802 = vsel %vm164, %v801, 0
    %804 = vmatprep.subr.mxu0 0.0
    %805 = vmatpush1.msra.mxu0 %v246
    %806 = vmatprep.subr.mxu0 0.0
    %807 = vmatpush1.msra.mxu0 %v247
    %808 = vmatprep.subr.mxu0 0.0
    %809 = vmatpush1.msra.mxu0 %v248
    %810 = vmatprep.subr.mxu0 0.0
    %811 = vmatpush1.msra.mxu0 %v249
    %812 = vmatprep.subr.mxu0 0.0
    %813 = vmatpush1.msra.mxu0 0.0
    %814 = vmatprep.subr.mxu0 0.0
    %815 = vmatpush1.msra.mxu0 0.0
    %816 = vmatprep.subr.mxu0 0.0
    %817 = vmatpush1.msra.mxu0 0.0
    %818 = vmatprep.subr.mxu0 0.0
    %819 = vmatpush1.msra.mxu0 0.0
    %820 = vmatprep.subr.mxu0 0.0
    %821 = vmatpush1.msra.mxu0 0.0
    %822 = vmatprep.subr.mxu0 0.0
    %823 = vmatpush1.msra.mxu0 0.0
    %824 = vmatprep.subr.mxu0 0.0
    %825 = vmatpush1.msra.mxu0 0.0
    %826 = vmatprep.subr.mxu0 0.0
    %827 = vmatpush1.msra.mxu0 0.0
    %828 = vmatprep.subr.mxu0 0.0
    %829 = vmatpush1.msra.mxu0 0.0
    %830 = vmatprep.subr.mxu0 0.0
    %831 = vmatpush1.msra.mxu0 0.0
    %832 = vmatprep.subr.mxu0 0.0
    %833 = vmatpush1.msra.mxu0 0.0
    %834 = vmatprep.subr.mxu0 0.0
    %835 = vmatpush1.msra.mxu0 0.0
    %836 = vmatprep.subr.mxu0 0.0
    %837 = vmatpush1.msra.mxu0 0.0
    %838 = vmatprep.subr.mxu0 0.0
    %839 = vmatpush1.msra.mxu0 0.0
    %840 = vmatprep.subr.mxu0 0.0
    %841 = vmatpush1.msra.mxu0 0.0
    %842 = vmatprep.subr.mxu0 0.0
    %843 = vmatpush1.msra.mxu0 0.0
    %844 = vmatprep.subr.mxu0 0.0
    %845 = vmatpush1.msra.mxu0 0.0
    %846 = vmatprep.subr.mxu0 0.0
    %847 = vmatpush1.msra.mxu0 0.0
    %848 = vmatprep.subr.mxu0 0.0
    %849 = vmatpush1.msra.mxu0 0.0
    %850 = vmatprep.subr.mxu0 0.0
    %851 = vmatpush1.msra.mxu0 0.0
    %852 = vmatprep.subr.mxu0 0.0
    %853 = vmatpush1.msra.mxu0 0.0
    %854 = vmatprep.subr.mxu0 0.0
    %855 = vmatpush1.msra.mxu0 0.0
    %856 = vmatprep.subr.mxu0 0.0
    %857 = vmatpush1.msra.mxu0 0.0
    %858 = vmatprep.subr.mxu0 0.0
    %859 = vmatpush1.msra.mxu0 0.0
    %860 = vmatprep.subr.mxu0 0.0
    %861 = vmatpush1.msra.mxu0 0.0
    %862 = vmatprep.subr.mxu0 0.0
    %863 = vmatpush1.msra.mxu0 0.0
    %864 = vmatprep.subr.mxu0 0.0
    %865 = vmatpush1.msra.mxu0 0.0
    %866 = vmatprep.subr.mxu0 0.0
    %867 = vmatpush1.msra.mxu0 0.0
    %868 = vmatprep.mubr.f32.mxu0 0.0
    %869 = vmatmul.mubr.f32.gmra.mrb[0].mxu0 %v802
    %v870 = vpop.f32.mrb[0].mxu0
    %v871 = vadd.f32 0.0, %v870
    %v872 = vpop.f32.mrb[0].mxu0
    %873 = vdwg.mxu0
    %v875 = vrot.slane %v871, 4
    %v876 = vrot.slane %v871, 5
    %v879 = vadd.f32 %v238, %v875
    %v880 = vadd.f32 %v243, %v876
    %v881 = vxor.u32 %v879, 2147483648
    %v882 = vxor.u32 %v880, 2147483648
    %v883 = vmul.f32 %v881, 1.442695
    %v884 = vpow.pop %v883
    %v885 = vmul.f32 %v882, 1.442695
    %v886 = vpow.pop %v885
    %v887 = vadd.f32 %v884, 1.0
    %v888 = vadd.f32 %v886, 1.0
    %v889 = vrcp.pop %v887
    %v890 = vmul.f32 1.0, %v889
    %v891 = vrcp.pop %v888
    %v892 = vmul.f32 1.0, %v891
    %v893 = vtanh.pop %v879
    %v894 = vtanh.pop %v880
    %v897 = vrot.slane %v781, 7
    %v898 = vrot.slane %v782, 7
    %v901 = vmul.f32 %v890, %v897
    %v902 = vmul.f32 %v892, %v898
    %905 = vrot.lane.b32.xlu0 %v893, 64
    %v906 = vpop.permute.xlu0 %905
    %907 = vrot.lane.b32.xlu0 %v894, 64
    %v908 = vpop.permute.xlu0 %907
    %v911 = vmul.f32 %v890, %v906
    %v912 = vmul.f32 %v892, %v908
    %915 = vrot.lane.b32.xlu0 %v911, 32
    %v916 = vpop.permute.xlu0 %915
    %917 = vrot.lane.b32.xlu0 %v912, 32
    %v918 = vpop.permute.xlu0 %917
    %v921 = vadd.f32 %v901, %v916
    %v922 = vadd.f32 %v902, %v918
    %v923 = vtanh.pop %v921
    %v924 = vtanh.pop %v922
    %927 = vrot.lane.b32.xlu0 %v923, 64
    %v928 = vpop.permute.xlu0 %927
    %929 = vrot.lane.b32.xlu0 %v924, 64
    %v930 = vpop.permute.xlu0 %929
    %v933 = vmul.f32 %v890, %v928
    %v934 = vmul.f32 %v892, %v930
    %v937 = vrot.slane %v933, 4
    %v938 = vrot.slane %v934, 3
    %v939 = vsel %vm380, %v938, %v937
    %940 = vrot.lane.b32.xlu0 %v939, 32
    %v941 = vpop.permute.xlu0 %940
    %v942 = vsel %vm164, %v941, 0
    %944 = vmatprep.subr.mxu0 0.0
    %945 = vmatpush1.msra.mxu0 %v246
    %946 = vmatprep.subr.mxu0 0.0
    %947 = vmatpush1.msra.mxu0 %v247
    %948 = vmatprep.subr.mxu0 0.0
    %949 = vmatpush1.msra.mxu0 %v248
    %950 = vmatprep.subr.mxu0 0.0
    %951 = vmatpush1.msra.mxu0 %v249
    %952 = vmatprep.subr.mxu0 0.0
    %953 = vmatpush1.msra.mxu0 0.0
    %954 = vmatprep.subr.mxu0 0.0
    %955 = vmatpush1.msra.mxu0 0.0
    %956 = vmatprep.subr.mxu0 0.0
    %957 = vmatpush1.msra.mxu0 0.0
    %958 = vmatprep.subr.mxu0 0.0
    %959 = vmatpush1.msra.mxu0 0.0
    %960 = vmatprep.subr.mxu0 0.0
    %961 = vmatpush1.msra.mxu0 0.0
    %962 = vmatprep.subr.mxu0 0.0
    %963 = vmatpush1.msra.mxu0 0.0
    %964 = vmatprep.subr.mxu0 0.0
    %965 = vmatpush1.msra.mxu0 0.0
    %966 = vmatprep.subr.mxu0 0.0
    %967 = vmatpush1.msra.mxu0 0.0
    %968 = vmatprep.subr.mxu0 0.0
    %969 = vmatpush1.msra.mxu0 0.0
    %970 = vmatprep.subr.mxu0 0.0
    %971 = vmatpush1.msra.mxu0 0.0
    %972 = vmatprep.subr.mxu0 0.0
    %973 = vmatpush1.msra.mxu0 0.0
    %974 = vmatprep.subr.mxu0 0.0
    %975 = vmatpush1.msra.mxu0 0.0
    %976 = vmatprep.subr.mxu0 0.0
    %977 = vmatpush1.msra.mxu0 0.0
    %978 = vmatprep.subr.mxu0 0.0
    %979 = vmatpush1.msra.mxu0 0.0
    %980 = vmatprep.subr.mxu0 0.0
    %981 = vmatpush1.msra.mxu0 0.0
    %982 = vmatprep.subr.mxu0 0.0
    %983 = vmatpush1.msra.mxu0 0.0
    %984 = vmatprep.subr.mxu0 0.0
    %985 = vmatpush1.msra.mxu0 0.0
    %986 = vmatprep.subr.mxu0 0.0
    %987 = vmatpush1.msra.mxu0 0.0
    %988 = vmatprep.subr.mxu0 0.0
    %989 = vmatpush1.msra.mxu0 0.0
    %990 = vmatprep.subr.mxu0 0.0
    %991 = vmatpush1.msra.mxu0 0.0
    %992 = vmatprep.subr.mxu0 0.0
    %993 = vmatpush1.msra.mxu0 0.0
    %994 = vmatprep.subr.mxu0 0.0
    %995 = vmatpush1.msra.mxu0 0.0
    %996 = vmatprep.subr.mxu0 0.0
    %997 = vmatpush1.msra.mxu0 0.0
    %998 = vmatprep.subr.mxu0 0.0
    %999 = vmatpush1.msra.mxu0 0.0
    %1000 = vmatprep.subr.mxu0 0.0
    %1001 = vmatpush1.msra.mxu0 0.0
    %1002 = vmatprep.subr.mxu0 0.0
    %1003 = vmatpush1.msra.mxu0 0.0
    %1004 = vmatprep.subr.mxu0 0.0
    %1005 = vmatpush1.msra.mxu0 0.0
    %1006 = vmatprep.subr.mxu0 0.0
    %1007 = vmatpush1.msra.mxu0 0.0
    %1008 = vmatprep.mubr.f32.mxu0 0.0
    %1009 = vmatmul.mubr.f32.gmra.mrb[0].mxu0 %v942
    %v1010 = vpop.f32.mrb[0].mxu0
    %v1011 = vadd.f32 0.0, %v1010
    %v1012 = vpop.f32.mrb[0].mxu0
    %1013 = vdwg.mxu0
    %v1015 = vrot.slane %v1011, 3
    %v1016 = vrot.slane %v1011, 4
    %v1019 = vadd.f32 %v238, %v1015
    %v1020 = vadd.f32 %v243, %v1016
    %v1021 = vxor.u32 %v1019, 2147483648
    %v1022 = vxor.u32 %v1020, 2147483648
    %v1023 = vmul.f32 %v1021, 1.442695
    %v1024 = vpow.pop %v1023
    %v1025 = vmul.f32 %v1022, 1.442695
    %v1026 = vpow.pop %v1025
    %v1027 = vadd.f32 %v1024, 1.0
    %v1028 = vadd.f32 %v1026, 1.0
    %v1029 = vrcp.pop %v1027
    %v1030 = vmul.f32 1.0, %v1029
    %v1031 = vrcp.pop %v1028
    %v1032 = vmul.f32 1.0, %v1031
    %v1033 = vtanh.pop %v1019
    %v1034 = vtanh.pop %v1020
    %v1037 = vrot.slane %v921, 7
    %v1038 = vrot.slane %v922, 7
    %v1041 = vmul.f32 %v1030, %v1037
    %v1042 = vmul.f32 %v1032, %v1038
    %1045 = vrot.lane.b32.xlu0 %v1033, 64
    %v1046 = vpop.permute.xlu0 %1045
    %1047 = vrot.lane.b32.xlu0 %v1034, 64
    %v1048 = vpop.permute.xlu0 %1047
    %v1051 = vmul.f32 %v1030, %v1046
    %v1052 = vmul.f32 %v1032, %v1048
    %1055 = vrot.lane.b32.xlu0 %v1051, 32
    %v1056 = vpop.permute.xlu0 %1055
    %1057 = vrot.lane.b32.xlu0 %v1052, 32
    %v1058 = vpop.permute.xlu0 %1057
    %v1061 = vadd.f32 %v1041, %v1056
    %v1062 = vadd.f32 %v1042, %v1058
    %v1063 = vtanh.pop %v1061
    %v1064 = vtanh.pop %v1062
    %1067 = vrot.lane.b32.xlu0 %v1063, 64
    %v1068 = vpop.permute.xlu0 %1067
    %1069 = vrot.lane.b32.xlu0 %v1064, 64
    %v1070 = vpop.permute.xlu0 %1069
    %v1073 = vmul.f32 %v1030, %v1068
    %v1074 = vmul.f32 %v1032, %v1070
    %v1077 = vrot.slane %v1073, 5
    %v1078 = vrot.slane %v1074, 4
    %v1079 = vsel %vm380, %v1078, %v1077
    %1080 = vrot.lane.b32.xlu0 %v1079, 32
    %v1081 = vpop.permute.xlu0 %1080
    %v1082 = vsel %vm164, %v1081, 0
    %1084 = vmatprep.subr.mxu0 0.0
    %1085 = vmatpush1.msra.mxu0 %v246
    %1086 = vmatprep.subr.mxu0 0.0
    %1087 = vmatpush1.msra.mxu0 %v247
    %1088 = vmatprep.subr.mxu0 0.0
    %1089 = vmatpush1.msra.mxu0 %v248
    %1090 = vmatprep.subr.mxu0 0.0
    %1091 = vmatpush1.msra.mxu0 %v249
    %1092 = vmatprep.subr.mxu0 0.0
    %1093 = vmatpush1.msra.mxu0 0.0
    %1094 = vmatprep.subr.mxu0 0.0
    %1095 = vmatpush1.msra.mxu0 0.0
    %1096 = vmatprep.subr.mxu0 0.0
    %1097 = vmatpush1.msra.mxu0 0.0
    %1098 = vmatprep.subr.mxu0 0.0
    %1099 = vmatpush1.msra.mxu0 0.0
    %1100 = vmatprep.subr.mxu0 0.0
    %1101 = vmatpush1.msra.mxu0 0.0
    %1102 = vmatprep.subr.mxu0 0.0
    %1103 = vmatpush1.msra.mxu0 0.0
    %1104 = vmatprep.subr.mxu0 0.0
    %1105 = vmatpush1.msra.mxu0 0.0
    %1106 = vmatprep.subr.mxu0 0.0
    %1107 = vmatpush1.msra.mxu0 0.0
    %1108 = vmatprep.subr.mxu0 0.0
    %1109 = vmatpush1.msra.mxu0 0.0
    %1110 = vmatprep.subr.mxu0 0.0
    %1111 = vmatpush1.msra.mxu0 0.0
    %1112 = vmatprep.subr.mxu0 0.0
    %1113 = vmatpush1.msra.mxu0 0.0
    %1114 = vmatprep.subr.mxu0 0.0
    %1115 = vmatpush1.msra.mxu0 0.0
    %1116 = vmatprep.subr.mxu0 0.0
    %1117 = vmatpush1.msra.mxu0 0.0
    %1118 = vmatprep.subr.mxu0 0.0
    %1119 = vmatpush1.msra.mxu0 0.0
    %1120 = vmatprep.subr.mxu0 0.0
    %1121 = vmatpush1.msra.mxu0 0.0
    %1122 = vmatprep.subr.mxu0 0.0
    %1123 = vmatpush1.msra.mxu0 0.0
    %1124 = vmatprep.subr.mxu0 0.0
    %1125 = vmatpush1.msra.mxu0 0.0
    %1126 = vmatprep.subr.mxu0 0.0
    %1127 = vmatpush1.msra.mxu0 0.0
    %1128 = vmatprep.subr.mxu0 0.0
    %1129 = vmatpush1.msra.mxu0 0.0
    %1130 = vmatprep.subr.mxu0 0.0
    %1131 = vmatpush1.msra.mxu0 0.0
    %1132 = vmatprep.subr.mxu0 0.0
    %1133 = vmatpush1.msra.mxu0 0.0
    %1134 = vmatprep.subr.mxu0 0.0
    %1135 = vmatpush1.msra.mxu0 0.0
    %1136 = vmatprep.subr.mxu0 0.0
    %1137 = vmatpush1.msra.mxu0 0.0
    %1138 = vmatprep.subr.mxu0 0.0
    %1139 = vmatpush1.msra.mxu0 0.0
    %1140 = vmatprep.subr.mxu0 0.0
    %1141 = vmatpush1.msra.mxu0 0.0
    %1142 = vmatprep.subr.mxu0 0.0
    %1143 = vmatpush1.msra.mxu0 0.0
    %1144 = vmatprep.subr.mxu0 0.0
    %1145 = vmatpush1.msra.mxu0 0.0
    %1146 = vmatprep.subr.mxu0 0.0
    %1147 = vmatpush1.msra.mxu0 0.0
    %1148 = vmatprep.mubr.f32.mxu0 0.0
    %1149 = vmatmul.mubr.f32.gmra.mrb[0].mxu0 %v1082
    %v1150 = vpop.f32.mrb[0].mxu0
    %v1151 = vadd.f32 0.0, %v1150
    %v1152 = vpop.f32.mrb[0].mxu0
    %1153 = vdwg.mxu0
    %v1155 = vrot.slane %v1151, 2
    %v1156 = vrot.slane %v1151, 3
    %v1159 = vadd.f32 %v238, %v1155
    %v1160 = vadd.f32 %v243, %v1156
    %v1161 = vxor.u32 %v1159, 2147483648
    %v1162 = vxor.u32 %v1160, 2147483648
    %v1163 = vmul.f32 %v1161, 1.442695
    %v1164 = vpow.pop %v1163
    %v1165 = vmul.f32 %v1162, 1.442695
    %v1166 = vpow.pop %v1165
    %v1167 = vadd.f32 %v1164, 1.0
    %v1168 = vadd.f32 %v1166, 1.0
    %v1169 = vrcp.pop %v1167
    %v1170 = vmul.f32 1.0, %v1169
    %v1171 = vrcp.pop %v1168
    %v1172 = vmul.f32 1.0, %v1171
    %v1173 = vtanh.pop %v1159
    %v1174 = vtanh.pop %v1160
    %v1177 = vrot.slane %v1061, 7
    %v1178 = vrot.slane %v1062, 7
    %v1181 = vmul.f32 %v1170, %v1177
    %v1182 = vmul.f32 %v1172, %v1178
    %1185 = vrot.lane.b32.xlu0 %v1173, 64
    %v1186 = vpop.permute.xlu0 %1185
    %1187 = vrot.lane.b32.xlu0 %v1174, 64
    %v1188 = vpop.permute.xlu0 %1187
    %v1191 = vmul.f32 %v1170, %v1186
    %v1192 = vmul.f32 %v1172, %v1188
    %1195 = vrot.lane.b32.xlu0 %v1191, 32
    %v1196 = vpop.permute.xlu0 %1195
    %1197 = vrot.lane.b32.xlu0 %v1192, 32
    %v1198 = vpop.permute.xlu0 %1197
    %v1201 = vadd.f32 %v1181, %v1196
    %v1202 = vadd.f32 %v1182, %v1198
    %v1203 = vtanh.pop %v1201
    %v1204 = vtanh.pop %v1202
    %1207 = vrot.lane.b32.xlu0 %v1203, 64
    %v1208 = vpop.permute.xlu0 %1207
    %1209 = vrot.lane.b32.xlu0 %v1204, 64
    %v1210 = vpop.permute.xlu0 %1209
    %v1213 = vmul.f32 %v1170, %v1208
    %v1214 = vmul.f32 %v1172, %v1210
    %v1217 = vrot.slane %v1213, 6
    %v1218 = vrot.slane %v1214, 5
    %v1219 = vsel %vm380, %v1218, %v1217
    %1220 = vrot.lane.b32.xlu0 %v1219, 32
    %v1221 = vpop.permute.xlu0 %1220
    %v1222 = vsel %vm164, %v1221, 0
    %1224 = vmatprep.subr.mxu0 0.0
    %1225 = vmatpush1.msra.mxu0 %v246
    %1226 = vmatprep.subr.mxu0 0.0
    %1227 = vmatpush1.msra.mxu0 %v247
    %1228 = vmatprep.subr.mxu0 0.0
    %1229 = vmatpush1.msra.mxu0 %v248
    %1230 = vmatprep.subr.mxu0 0.0
    %1231 = vmatpush1.msra.mxu0 %v249
    %1232 = vmatprep.subr.mxu0 0.0
    %1233 = vmatpush1.msra.mxu0 0.0
    %1234 = vmatprep.subr.mxu0 0.0
    %1235 = vmatpush1.msra.mxu0 0.0
    %1236 = vmatprep.subr.mxu0 0.0
    %1237 = vmatpush1.msra.mxu0 0.0
    %1238 = vmatprep.subr.mxu0 0.0
    %1239 = vmatpush1.msra.mxu0 0.0
    %1240 = vmatprep.subr.mxu0 0.0
    %1241 = vmatpush1.msra.mxu0 0.0
    %1242 = vmatprep.subr.mxu0 0.0
    %1243 = vmatpush1.msra.mxu0 0.0
    %1244 = vmatprep.subr.mxu0 0.0
    %1245 = vmatpush1.msra.mxu0 0.0
    %1246 = vmatprep.subr.mxu0 0.0
    %1247 = vmatpush1.msra.mxu0 0.0
    %1248 = vmatprep.subr.mxu0 0.0
    %1249 = vmatpush1.msra.mxu0 0.0
    %1250 = vmatprep.subr.mxu0 0.0
    %1251 = vmatpush1.msra.mxu0 0.0
    %1252 = vmatprep.subr.mxu0 0.0
    %1253 = vmatpush1.msra.mxu0 0.0
    %1254 = vmatprep.subr.mxu0 0.0
    %1255 = vmatpush1.msra.mxu0 0.0
    %1256 = vmatprep.subr.mxu0 0.0
    %1257 = vmatpush1.msra.mxu0 0.0
    %1258 = vmatprep.subr.mxu0 0.0
    %1259 = vmatpush1.msra.mxu0 0.0
    %1260 = vmatprep.subr.mxu0 0.0
    %1261 = vmatpush1.msra.mxu0 0.0
    %1262 = vmatprep.subr.mxu0 0.0
    %1263 = vmatpush1.msra.mxu0 0.0
    %1264 = vmatprep.subr.mxu0 0.0
    %1265 = vmatpush1.msra.mxu0 0.0
    %1266 = vmatprep.subr.mxu0 0.0
    %1267 = vmatpush1.msra.mxu0 0.0
    %1268 = vmatprep.subr.mxu0 0.0
    %1269 = vmatpush1.msra.mxu0 0.0
    %1270 = vmatprep.subr.mxu0 0.0
    %1271 = vmatpush1.msra.mxu0 0.0
    %1272 = vmatprep.subr.mxu0 0.0
    %1273 = vmatpush1.msra.mxu0 0.0
    %1274 = vmatprep.subr.mxu0 0.0
    %1275 = vmatpush1.msra.mxu0 0.0
    %1276 = vmatprep.subr.mxu0 0.0
    %1277 = vmatpush1.msra.mxu0 0.0
    %1278 = vmatprep.subr.mxu0 0.0
    %1279 = vmatpush1.msra.mxu0 0.0
    %1280 = vmatprep.subr.mxu0 0.0
    %1281 = vmatpush1.msra.mxu0 0.0
    %1282 = vmatprep.subr.mxu0 0.0
    %1283 = vmatpush1.msra.mxu0 0.0
    %1284 = vmatprep.subr.mxu0 0.0
    %1285 = vmatpush1.msra.mxu0 0.0
    %1286 = vmatprep.subr.mxu0 0.0
    %1287 = vmatpush1.msra.mxu0 0.0
    %1288 = vmatprep.mubr.f32.mxu0 0.0
    %1289 = vmatmul.mubr.f32.gmra.mrb[0].mxu0 %v1222
    %v1290 = vpop.f32.mrb[0].mxu0
    %v1291 = vadd.f32 0.0, %v1290
    %v1292 = vpop.f32.mrb[0].mxu0
    %1293 = vdwg.mxu0
    %v1295 = vrot.slane %v1291, 1
    %v1296 = vrot.slane %v1291, 2
    %v1299 = vadd.f32 %v238, %v1295
    %v1300 = vadd.f32 %v243, %v1296
    %v1301 = vxor.u32 %v1299, 2147483648
    %v1302 = vxor.u32 %v1300, 2147483648
    %v1303 = vmul.f32 %v1301, 1.442695
    %v1304 = vpow.pop %v1303
    %v1305 = vmul.f32 %v1302, 1.442695
    %v1306 = vpow.pop %v1305
    %v1307 = vadd.f32 %v1304, 1.0
    %v1308 = vadd.f32 %v1306, 1.0
    %v1309 = vrcp.pop %v1307
    %v1310 = vmul.f32 1.0, %v1309
    %v1311 = vrcp.pop %v1308
    %v1312 = vmul.f32 1.0, %v1311
    %v1313 = vtanh.pop %v1299
    %v1314 = vtanh.pop %v1300
    %v1317 = vrot.slane %v1201, 7
    %v1318 = vrot.slane %v1202, 7
    %v1321 = vmul.f32 %v1310, %v1317
    %v1322 = vmul.f32 %v1312, %v1318
    %1325 = vrot.lane.b32.xlu0 %v1313, 64
    %v1326 = vpop.permute.xlu0 %1325
    %1327 = vrot.lane.b32.xlu0 %v1314, 64
    %v1328 = vpop.permute.xlu0 %1327
    %v1331 = vmul.f32 %v1310, %v1326
    %v1332 = vmul.f32 %v1312, %v1328
    %1335 = vrot.lane.b32.xlu0 %v1331, 32
    %v1336 = vpop.permute.xlu0 %1335
    %1337 = vrot.lane.b32.xlu0 %v1332, 32
    %v1338 = vpop.permute.xlu0 %1337
    %v1341 = vadd.f32 %v1321, %v1336
    %v1342 = vadd.f32 %v1322, %v1338
    %v1343 = vtanh.pop %v1341
    %v1344 = vtanh.pop %v1342
    %1347 = vrot.lane.b32.xlu0 %v1343, 64
    %v1348 = vpop.permute.xlu0 %1347
    %1349 = vrot.lane.b32.xlu0 %v1344, 64
    %v1350 = vpop.permute.xlu0 %1349
    %v1353 = vmul.f32 %v1310, %v1348
    %v1354 = vmul.f32 %v1312, %v1350
    %vm1355 = vcmask 1040384
    %v1356 = vsel %vm1355, %v375, %v514
    %v1357 = vsel %vm1355, %v376, %v515
    %v1358 = vsel %vm74, %v1356, %v653
    %v1359 = vsel %vm74, %v1357, %v654
    %vm1360 = vcmask 1042432
    %v1361 = vsel %vm1360, %v1358, %v793
    %v1362 = vsel %vm1360, %v1359, %v794
    %vm1363 = vcmask 1043456
    %v1364 = vsel %vm1363, %v1361, %v933
    %v1365 = vsel %vm1363, %v1362, %v934
    %vm1366 = vcmask 1044480
    %v1367 = vsel %vm1366, %v1364, %v1073
    %v1368 = vsel %vm1366, %v1365, %v1074
    %vm1369 = vcmask 1045504
    %v1370 = vsel %vm1369, %v1367, %v1213
    %v1371 = vsel %vm1369, %v1368, %v1214
    %vm1372 = vcmask 1046528
    %v1373 = vsel %vm1372, %v1370, %v1353
    %v1374 = vsel %vm1372, %v1371, %v1354
    %v1375 = vld [vmem:[%s9] sm:$0xff]
    %v1376 = vld [vmem:[%s9 + $0x8] sm:$0xff]
    %v1377 = vld [vmem:[%s9 + $0x10] sm:$0xff]
    %v1378 = vld [vmem:[%s9 + $0x18] sm:$0xff]
    %v1379 = vld [vmem:[%s10] sm:$0x1]
    %v1381 = vlaneseq
    %v1382 = vshrl.u32 %v1381, 7
    %v1383 = vsub.s32 0, %v1382
    %v1384 = vrot.slane %v1379, %v1383
    %1388 = vrot.lane.b32.xlu0 %v1373, 32
    %v1389 = vpop.permute.xlu0 %1388
    %1390 = vrot.lane.b32.xlu0 %v1374, 32
    %v1391 = vpop.permute.xlu0 %1390
    %v1392 = vsel %vm164, %v1389, 0
    %v1394 = vsel %vm164, %v1391, 0
    %1396 = vmatprep.subr.mxu0 0.0
    %1397 = vmatpush1.msra.mxu0 %v1375
    %1398 = vmatprep.subr.mxu0 0.0
    %1399 = vmatpush1.msra.mxu0 %v1376
    %1400 = vmatprep.subr.mxu0 0.0
    %1401 = vmatpush1.msra.mxu0 %v1377
    %1402 = vmatprep.subr.mxu0 0.0
    %1403 = vmatpush1.msra.mxu0 %v1378
    %1404 = vmatprep.subr.mxu0 0.0
    %1405 = vmatpush1.msra.mxu0 0.0
    %1406 = vmatprep.subr.mxu0 0.0
    %1407 = vmatpush1.msra.mxu0 0.0
    %1408 = vmatprep.subr.mxu0 0.0
    %1409 = vmatpush1.msra.mxu0 0.0
    %1410 = vmatprep.subr.mxu0 0.0
    %1411 = vmatpush1.msra.mxu0 0.0
    %1412 = vmatprep.subr.mxu0 0.0
    %1413 = vmatpush1.msra.mxu0 0.0
    %1414 = vmatprep.subr.mxu0 0.0
    %1415 = vmatpush1.msra.mxu0 0.0
    %1416 = vmatprep.subr.mxu0 0.0
    %1417 = vmatpush1.msra.mxu0 0.0
    %1418 = vmatprep.subr.mxu0 0.0
    %1419 = vmatpush1.msra.mxu0 0.0
    %1420 = vmatprep.subr.mxu0 0.0
    %1421 = vmatpush1.msra.mxu0 0.0
    %1422 = vmatprep.subr.mxu0 0.0
    %1423 = vmatpush1.msra.mxu0 0.0
    %1424 = vmatprep.subr.mxu0 0.0
    %1425 = vmatpush1.msra.mxu0 0.0
    %1426 = vmatprep.subr.mxu0 0.0
    %1427 = vmatpush1.msra.mxu0 0.0
    %1428 = vmatprep.subr.mxu0 0.0
    %1429 = vmatpush1.msra.mxu0 0.0
    %1430 = vmatprep.subr.mxu0 0.0
    %1431 = vmatpush1.msra.mxu0 0.0
    %1432 = vmatprep.subr.mxu0 0.0
    %1433 = vmatpush1.msra.mxu0 0.0
    %1434 = vmatprep.subr.mxu0 0.0
    %1435 = vmatpush1.msra.mxu0 0.0
    %1436 = vmatprep.subr.mxu0 0.0
    %1437 = vmatpush1.msra.mxu0 0.0
    %1438 = vmatprep.subr.mxu0 0.0
    %1439 = vmatpush1.msra.mxu0 0.0
    %1440 = vmatprep.subr.mxu0 0.0
    %1441 = vmatpush1.msra.mxu0 0.0
    %1442 = vmatprep.subr.mxu0 0.0
    %1443 = vmatpush1.msra.mxu0 0.0
    %1444 = vmatprep.subr.mxu0 0.0
    %1445 = vmatpush1.msra.mxu0 0.0
    %1446 = vmatprep.subr.mxu0 0.0
    %1447 = vmatpush1.msra.mxu0 0.0
    %1448 = vmatprep.subr.mxu0 0.0
    %1449 = vmatpush1.msra.mxu0 0.0
    %1450 = vmatprep.subr.mxu0 0.0
    %1451 = vmatpush1.msra.mxu0 0.0
    %1452 = vmatprep.subr.mxu0 0.0
    %1453 = vmatpush1.msra.mxu0 0.0
    %1454 = vmatprep.subr.mxu0 0.0
    %1455 = vmatpush1.msra.mxu0 0.0
    %1456 = vmatprep.subr.mxu0 0.0
    %1457 = vmatpush1.msra.mxu0 0.0
    %1458 = vmatprep.subr.mxu0 0.0
    %1459 = vmatpush1.msra.mxu0 0.0
    %1460 = vmatprep.mubr.f32.mxu0 0.0
    %1461 = vmatmul.mubr.f32.gmra.mrb[0].mxu0 %v1392
    %v1462 = vpop.f32.mrb[0].mxu0
    %v1463 = vadd.f32 %v1384, %v1462
    %v1464 = vpop.f32.mrb[0].mxu0
    %1465 = vmatprep.mubr.f32.mxu0 0.0
    %1466 = vmatmul.mubr.f32.gmra.mrb[0].mxu0 %v1394
    %v1467 = vpop.f32.mrb[0].mxu0
    %v1468 = vadd.f32 %v1384, %v1467
    %v1469 = vpop.f32.mrb[0].mxu0
    %1470 = vdwg.mxu0
    %v1471 = vld [vmem:[%s12] sm:$0xff]
    %v1472 = vld [vmem:[%s12 + $0x8] sm:$0xff]
    %v1473 = vld [vmem:[%s12 + $0x10] sm:$0xff]
    %v1474 = vld [vmem:[%s12 + $0x18] sm:$0xff]
    %v1476 = vsel %vm164, %v1463, 0
    %v1479 = vsel %vm164, %v1468, 0
    %1481 = vmatprep.subr.mxu0 0.0
    %1482 = vmatpush1.msra.mxu0 %v1471
    %1483 = vmatprep.subr.mxu0 0.0
    %1484 = vmatpush1.msra.mxu0 %v1472
    %1485 = vmatprep.subr.mxu0 0.0
    %1486 = vmatpush1.msra.mxu0 %v1473
    %1487 = vmatprep.subr.mxu0 0.0
    %1488 = vmatpush1.msra.mxu0 %v1474
    %1489 = vmatprep.subr.mxu0 0.0
    %1490 = vmatpush1.msra.mxu0 0.0
    %1491 = vmatprep.subr.mxu0 0.0
    %1492 = vmatpush1.msra.mxu0 0.0
    %1493 = vmatprep.subr.mxu0 0.0
    %1494 = vmatpush1.msra.mxu0 0.0
    %1495 = vmatprep.subr.mxu0 0.0
    %1496 = vmatpush1.msra.mxu0 0.0
    %1497 = vmatprep.subr.mxu0 0.0
    %1498 = vmatpush1.msra.mxu0 0.0
    %1499 = vmatprep.subr.mxu0 0.0
    %1500 = vmatpush1.msra.mxu0 0.0
    %1501 = vmatprep.subr.mxu0 0.0
    %1502 = vmatpush1.msra.mxu0 0.0
    %1503 = vmatprep.subr.mxu0 0.0
    %1504 = vmatpush1.msra.mxu0 0.0
    %1505 = vmatprep.subr.mxu0 0.0
    %1506 = vmatpush1.msra.mxu0 0.0
    %1507 = vmatprep.subr.mxu0 0.0
    %1508 = vmatpush1.msra.mxu0 0.0
    %1509 = vmatprep.subr.mxu0 0.0
    %1510 = vmatpush1.msra.mxu0 0.0
    %1511 = vmatprep.subr.mxu0 0.0
    %1512 = vmatpush1.msra.mxu0 0.0
    %1513 = vmatprep.subr.mxu0 0.0
    %1514 = vmatpush1.msra.mxu0 0.0
    %1515 = vmatprep.subr.mxu0 0.0
    %1516 = vmatpush1.msra.mxu0 0.0
    %1517 = vmatprep.subr.mxu0 0.0
    %1518 = vmatpush1.msra.mxu0 0.0
    %1519 = vmatprep.subr.mxu0 0.0
    %1520 = vmatpush1.msra.mxu0 0.0
    %1521 = vmatprep.subr.mxu0 0.0
    %1522 = vmatpush1.msra.mxu0 0.0
    %1523 = vmatprep.subr.mxu0 0.0
    %1524 = vmatpush1.msra.mxu0 0.0
    %1525 = vmatprep.subr.mxu0 0.0
    %1526 = vmatpush1.msra.mxu0 0.0
    %1527 = vmatprep.subr.mxu0 0.0
    %1528 = vmatpush1.msra.mxu0 0.0
    %1529 = vmatprep.subr.mxu0 0.0
    %1530 = vmatpush1.msra.mxu0 0.0
    %1531 = vmatprep.subr.mxu0 0.0
    %1532 = vmatpush1.msra.mxu0 0.0
    %1533 = vmatprep.subr.mxu0 0.0
    %1534 = vmatpush1.msra.mxu0 0.0
    %1535 = vmatprep.subr.mxu0 0.0
    %1536 = vmatpush1.msra.mxu0 0.0
    %1537 = vmatprep.subr.mxu0 0.0
    %1538 = vmatpush1.msra.mxu0 0.0
    %1539 = vmatprep.subr.mxu0 0.0
    %1540 = vmatpush1.msra.mxu0 0.0
    %1541 = vmatprep.subr.mxu0 0.0
    %1542 = vmatpush1.msra.mxu0 0.0
    %1543 = vmatprep.subr.mxu0 0.0
    %1544 = vmatpush1.msra.mxu0 0.0
    %1545 = vmatprep.mubr.f32.mxu0 0.0
    %1546 = vmatmul.mubr.f32.gmra.mrb[0].mxu0 %v1476
    %v1547 = vpop.f32.mrb[0].mxu0
    %v1548 = vadd.f32 0.0, %v1547
    %v1549 = vpop.f32.mrb[0].mxu0
    %1550 = vmatprep.mubr.f32.mxu0 0.0
    %1551 = vmatmul.mubr.f32.gmra.mrb[0].mxu0 %v1479
    %v1552 = vpop.f32.mrb[0].mxu0
    %v1553 = vadd.f32 0.0, %v1552
    %v1554 = vpop.f32.mrb[0].mxu0
    %1555 = vdwg.mxu0
    %v1556 = vld [vmem:[%s8] sm:$0x1]
    %v1557 = vld [vmem:[%s6] sm:$0xff]
    %v1558 = vld [vmem:[%s6 + $0x8] sm:$0xff]
    %v1559 = vld [vmem:[%s6 + $0x10] sm:$0xff]
    %v1560 = vld [vmem:[%s6 + $0x18] sm:$0xff]
    %v1562 = vlaneseq
    %v1563 = vshrl.u32 %v1562, 7
    %v1564 = vsub.s32 0, %v1563
    %v1565 = vrot.slane %v1556, %v1564
    %1567 = vmatprep.subr.mxu0 0.0
    %1568 = vmatpush1.msra.mxu0 %v1557
    %1569 = vmatprep.subr.mxu0 0.0
    %1570 = vmatpush1.msra.mxu0 %v1558
    %1571 = vmatprep.subr.mxu0 0.0
    %1572 = vmatpush1.msra.mxu0 %v1559
    %1573 = vmatprep.subr.mxu0 0.0
    %1574 = vmatpush1.msra.mxu0 %v1560
    %1575 = vmatprep.subr.mxu0 0.0
    %1576 = vmatpush1.msra.mxu0 0.0
    %1577 = vmatprep.subr.mxu0 0.0
    %1578 = vmatpush1.msra.mxu0 0.0
    %1579 = vmatprep.subr.mxu0 0.0
    %1580 = vmatpush1.msra.mxu0 0.0
    %1581 = vmatprep.subr.mxu0 0.0
    %1582 = vmatpush1.msra.mxu0 0.0
    %1583 = vmatprep.subr.mxu0 0.0
    %1584 = vmatpush1.msra.mxu0 0.0
    %1585 = vmatprep.subr.mxu0 0.0
    %1586 = vmatpush1.msra.mxu0 0.0
    %1587 = vmatprep.subr.mxu0 0.0
    %1588 = vmatpush1.msra.mxu0 0.0
    %1589 = vmatprep.subr.mxu0 0.0
    %1590 = vmatpush1.msra.mxu0 0.0
    %1591 = vmatprep.subr.mxu0 0.0
    %1592 = vmatpush1.msra.mxu0 0.0
    %1593 = vmatprep.subr.mxu0 0.0
    %1594 = vmatpush1.msra.mxu0 0.0
    %1595 = vmatprep.subr.mxu0 0.0
    %1596 = vmatpush1.msra.mxu0 0.0
    %1597 = vmatprep.subr.mxu0 0.0
    %1598 = vmatpush1.msra.mxu0 0.0
    %1599 = vmatprep.subr.mxu0 0.0
    %1600 = vmatpush1.msra.mxu0 0.0
    %1601 = vmatprep.subr.mxu0 0.0
    %1602 = vmatpush1.msra.mxu0 0.0
    %1603 = vmatprep.subr.mxu0 0.0
    %1604 = vmatpush1.msra.mxu0 0.0
    %1605 = vmatprep.subr.mxu0 0.0
    %1606 = vmatpush1.msra.mxu0 0.0
    %1607 = vmatprep.subr.mxu0 0.0
    %1608 = vmatpush1.msra.mxu0 0.0
    %1609 = vmatprep.subr.mxu0 0.0
    %1610 = vmatpush1.msra.mxu0 0.0
    %1611 = vmatprep.subr.mxu0 0.0
    %1612 = vmatpush1.msra.mxu0 0.0
    %1613 = vmatprep.subr.mxu0 0.0
    %1614 = vmatpush1.msra.mxu0 0.0
    %1615 = vmatprep.subr.mxu0 0.0
    %1616 = vmatpush1.msra.mxu0 0.0
    %1617 = vmatprep.subr.mxu0 0.0
    %1618 = vmatpush1.msra.mxu0 0.0
    %1619 = vmatprep.subr.mxu0 0.0
    %1620 = vmatpush1.msra.mxu0 0.0
    %1621 = vmatprep.subr.mxu0 0.0
    %1622 = vmatpush1.msra.mxu0 0.0
    %1623 = vmatprep.subr.mxu0 0.0
    %1624 = vmatpush1.msra.mxu0 0.0
    %1625 = vmatprep.subr.mxu0 0.0
    %1626 = vmatpush1.msra.mxu0 0.0
    %1627 = vmatprep.subr.mxu0 0.0
    %1628 = vmatpush1.msra.mxu0 0.0
    %1629 = vmatprep.subr.mxu0 0.0
    %1630 = vmatpush1.msra.mxu0 0.0
    %1631 = vmatprep.mubr.f32.mxu0 0.0
    %1632 = vmatmul.mubr.f32.gmra.mrb[0].mxu0 %v166
    %v1633 = vpop.f32.mrb[0].mxu0
    %v1634 = vadd.f32 %v1565, %v1633
    %v1635 = vpop.f32.mrb[0].mxu0
    %1636 = vmatprep.mubr.f32.mxu0 0.0
    %1637 = vmatmul.mubr.f32.gmra.mrb[0].mxu0 %v169
    %v1638 = vpop.f32.mrb[0].mxu0
    %v1639 = vadd.f32 %v1565, %v1638
    %v1640 = vpop.f32.mrb[0].mxu0
    %1641 = vdwg.mxu0
    %v1642 = vld [vmem:[%s15] sm:$0x1]
    %v1644 = vsel %vm164, %v1642, 0
    %1646 = vmatprep.subr.mxu0 0.0
    %1647 = vmatpush1.msra.mxu0 %v1557
    %1648 = vmatprep.subr.mxu0 0.0
    %1649 = vmatpush1.msra.mxu0 %v1558
    %1650 = vmatprep.subr.mxu0 0.0
    %1651 = vmatpush1.msra.mxu0 %v1559
    %1652 = vmatprep.subr.mxu0 0.0
    %1653 = vmatpush1.msra.mxu0 %v1560
    %1654 = vmatprep.subr.mxu0 0.0
    %1655 = vmatpush1.msra.mxu0 0.0
    %1656 = vmatprep.subr.mxu0 0.0
    %1657 = vmatpush1.msra.mxu0 0.0
    %1658 = vmatprep.subr.mxu0 0.0
    %1659 = vmatpush1.msra.mxu0 0.0
    %1660 = vmatprep.subr.mxu0 0.0
    %1661 = vmatpush1.msra.mxu0 0.0
    %1662 = vmatprep.subr.mxu0 0.0
    %1663 = vmatpush1.msra.mxu0 0.0
    %1664 = vmatprep.subr.mxu0 0.0
    %1665 = vmatpush1.msra.mxu0 0.0
    %1666 = vmatprep.subr.mxu0 0.0
    %1667 = vmatpush1.msra.mxu0 0.0
    %1668 = vmatprep.subr.mxu0 0.0
    %1669 = vmatpush1.msra.mxu0 0.0
    %1670 = vmatprep.subr.mxu0 0.0
    %1671 = vmatpush1.msra.mxu0 0.0
    %1672 = vmatprep.subr.mxu0 0.0
    %1673 = vmatpush1.msra.mxu0 0.0
    %1674 = vmatprep.subr.mxu0 0.0
    %1675 = vmatpush1.msra.mxu0 0.0
    %1676 = vmatprep.subr.mxu0 0.0
    %1677 = vmatpush1.msra.mxu0 0.0
    %1678 = vmatprep.subr.mxu0 0.0
    %1679 = vmatpush1.msra.mxu0 0.0
    %1680 = vmatprep.subr.mxu0 0.0
    %1681 = vmatpush1.msra.mxu0 0.0
    %1682 = vmatprep.subr.mxu0 0.0
    %1683 = vmatpush1.msra.mxu0 0.0
    %1684 = vmatprep.subr.mxu0 0.0
    %1685 = vmatpush1.msra.mxu0 0.0
    %1686 = vmatprep.subr.mxu0 0.0
    %1687 = vmatpush1.msra.mxu0 0.0
    %1688 = vmatprep.subr.mxu0 0.0
    %1689 = vmatpush1.msra.mxu0 0.0
    %1690 = vmatprep.subr.mxu0 0.0
    %1691 = vmatpush1.msra.mxu0 0.0
    %1692 = vmatprep.subr.mxu0 0.0
    %1693 = vmatpush1.msra.mxu0 0.0
    %1694 = vmatprep.subr.mxu0 0.0
    %1695 = vmatpush1.msra.mxu0 0.0
    %1696 = vmatprep.subr.mxu0 0.0
    %1697 = vmatpush1.msra.mxu0 0.0
    %1698 = vmatprep.subr.mxu0 0.0
    %1699 = vmatpush1.msra.mxu0 0.0
    %1700 = vmatprep.subr.mxu0 0.0
    %1701 = vmatpush1.msra.mxu0 0.0
    %1702 = vmatprep.subr.mxu0 0.0
    %1703 = vmatpush1.msra.mxu0 0.0
    %1704 = vmatprep.subr.mxu0 0.0
    %1705 = vmatpush1.msra.mxu0 0.0
    %1706 = vmatprep.subr.mxu0 0.0
    %1707 = vmatpush1.msra.mxu0 0.0
    %1708 = vmatprep.subr.mxu0 0.0
    %1709 = vmatpush1.msra.mxu0 0.0
    %1710 = vmatprep.mubr.f32.mxu0 0.0
    %1711 = vmatmul.mubr.f32.gmra.mrb[0].mxu0 %v1644
    %v1712 = vpop.f32.mrb[0].mxu0
    %v1713 = vadd.f32 %v1556, %v1712
    %v1714 = vpop.f32.mrb[0].mxu0
    %1715 = vdwg.mxu0
    %v1716 = vld [vmem:[%s7] sm:$0xff]
    %v1717 = vld [vmem:[%s7 + $0x8] sm:$0xff]
    %v1718 = vld [vmem:[%s7 + $0x10] sm:$0xff]
    %v1719 = vld [vmem:[%s7 + $0x18] sm:$0xff]
    %v1720 = vld [vmem:[%s13] sm:$0xff]
    %v1721 = vld [vmem:[%s13 + $0x8] sm:$0xff]
    %v1722 = vld [vmem:[%s13 + $0x10] sm:$0xff]
    %v1723 = vld [vmem:[%s13 + $0x18] sm:$0xff]
    %v1724 = vld [vmem:[%s14] sm:$0x1]
    %v1725 = vld [vmem:[%s11] sm:$0x1]
    %v1726 = vlaneseq
    %v1727 = vshrl.u32 %v1726, 7
    %v1728 = vsub.s32 0, %v1727
    %v1729 = vrot.slane %v1713, %v1728
    %v1730 = vlaneseq
    %v1731 = vand.u32 %v1730, 127
    %v1732 = vcvt.s32.f32 %v1731
    %v1735 = vrot.slane %v1353, 7
    %v1736 = vrot.slane %v1354, 6
    %v1737 = vsel %vm380, %v1736, %v1735
    %1738 = vrot.lane.b32.xlu0 %v1737, 32
    %v1739 = vpop.permute.xlu0 %1738
    %v1740 = vsel %vm164, %v1739, 0
    %1742 = vmatprep.subr.mxu0 0.0
    %1743 = vmatpush1.msra.mxu0 %v1716
    %1744 = vmatprep.subr.mxu0 0.0
    %1745 = vmatpush1.msra.mxu0 %v1717
    %1746 = vmatprep.subr.mxu0 0.0
    %1747 = vmatpush1.msra.mxu0 %v1718
    %1748 = vmatprep.subr.mxu0 0.0
    %1749 = vmatpush1.msra.mxu0 %v1719
    %1750 = vmatprep.subr.mxu0 0.0
    %1751 = vmatpush1.msra.mxu0 0.0
    %1752 = vmatprep.subr.mxu0 0.0
    %1753 = vmatpush1.msra.mxu0 0.0
    %1754 = vmatprep.subr.mxu0 0.0
    %1755 = vmatpush1.msra.mxu0 0.0
    %1756 = vmatprep.subr.mxu0 0.0
    %1757 = vmatpush1.msra.mxu0 0.0
    %1758 = vmatprep.subr.mxu0 0.0
    %1759 = vmatpush1.msra.mxu0 0.0
    %1760 = vmatprep.subr.mxu0 0.0
    %1761 = vmatpush1.msra.mxu0 0.0
    %1762 = vmatprep.subr.mxu0 0.0
    %1763 = vmatpush1.msra.mxu0 0.0
    %1764 = vmatprep.subr.mxu0 0.0
    %1765 = vmatpush1.msra.mxu0 0.0
    %1766 = vmatprep.subr.mxu0 0.0
    %1767 = vmatpush1.msra.mxu0 0.0
    %1768 = vmatprep.subr.mxu0 0.0
    %1769 = vmatpush1.msra.mxu0 0.0
    %1770 = vmatprep.subr.mxu0 0.0
    %1771 = vmatpush1.msra.mxu0 0.0
    %1772 = vmatprep.subr.mxu0 0.0
    %1773 = vmatpush1.msra.mxu0 0.0
    %1774 = vmatprep.subr.mxu0 0.0
    %1775 = vmatpush1.msra.mxu0 0.0
    %1776 = vmatprep.subr.mxu0 0.0
    %1777 = vmatpush1.msra.mxu0 0.0
    %1778 = vmatprep.subr.mxu0 0.0
    %1779 = vmatpush1.msra.mxu0 0.0
    %1780 = vmatprep.subr.mxu0 0.0
    %1781 = vmatpush1.msra.mxu0 0.0
    %1782 = vmatprep.subr.mxu0 0.0
    %1783 = vmatpush1.msra.mxu0 0.0
    %1784 = vmatprep.subr.mxu0 0.0
    %1785 = vmatpush1.msra.mxu0 0.0
    %1786 = vmatprep.subr.mxu0 0.0
    %1787 = vmatpush1.msra.mxu0 0.0
    %1788 = vmatprep.subr.mxu0 0.0
    %1789 = vmatpush1.msra.mxu0 0.0
    %1790 = vmatprep.subr.mxu0 0.0
    %1791 = vmatpush1.msra.mxu0 0.0
    %1792 = vmatprep.subr.mxu0 0.0
    %1793 = vmatpush1.msra.mxu0 0.0
    %1794 = vmatprep.subr.mxu0 0.0
    %1795 = vmatpush1.msra.mxu0 0.0
    %1796 = vmatprep.subr.mxu0 0.0
    %1797 = vmatpush1.msra.mxu0 0.0
    %1798 = vmatprep.subr.mxu0 0.0
    %1799 = vmatpush1.msra.mxu0 0.0
    %1800 = vmatprep.subr.mxu0 0.0
    %1801 = vmatpush1.msra.mxu0 0.0
    %1802 = vmatprep.subr.mxu0 0.0
    %1803 = vmatpush1.msra.mxu0 0.0
    %1804 = vmatprep.subr.mxu0 0.0
    %1805 = vmatpush1.msra.mxu0 0.0
    %1806 = vmatprep.mubr.f32.mxu0 0.0
    %1807 = vmatmul.mubr.f32.gmra.mrb[0].mxu0 %v1740
    %v1808 = vpop.f32.mrb[0].mxu0
    %v1809 = vadd.f32 0.0, %v1808
    %v1810 = vpop.f32.mrb[0].mxu0
    %1811 = vdwg.mxu0
    %v1812 = vadd.f32 %v1729, %v1809
    %v1813 = vxor.u32 %v1812, 2147483648
    %v1814 = vmul.f32 %v1813, 1.442695
    %v1815 = vpow.pop %v1814
    %v1816 = vadd.f32 %v1815, 1.0
    %v1817 = vrcp.pop %v1816
    %v1818 = vmul.f32 1.0, %v1817
    %v1819 = vtanh.pop %v1812
    %v1822 = vrot.slane %v1341, 7
    %v1823 = vrot.slane %v1342, 6
    %v1824 = vsel %vm380, %v1823, %v1822
    %v1826 = vmul.f32 %v1818, %v1824
    %1828 = vrot.lane.b32.xlu0 %v1819, 64
    %v1829 = vpop.permute.xlu0 %1828
    %v1831 = vmul.f32 %v1818, %v1829
    %1833 = vrot.lane.b32.xlu0 %v1831, 32
    %v1834 = vpop.permute.xlu0 %1833
    %v1836 = vadd.f32 %v1826, %v1834
    %v1837 = vtanh.pop %v1836
    %1839 = vrot.lane.b32.xlu0 %v1837, 64
    %v1840 = vpop.permute.xlu0 %1839
    %v1842 = vmul.f32 %v1818, %v1840
    %v1844 = vlaneseq
    %v1845 = vshrl.u32 %v1844, 7
    %v1846 = vsub.s32 0, %v1845
    %v1847 = vrot.slane %v1724, %v1846
    %1850 = vrot.lane.b32.xlu0 %v1842, 32
    %v1851 = vpop.permute.xlu0 %1850
    %v1852 = vsel %vm164, %v1851, 0
    %1854 = vmatprep.subr.mxu0 0.0
    %1855 = vmatpush1.msra.mxu0 %v1720
    %1856 = vmatprep.subr.mxu0 0.0
    %1857 = vmatpush1.msra.mxu0 %v1721
    %1858 = vmatprep.subr.mxu0 0.0
    %1859 = vmatpush1.msra.mxu0 %v1722
    %1860 = vmatprep.subr.mxu0 0.0
    %1861 = vmatpush1.msra.mxu0 %v1723
    %1862 = vmatprep.subr.mxu0 0.0
    %1863 = vmatpush1.msra.mxu0 0.0
    %1864 = vmatprep.subr.mxu0 0.0
    %1865 = vmatpush1.msra.mxu0 0.0
    %1866 = vmatprep.subr.mxu0 0.0
    %1867 = vmatpush1.msra.mxu0 0.0
    %1868 = vmatprep.subr.mxu0 0.0
    %1869 = vmatpush1.msra.mxu0 0.0
    %1870 = vmatprep.subr.mxu0 0.0
    %1871 = vmatpush1.msra.mxu0 0.0
    %1872 = vmatprep.subr.mxu0 0.0
    %1873 = vmatpush1.msra.mxu0 0.0
    %1874 = vmatprep.subr.mxu0 0.0
    %1875 = vmatpush1.msra.mxu0 0.0
    %1876 = vmatprep.subr.mxu0 0.0
    %1877 = vmatpush1.msra.mxu0 0.0
    %1878 = vmatprep.subr.mxu0 0.0
    %1879 = vmatpush1.msra.mxu0 0.0
    %1880 = vmatprep.subr.mxu0 0.0
    %1881 = vmatpush1.msra.mxu0 0.0
    %1882 = vmatprep.subr.mxu0 0.0
    %1883 = vmatpush1.msra.mxu0 0.0
    %1884 = vmatprep.subr.mxu0 0.0
    %1885 = vmatpush1.msra.mxu0 0.0
    %1886 = vmatprep.subr.mxu0 0.0
    %1887 = vmatpush1.msra.mxu0 0.0
    %1888 = vmatprep.subr.mxu0 0.0
    %1889 = vmatpush1.msra.mxu0 0.0
    %1890 = vmatprep.subr.mxu0 0.0
    %1891 = vmatpush1.msra.mxu0 0.0
    %1892 = vmatprep.subr.mxu0 0.0
    %1893 = vmatpush1.msra.mxu0 0.0
    %1894 = vmatprep.subr.mxu0 0.0
    %1895 = vmatpush1.msra.mxu0 0.0
    %1896 = vmatprep.subr.mxu0 0.0
    %1897 = vmatpush1.msra.mxu0 0.0
    %1898 = vmatprep.subr.mxu0 0.0
    %1899 = vmatpush1.msra.mxu0 0.0
    %1900 = vmatprep.subr.mxu0 0.0
    %1901 = vmatpush1.msra.mxu0 0.0
    %1902 = vmatprep.subr.mxu0 0.0
    %1903 = vmatpush1.msra.mxu0 0.0
    %1904 = vmatprep.subr.mxu0 0.0
    %1905 = vmatpush1.msra.mxu0 0.0
    %1906 = vmatprep.subr.mxu0 0.0
    %1907 = vmatpush1.msra.mxu0 0.0
    %1908 = vmatprep.subr.mxu0 0.0
    %1909 = vmatpush1.msra.mxu0 0.0
    %1910 = vmatprep.subr.mxu0 0.0
    %1911 = vmatpush1.msra.mxu0 0.0
    %1912 = vmatprep.subr.mxu0 0.0
    %1913 = vmatpush1.msra.mxu0 0.0
    %1914 = vmatprep.subr.mxu0 0.0
    %1915 = vmatpush1.msra.mxu0 0.0
    %1916 = vmatprep.subr.mxu0 0.0
    %1917 = vmatpush1.msra.mxu0 0.0
    %1918 = vmatprep.mubr.f32.mxu0 0.0
    %1919 = vmatmul.mubr.f32.gmra.mrb[0].mxu0 %v1852
    %v1920 = vpop.f32.mrb[0].mxu0
    %v1921 = vadd.f32 %v1847, %v1920
    %v1922 = vpop.f32.mrb[0].mxu0
    %1923 = vdwg.mxu0
    %v1926 = vunpack.c.l.s4 1966171168
    %v1927 = vunpack.c.0.s8 %v1926
    %v1928 = vlaneseq
    %v1929 = vshrl.u32 %v1928, 7
    %v1930 = vsub.s32 %v1927, %v1929
    %v1931 = vrot.slane %v1921, %v1930
    %v1932 = vcombine.high %v1931, %v1931
    %v1934 = vunpack.c.l.s4 1966171168
    %v1935 = vunpack.c.0.s8 %v1934
    %v1936 = vlaneseq
    %v1937 = vshrl.u32 %v1936, 7
    %v1938 = vsub.s32 %v1935, %v1937
    %v1939 = vrot.slane %v1931, %v1938
    %v1941 = vunpack.c.l.s4 1966171168
    %v1942 = vunpack.c.0.s8 %v1941
    %v1943 = vlaneseq
    %v1944 = vshrl.u32 %v1943, 7
    %v1945 = vsub.s32 %v1942, %v1944
    %v1946 = vrot.slane %v1932, %v1945
    %v1947 = vlaneseq
    %v1948 = vshrl.u32 %v1947, 7
    %v1949 = vsub.s32 0, %v1948
    %v1950 = vrot.slane %v1939, %v1949
    %v1951 = vlaneseq
    %v1952 = vshrl.u32 %v1951, 7
    %v1953 = vsub.s32 0, %v1952
    %v1954 = vrot.slane %v1946, %v1953
    %v1957 = vadd.f32 %v1950, %v1463
    %v1958 = vadd.f32 %v1954, %v1468
    %v1959 = vtanh.pop %v1957
    %v1960 = vtanh.pop %v1958
    %v1962 = vlaneseq
    %v1963 = vshrl.u32 %v1962, 7
    %v1964 = vsub.s32 0, %v1963
    %v1965 = vrot.slane %v1725, %v1964
    %v1967 = vmul.f32 %v1959, %v1965
    %v1968 = vmul.f32 %v1960, %v1965
    %v1969 = vsel %vm164, %v1967, 0.0
    %1970 = vadd.xlane.f32.xlu0 %v1969
    %v1971 = vpop.xlane.xlu0 %1970
    %v1972 = vsel %vm164, %v1968, 0.0
    %1973 = vadd.xlane.f32.xlu0 %v1972
    %v1974 = vpop.xlane.xlu0 %1973
    %v1975 = vadd.f32 %v1971, 0.0
    %v1976 = vadd.f32 %v1974, 0.0
    %v1979 = vlaneseq
    %v1980 = vshrl.u32 %v1979, 7
    %v1981 = vsub.s32 %v1731, %v1980
    %v1982 = vrot.slane %v1975, %v1981
    %v1983 = vlaneseq
    %v1984 = vshrl.u32 %v1983, 7
    %v1985 = vsub.s32 %v1731, %v1984
    %v1986 = vrot.slane %v1976, %v1985
    %v1987 = vsel %vm380, %v1986, %v1982
    %vm1989 = vcmask 58368
    %v1990 = vsel %vm1989, %v1987, -inf
    %1991 = vmax.xlane.f32.xlu0 %v1990
    %v1992 = vpop.xlane.xlu0 %1991
    %v1994 = vlaneseq
    %v1995 = vshrl.u32 %v1994, 7
    %v1996 = vsub.s32 0, %v1995
    %v1997 = vrot.slane %v1992, %v1996
    %v1998 = vlaneseq
    %v1999 = vshrl.u32 %v1998, 7
    %v2000 = vsub.s32 1, %v1999
    %v2001 = vrot.slane %v1992, %v2000
    %v2004 = vsub.f32 %v1975, %v1997
    %v2005 = vsub.f32 %v1976, %v2001
    %v2006 = vmul.f32 %v2004, 1.442695
    %v2007 = vpow.pop %v2006
    %v2008 = vmul.f32 %v2005, 1.442695
    %v2009 = vpow.pop %v2008
    %2012 = vset.pattern.permute.xlu0 0
    %2013 = vperm.xlu0 %2012, %v2007
    %v2014 = vpop.permute.xlu0 %2013
    %2015 = vset.pattern.permute.xlu0 0
    %2016 = vperm.xlu0 %2015, %v2009
    %v2017 = vpop.permute.xlu0 %2016
    %v2018 = vlaneseq
    %v2019 = vshrl.u32 %v2018, 7
    %v2020 = vsub.s32 %v1731, %v2019
    %v2021 = vrot.slane %v2014, %v2020
    %v2022 = vlaneseq
    %v2023 = vshrl.u32 %v2022, 7
    %v2024 = vsub.s32 %v1731, %v2023
    %v2025 = vrot.slane %v2017, %v2024
    %v2026 = vsel %vm380, %v2025, %v2021
    %v2028 = vsel %vm1989, %v2026, 0.0
    %2029 = vadd.xlane.f32.xlu0 %v2028
    %v2030 = vpop.xlane.xlu0 %2029
    %v2032 = vlaneseq
    %v2033 = vshrl.u32 %v2032, 7
    %v2034 = vsub.s32 0, %v2033
    %v2035 = vrot.slane %v2030, %v2034
    %v2036 = vlaneseq
    %v2037 = vshrl.u32 %v2036, 7
    %v2038 = vsub.s32 1, %v2037
    %v2039 = vrot.slane %v2030, %v2038
    %v2042 = vrcp.pop %v2035
    %v2043 = vmul.f32 %v2007, %v2042
    %v2044 = vrcp.pop %v2039
    %v2045 = vmul.f32 %v2009, %v2044
    %2047 = vset.pattern.permute.xlu0 0
    %2048 = vperm.xlu0 %2047, %v2043
    %v2049 = vpop.permute.xlu0 %2048
    %2052 = vset.pattern.permute.xlu0 0
    %2053 = vperm.xlu0 %2052, %v2045
    %v2054 = vpop.permute.xlu0 %2053
    %v2056 = vmul.f32 %v1548, %v2049
    %v2057 = vmul.f32 %v1553, %v2054
    %v2058 = vsel %vm164, %v2056, 0.0
    %v2059 = vrot.slane %v2058, 4
    %v2060 = vadd.f32 %v2058, %v2059
    %v2061 = vrot.slane %v2060, 2
    %v2062 = vadd.f32 %v2060, %v2061
    %v2063 = vrot.slane %v2062, 1
    %v2064 = vadd.f32 %v2062, %v2063
    %v2065 = vsel %vm164, %v2057, 0.0
    %v2066 = vrot.slane %v2065, 4
    %v2067 = vadd.f32 %v2065, %v2066
    %v2068 = vrot.slane %v2067, 2
    %v2069 = vadd.f32 %v2067, %v2068
    %v2070 = vrot.slane %v2069, 1
    %v2071 = vadd.f32 %v2069, %v2070
    %v2072 = vrot.slane %v1921, 1
    %2073 = vrot.lane.b32.xlu0 %v1921, 96
    %v2074 = vpop.permute.xlu0 %2073
    %2075 = vrot.lane.b32.xlu0 %v2072, 96
    %v2076 = vpop.permute.xlu0 %2075
    %v2079 = vadd.f32 %v2064, %v2074
    %v2080 = vadd.f32 %v2071, %v2076
    %v2081 = vtanh.pop %v2079
    %v2082 = vtanh.pop %v2080
    %v2083 = vlaneseq
    %v2084 = vshrl.u32 %v2083, 7
    %v2085 = vsub.s32 %v1731, %v2084
    %v2086 = vrot.slane %v2049, %v2085
    %v2087 = vlaneseq
    %v2088 = vshrl.u32 %v2087, 7
    %v2089 = vsub.s32 %v1731, %v2088
    %v2090 = vrot.slane %v2054, %v2089
    %v2091 = vsel %vm380, %v2090, %v2086
    %v2093 = vsel %vm1989, %v2091, -inf
    %2094 = vmax.xlane.f32.xlu0 %v2093
    %v2095 = vpop.xlane.xlu0 %2094
    %v2097 = vlaneseq
    %v2098 = vshrl.u32 %v2097, 7
    %v2099 = vsub.s32 0, %v2098
    %v2100 = vrot.slane %v2095, %v2099
    %v2101 = vlaneseq
    %v2102 = vshrl.u32 %v2101, 7
    %v2103 = vsub.s32 1, %v2102
    %v2104 = vrot.slane %v2095, %v2103
    %vm2107 = vcmp.eq.f32.partialorder %v2043, %v2100
    %vm2108 = vcmp.eq.f32.partialorder %v2045, %v2104
    %2111 = vbcast.lane.b32.xlu0 %v1732, 256
    %v2112 = vpop.permute.xlu0 %2111
    %v2114 = vsel %vm2107, %v2112, 8.0
    %v2115 = vsel %vm2108, %v2112, 8.0
    %2118 = vset.pattern.permute.xlu0 0
    %2119 = vperm.xlu0 %2118, %v2114
    %v2120 = vpop.permute.xlu0 %2119
    %2121 = vset.pattern.permute.xlu0 0
    %2122 = vperm.xlu0 %2121, %v2115
    %v2123 = vpop.permute.xlu0 %2122
    %v2124 = vlaneseq
    %v2125 = vshrl.u32 %v2124, 7
    %v2126 = vsub.s32 %v1731, %v2125
    %v2127 = vrot.slane %v2120, %v2126
    %v2128 = vlaneseq
    %v2129 = vshrl.u32 %v2128, 7
    %v2130 = vsub.s32 %v1731, %v2129
    %v2131 = vrot.slane %v2123, %v2130
    %v2132 = vsel %vm380, %v2131, %v2127
    %v2134 = vsel %vm1989, %v2132, inf
    %2135 = vmin.xlane.f32.xlu0 %v2134
    %v2136 = vpop.xlane.xlu0 %2135
    %vm2137 = vcmp.eq.f32.partialorder %v1732, %v2136
    %v2138 = vsel %vm2137, 1, 0
    %v2139 = vcvt.s32.f32 %v2138
    %v2140 = vsub.f32 1.0, %v2139
    %v2141 = vlaneseq
    %v2142 = vshrl.u32 %v2141, 7
    %v2143 = vsub.s32 0, %v2142
    %v2144 = vrot.slane %v2139, %v2143
    %2146 = vbcast.lane.b32.xlu0 %v2144, 256
    %v2147 = vpop.permute.xlu0 %2146
    %v2148 = vlaneseq
    %v2149 = vshrl.u32 %v2148, 7
    %v2150 = vsub.s32 1, %v2149
    %v2151 = vrot.slane %v2139, %v2150
    %2153 = vbcast.lane.b32.xlu0 %v2151, 256
    %v2154 = vpop.permute.xlu0 %2153
    %v2155 = vmul.f32 %v2147, %v1634
    %v2156 = vmul.f32 %v2154, %v1639
    %v2157 = vrot.slane %v2155, 4
    %v2158 = vadd.f32 %v2155, %v2157
    %v2159 = vrot.slane %v2158, 2
    %v2160 = vadd.f32 %v2158, %v2159
    %v2161 = vrot.slane %v2160, 1
    %v2162 = vadd.f32 %v2160, %v2161
    %v2163 = vrot.slane %v2156, 4
    %v2164 = vadd.f32 %v2156, %v2163
    %v2165 = vrot.slane %v2164, 2
    %v2166 = vadd.f32 %v2164, %v2165
    %v2167 = vrot.slane %v2166, 1
    %v2168 = vadd.f32 %v2166, %v2167
    %v2171 = vrot.slane %v2082, 7
    %v2172 = vsel %vm380, %v2171, %v2081
    %v2173 = vsel %vm164, %v2172, 0
    %2175 = vmatprep.subr.mxu0 0.0
    %2176 = vmatpush1.msra.mxu0 %v1716
    %2177 = vmatprep.subr.mxu0 0.0
    %2178 = vmatpush1.msra.mxu0 %v1717
    %2179 = vmatprep.subr.mxu0 0.0
    %2180 = vmatpush1.msra.mxu0 %v1718
    %2181 = vmatprep.subr.mxu0 0.0
    %2182 = vmatpush1.msra.mxu0 %v1719
    %2183 = vmatprep.subr.mxu0 0.0
    %2184 = vmatpush1.msra.mxu0 0.0
    %2185 = vmatprep.subr.mxu0 0.0
    %2186 = vmatpush1.msra.mxu0 0.0
    %2187 = vmatprep.subr.mxu0 0.0
    %2188 = vmatpush1.msra.mxu0 0.0
    %2189 = vmatprep.subr.mxu0 0.0
    %2190 = vmatpush1.msra.mxu0 0.0
    %2191 = vmatprep.subr.mxu0 0.0
    %2192 = vmatpush1.msra.mxu0 0.0
    %2193 = vmatprep.subr.mxu0 0.0
    %2194 = vmatpush1.msra.mxu0 0.0
    %2195 = vmatprep.subr.mxu0 0.0
    %2196 = vmatpush1.msra.mxu0 0.0
    %2197 = vmatprep.subr.mxu0 0.0
    %2198 = vmatpush1.msra.mxu0 0.0
    %2199 = vmatprep.subr.mxu0 0.0
    %2200 = vmatpush1.msra.mxu0 0.0
    %2201 = vmatprep.subr.mxu0 0.0
    %2202 = vmatpush1.msra.mxu0 0.0
    %2203 = vmatprep.subr.mxu0 0.0
    %2204 = vmatpush1.msra.mxu0 0.0
    %2205 = vmatprep.subr.mxu0 0.0
    %2206 = vmatpush1.msra.mxu0 0.0
    %2207 = vmatprep.subr.mxu0 0.0
    %2208 = vmatpush1.msra.mxu0 0.0
    %2209 = vmatprep.subr.mxu0 0.0
    %2210 = vmatpush1.msra.mxu0 0.0
    %2211 = vmatprep.subr.mxu0 0.0
    %2212 = vmatpush1.msra.mxu0 0.0
    %2213 = vmatprep.subr.mxu0 0.0
    %2214 = vmatpush1.msra.mxu0 0.0
    %2215 = vmatprep.subr.mxu0 0.0
    %2216 = vmatpush1.msra.mxu0 0.0
    %2217 = vmatprep.subr.mxu0 0.0
    %2218 = vmatpush1.msra.mxu0 0.0
    %2219 = vmatprep.subr.mxu0 0.0
    %2220 = vmatpush1.msra.mxu0 0.0
    %2221 = vmatprep.subr.mxu0 0.0
    %2222 = vmatpush1.msra.mxu0 0.0
    %2223 = vmatprep.subr.mxu0 0.0
    %2224 = vmatpush1.msra.mxu0 0.0
    %2225 = vmatprep.subr.mxu0 0.0
    %2226 = vmatpush1.msra.mxu0 0.0
    %2227 = vmatprep.subr.mxu0 0.0
    %2228 = vmatpush1.msra.mxu0 0.0
    %2229 = vmatprep.subr.mxu0 0.0
    %2230 = vmatpush1.msra.mxu0 0.0
    %2231 = vmatprep.subr.mxu0 0.0
    %2232 = vmatpush1.msra.mxu0 0.0
    %2233 = vmatprep.subr.mxu0 0.0
    %2234 = vmatpush1.msra.mxu0 0.0
    %2235 = vmatprep.subr.mxu0 0.0
    %2236 = vmatpush1.msra.mxu0 0.0
    %2237 = vmatprep.subr.mxu0 0.0
    %2238 = vmatpush1.msra.mxu0 0.0
    %2239 = vmatprep.mubr.f32.mxu0 0.0
    %2240 = vmatmul.mubr.f32.gmra.mrb[0].mxu0 %v2173
    %v2241 = vpop.f32.mrb[0].mxu0
    %v2242 = vadd.f32 0.0, %v2241
    %v2243 = vpop.f32.mrb[0].mxu0
    %2244 = vdwg.mxu0
    %v2246 = vrot.slane %v2242, 1
    %v2249 = vadd.f32 %v2162, %v2242
    %v2250 = vadd.f32 %v2168, %v2246
    %v2251 = vxor.u32 %v2249, 2147483648
    %v2252 = vxor.u32 %v2250, 2147483648
    %v2253 = vmul.f32 %v2251, 1.442695
    %v2254 = vpow.pop %v2253
    %v2255 = vmul.f32 %v2252, 1.442695
    %v2256 = vpow.pop %v2255
    %v2257 = vadd.f32 %v2254, 1.0
    %v2258 = vadd.f32 %v2256, 1.0
    %v2259 = vrcp.pop %v2257
    %v2260 = vmul.f32 1.0, %v2259
    %v2261 = vrcp.pop %v2258
    %v2262 = vmul.f32 1.0, %v2261
    %v2263 = vtanh.pop %v2249
    %v2264 = vtanh.pop %v2250
    %v2266 = vrot.slane %v1836, 1
    %v2269 = vmul.f32 %v2260, %v1836
    %v2270 = vmul.f32 %v2262, %v2266
    %2273 = vrot.lane.b32.xlu0 %v2263, 64
    %v2274 = vpop.permute.xlu0 %2273
    %2275 = vrot.lane.b32.xlu0 %v2264, 64
    %v2276 = vpop.permute.xlu0 %2275
    %v2279 = vmul.f32 %v2260, %v2274
    %v2280 = vmul.f32 %v2262, %v2276
    %2283 = vrot.lane.b32.xlu0 %v2279, 32
    %v2284 = vpop.permute.xlu0 %2283
    %2285 = vrot.lane.b32.xlu0 %v2280, 32
    %v2286 = vpop.permute.xlu0 %2285
    %v2289 = vadd.f32 %v2269, %v2284
    %v2290 = vadd.f32 %v2270, %v2286
    %v2291 = vtanh.pop %v2289
    %v2292 = vtanh.pop %v2290
    %2295 = vrot.lane.b32.xlu0 %v2291, 64
    %v2296 = vpop.permute.xlu0 %2295
    %2297 = vrot.lane.b32.xlu0 %v2292, 64
    %v2298 = vpop.permute.xlu0 %2297
    %v2301 = vmul.f32 %v2260, %v2296
    %v2302 = vmul.f32 %v2262, %v2298
    %v2305 = vrot.slane %v2302, 7
    %v2306 = vsel %vm380, %v2305, %v2301
    %2307 = vrot.lane.b32.xlu0 %v2306, 32
    %v2308 = vpop.permute.xlu0 %2307
    %v2309 = vsel %vm164, %v2308, 0
    %2311 = vmatprep.subr.mxu0 0.0
    %2312 = vmatpush1.msra.mxu0 %v1720
    %2313 = vmatprep.subr.mxu0 0.0
    %2314 = vmatpush1.msra.mxu0 %v1721
    %2315 = vmatprep.subr.mxu0 0.0
    %2316 = vmatpush1.msra.mxu0 %v1722
    %2317 = vmatprep.subr.mxu0 0.0
    %2318 = vmatpush1.msra.mxu0 %v1723
    %2319 = vmatprep.subr.mxu0 0.0
    %2320 = vmatpush1.msra.mxu0 0.0
    %2321 = vmatprep.subr.mxu0 0.0
    %2322 = vmatpush1.msra.mxu0 0.0
    %2323 = vmatprep.subr.mxu0 0.0
    %2324 = vmatpush1.msra.mxu0 0.0
    %2325 = vmatprep.subr.mxu0 0.0
    %2326 = vmatpush1.msra.mxu0 0.0
    %2327 = vmatprep.subr.mxu0 0.0
    %2328 = vmatpush1.msra.mxu0 0.0
    %2329 = vmatprep.subr.mxu0 0.0
    %2330 = vmatpush1.msra.mxu0 0.0
    %2331 = vmatprep.subr.mxu0 0.0
    %2332 = vmatpush1.msra.mxu0 0.0
    %2333 = vmatprep.subr.mxu0 0.0
    %2334 = vmatpush1.msra.mxu0 0.0
    %2335 = vmatprep.subr.mxu0 0.0
    %2336 = vmatpush1.msra.mxu0 0.0
    %2337 = vmatprep.subr.mxu0 0.0
    %2338 = vmatpush1.msra.mxu0 0.0
    %2339 = vmatprep.subr.mxu0 0.0
    %2340 = vmatpush1.msra.mxu0 0.0
    %2341 = vmatprep.subr.mxu0 0.0
    %2342 = vmatpush1.msra.mxu0 0.0
    %2343 = vmatprep.subr.mxu0 0.0
    %2344 = vmatpush1.msra.mxu0 0.0
    %2345 = vmatprep.subr.mxu0 0.0
    %2346 = vmatpush1.msra.mxu0 0.0
    %2347 = vmatprep.subr.mxu0 0.0
    %2348 = vmatpush1.msra.mxu0 0.0
    %2349 = vmatprep.subr.mxu0 0.0
    %2350 = vmatpush1.msra.mxu0 0.0
    %2351 = vmatprep.subr.mxu0 0.0
    %2352 = vmatpush1.msra.mxu0 0.0
    %2353 = vmatprep.subr.mxu0 0.0
    %2354 = vmatpush1.msra.mxu0 0.0
    %2355 = vmatprep.subr.mxu0 0.0
    %2356 = vmatpush1.msra.mxu0 0.0
    %2357 = vmatprep.subr.mxu0 0.0
    %2358 = vmatpush1.msra.mxu0 0.0
    %2359 = vmatprep.subr.mxu0 0.0
    %2360 = vmatpush1.msra.mxu0 0.0
    %2361 = vmatprep.subr.mxu0 0.0
    %2362 = vmatpush1.msra.mxu0 0.0
    %2363 = vmatprep.subr.mxu0 0.0
    %2364 = vmatpush1.msra.mxu0 0.0
    %2365 = vmatprep.subr.mxu0 0.0
    %2366 = vmatpush1.msra.mxu0 0.0
    %2367 = vmatprep.subr.mxu0 0.0
    %2368 = vmatpush1.msra.mxu0 0.0
    %2369 = vmatprep.subr.mxu0 0.0
    %2370 = vmatpush1.msra.mxu0 0.0
    %2371 = vmatprep.subr.mxu0 0.0
    %2372 = vmatpush1.msra.mxu0 0.0
    %2373 = vmatprep.subr.mxu0 0.0
    %2374 = vmatpush1.msra.mxu0 0.0
    %2375 = vmatprep.mubr.f32.mxu0 0.0
    %2376 = vmatmul.mubr.f32.gmra.mrb[0].mxu0 %v2309
    %v2377 = vpop.f32.mrb[0].mxu0
    %v2378 = vadd.f32 %v1847, %v2377
    %v2379 = vpop.f32.mrb[0].mxu0
    %2380 = vdwg.mxu0
    %v2383 = vunpack.c.l.s4 1966171168
    %v2384 = vunpack.c.0.s8 %v2383
    %v2385 = vlaneseq
    %v2386 = vshrl.u32 %v2385, 7
    %v2387 = vsub.s32 %v2384, %v2386
    %v2388 = vrot.slane %v2378, %v2387
    %v2389 = vcombine.high %v2388, %v2388
    %v2391 = vunpack.c.l.s4 1966171168
    %v2392 = vunpack.c.0.s8 %v2391
    %v2393 = vlaneseq
    %v2394 = vshrl.u32 %v2393, 7
    %v2395 = vsub.s32 %v2392, %v2394
    %v2396 = vrot.slane %v2388, %v2395
    %v2398 = vunpack.c.l.s4 1966171168
    %v2399 = vunpack.c.0.s8 %v2398
    %v2400 = vlaneseq
    %v2401 = vshrl.u32 %v2400, 7
    %v2402 = vsub.s32 %v2399, %v2401
    %v2403 = vrot.slane %v2389, %v2402
    %v2404 = vlaneseq
    %v2405 = vshrl.u32 %v2404, 7
    %v2406 = vsub.s32 0, %v2405
    %v2407 = vrot.slane %v2396, %v2406
    %v2408 = vlaneseq
    %v2409 = vshrl.u32 %v2408, 7
    %v2410 = vsub.s32 0, %v2409
    %v2411 = vrot.slane %v2403, %v2410
    %v2414 = vadd.f32 %v2407, %v1463
    %v2415 = vadd.f32 %v2411, %v1468
    %v2416 = vtanh.pop %v2414
    %v2417 = vtanh.pop %v2415
    %v2418 = vmul.f32 %v2416, %v1965
    %v2419 = vmul.f32 %v2417, %v1965
    %v2420 = vsel %vm164, %v2418, 0.0
    %2421 = vadd.xlane.f32.xlu0 %v2420
    %v2422 = vpop.xlane.xlu0 %2421
    %v2423 = vsel %vm164, %v2419, 0.0
    %2424 = vadd.xlane.f32.xlu0 %v2423
    %v2425 = vpop.xlane.xlu0 %2424
    %v2426 = vsub.f32 %v2140, 1.0
    %v2427 = vmul.f32 %v2426, 1e+30
    %v2429 = vlaneseq
    %v2430 = vshrl.u32 %v2429, 7
    %v2431 = vsub.s32 0, %v2430
    %v2432 = vrot.slane %v2427, %v2431
    %2434 = vbcast.lane.b32.xlu0 %v2432, 256
    %v2435 = vpop.permute.xlu0 %2434
    %v2436 = vlaneseq
    %v2437 = vshrl.u32 %v2436, 7
    %v2438 = vsub.s32 1, %v2437
    %v2439 = vrot.slane %v2427, %v2438
    %2441 = vbcast.lane.b32.xlu0 %v2439, 256
    %v2442 = vpop.permute.xlu0 %2441
    %v2445 = vadd.f32 %v2422, %v2435
    %v2446 = vadd.f32 %v2425, %v2442
    %2449 = vset.pattern.permute.xlu0 0
    %2450 = vperm.xlu0 %2449, %v2445
    %v2451 = vpop.permute.xlu0 %2450
    %2452 = vset.pattern.permute.xlu0 0
    %2453 = vperm.xlu0 %2452, %v2446
    %v2454 = vpop.permute.xlu0 %2453
    %v2455 = vlaneseq
    %v2456 = vshrl.u32 %v2455, 7
    %v2457 = vsub.s32 %v1731, %v2456
    %v2458 = vrot.slane %v2451, %v2457
    %v2459 = vlaneseq
    %v2460 = vshrl.u32 %v2459, 7
    %v2461 = vsub.s32 %v1731, %v2460
    %v2462 = vrot.slane %v2454, %v2461
    %v2463 = vsel %vm380, %v2462, %v2458
    %v2465 = vsel %vm1989, %v2463, -inf
    %2466 = vmax.xlane.f32.xlu0 %v2465
    %v2467 = vpop.xlane.xlu0 %2466
    %v2469 = vlaneseq
    %v2470 = vshrl.u32 %v2469, 7
    %v2471 = vsub.s32 0, %v2470
    %v2472 = vrot.slane %v2467, %v2471
    %v2473 = vlaneseq
    %v2474 = vshrl.u32 %v2473, 7
    %v2475 = vsub.s32 1, %v2474
    %v2476 = vrot.slane %v2467, %v2475
    %v2479 = vsub.f32 %v2445, %v2472
    %v2480 = vsub.f32 %v2446, %v2476
    %v2481 = vmul.f32 %v2479, 1.442695
    %v2482 = vpow.pop %v2481
    %v2483 = vmul.f32 %v2480, 1.442695
    %v2484 = vpow.pop %v2483
    %2487 = vset.pattern.permute.xlu0 0
    %2488 = vperm.xlu0 %2487, %v2482
    %v2489 = vpop.permute.xlu0 %2488
    %2490 = vset.pattern.permute.xlu0 0
    %2491 = vperm.xlu0 %2490, %v2484
    %v2492 = vpop.permute.xlu0 %2491
    %v2493 = vlaneseq
    %v2494 = vshrl.u32 %v2493, 7
    %v2495 = vsub.s32 %v1731, %v2494
    %v2496 = vrot.slane %v2489, %v2495
    %v2497 = vlaneseq
    %v2498 = vshrl.u32 %v2497, 7
    %v2499 = vsub.s32 %v1731, %v2498
    %v2500 = vrot.slane %v2492, %v2499
    %v2501 = vsel %vm380, %v2500, %v2496
    %v2503 = vsel %vm1989, %v2501, 0.0
    %2504 = vadd.xlane.f32.xlu0 %v2503
    %v2505 = vpop.xlane.xlu0 %2504
    %v2507 = vlaneseq
    %v2508 = vshrl.u32 %v2507, 7
    %v2509 = vsub.s32 0, %v2508
    %v2510 = vrot.slane %v2505, %v2509
    %v2511 = vlaneseq
    %v2512 = vshrl.u32 %v2511, 7
    %v2513 = vsub.s32 1, %v2512
    %v2514 = vrot.slane %v2505, %v2513
    %v2517 = vrcp.pop %v2510
    %v2518 = vmul.f32 %v2482, %v2517
    %v2519 = vrcp.pop %v2514
    %v2520 = vmul.f32 %v2484, %v2519
    %2522 = vset.pattern.permute.xlu0 0
    %2523 = vperm.xlu0 %2522, %v2518
    %v2524 = vpop.permute.xlu0 %2523
    %2527 = vset.pattern.permute.xlu0 0
    %2528 = vperm.xlu0 %2527, %v2520
    %v2529 = vpop.permute.xlu0 %2528
    %v2531 = vmul.f32 %v1548, %v2524
    %v2532 = vmul.f32 %v1553, %v2529
    %v2533 = vsel %vm164, %v2531, 0.0
    %v2534 = vrot.slane %v2533, 4
    %v2535 = vadd.f32 %v2533, %v2534
    %v2536 = vrot.slane %v2535, 2
    %v2537 = vadd.f32 %v2535, %v2536
    %v2538 = vrot.slane %v2537, 1
    %v2539 = vadd.f32 %v2537, %v2538
    %v2540 = vsel %vm164, %v2532, 0.0
    %v2541 = vrot.slane %v2540, 4
    %v2542 = vadd.f32 %v2540, %v2541
    %v2543 = vrot.slane %v2542, 2
    %v2544 = vadd.f32 %v2542, %v2543
    %v2545 = vrot.slane %v2544, 1
    %v2546 = vadd.f32 %v2544, %v2545
    %v2547 = vrot.slane %v2378, 1
    %2548 = vrot.lane.b32.xlu0 %v2378, 96
    %v2549 = vpop.permute.xlu0 %2548
    %2550 = vrot.lane.b32.xlu0 %v2547, 96
    %v2551 = vpop.permute.xlu0 %2550
    %v2554 = vadd.f32 %v2539, %v2549
    %v2555 = vadd.f32 %v2546, %v2551
    %v2556 = vtanh.pop %v2554
    %v2557 = vtanh.pop %v2555
    %v2559 = vlaneseq
    %v2560 = vshrl.u32 %v2559, 7
    %v2561 = vsub.s32 0, %v2560
    %v2562 = vrot.slane %v2140, %v2561
    %2564 = vbcast.lane.b32.xlu0 %v2562, 256
    %v2565 = vpop.permute.xlu0 %2564
    %v2566 = vlaneseq
    %v2567 = vshrl.u32 %v2566, 7
    %v2568 = vsub.s32 1, %v2567
    %v2569 = vrot.slane %v2140, %v2568
    %2571 = vbcast.lane.b32.xlu0 %v2569, 256
    %v2572 = vpop.permute.xlu0 %2571
    %v2575 = vmul.f32 %v2518, %v2565
    %v2576 = vmul.f32 %v2520, %v2572
    %2579 = vset.pattern.permute.xlu0 0
    %2580 = vperm.xlu0 %2579, %v2575
    %v2581 = vpop.permute.xlu0 %2580
    %2582 = vset.pattern.permute.xlu0 0
    %2583 = vperm.xlu0 %2582, %v2576
    %v2584 = vpop.permute.xlu0 %2583
    %v2585 = vlaneseq
    %v2586 = vshrl.u32 %v2585, 7
    %v2587 = vsub.s32 %v1731, %v2586
    %v2588 = vrot.slane %v2581, %v2587
    %v2589 = vlaneseq
    %v2590 = vshrl.u32 %v2589, 7
    %v2591 = vsub.s32 %v1731, %v2590
    %v2592 = vrot.slane %v2584, %v2591
    %v2593 = vsel %vm380, %v2592, %v2588
    %v2595 = vsel %vm1989, %v2593, -inf
    %2596 = vmax.xlane.f32.xlu0 %v2595
    %v2597 = vpop.xlane.xlu0 %2596
    %v2599 = vlaneseq
    %v2600 = vshrl.u32 %v2599, 7
    %v2601 = vsub.s32 0, %v2600
    %v2602 = vrot.slane %v2597, %v2601
    %v2603 = vlaneseq
    %v2604 = vshrl.u32 %v2603, 7
    %v2605 = vsub.s32 1, %v2604
    %v2606 = vrot.slane %v2597, %v2605
    %vm2609 = vcmp.eq.f32.partialorder %v2575, %v2602
    %vm2610 = vcmp.eq.f32.partialorder %v2576, %v2606
    %v2611 = vsel %vm2609, %v2112, 8.0
    %v2612 = vsel %vm2610, %v2112, 8.0
    %2615 = vset.pattern.permute.xlu0 0
    %2616 = vperm.xlu0 %2615, %v2611
    %v2617 = vpop.permute.xlu0 %2616
    %2618 = vset.pattern.permute.xlu0 0
    %2619 = vperm.xlu0 %2618, %v2612
    %v2620 = vpop.permute.xlu0 %2619
    %v2621 = vlaneseq
    %v2622 = vshrl.u32 %v2621, 7
    %v2623 = vsub.s32 %v1731, %v2622
    %v2624 = vrot.slane %v2617, %v2623
    %v2625 = vlaneseq
    %v2626 = vshrl.u32 %v2625, 7
    %v2627 = vsub.s32 %v1731, %v2626
    %v2628 = vrot.slane %v2620, %v2627
    %v2629 = vsel %vm380, %v2628, %v2624
    %v2631 = vsel %vm1989, %v2629, inf
    %2632 = vmin.xlane.f32.xlu0 %v2631
    %v2633 = vpop.xlane.xlu0 %2632
    %vm2634 = vcmp.eq.f32.partialorder %v1732, %v2633
    %v2635 = vsel %vm2634, 1, 0
    %v2636 = vcvt.s32.f32 %v2635
    %v2637 = vsub.f32 1.0, %v2636
    %v2638 = vmul.f32 %v2140, %v2637
    %v2639 = vlaneseq
    %v2640 = vshrl.u32 %v2639, 7
    %v2641 = vsub.s32 0, %v2640
    %v2642 = vrot.slane %v2636, %v2641
    %2644 = vbcast.lane.b32.xlu0 %v2642, 256
    %v2645 = vpop.permute.xlu0 %2644
    %v2646 = vlaneseq
    %v2647 = vshrl.u32 %v2646, 7
    %v2648 = vsub.s32 1, %v2647
    %v2649 = vrot.slane %v2636, %v2648
    %2651 = vbcast.lane.b32.xlu0 %v2649, 256
    %v2652 = vpop.permute.xlu0 %2651
    %v2653 = vmul.f32 %v2645, %v1634
    %v2654 = vmul.f32 %v2652, %v1639
    %v2655 = vrot.slane %v2653, 4
    %v2656 = vadd.f32 %v2653, %v2655
    %v2657 = vrot.slane %v2656, 2
    %v2658 = vadd.f32 %v2656, %v2657
    %v2659 = vrot.slane %v2658, 1
    %v2660 = vadd.f32 %v2658, %v2659
    %v2661 = vrot.slane %v2654, 4
    %v2662 = vadd.f32 %v2654, %v2661
    %v2663 = vrot.slane %v2662, 2
    %v2664 = vadd.f32 %v2662, %v2663
    %v2665 = vrot.slane %v2664, 1
    %v2666 = vadd.f32 %v2664, %v2665
    %v2669 = vrot.slane %v2557, 7
    %v2670 = vsel %vm380, %v2669, %v2556
    %v2671 = vsel %vm164, %v2670, 0
    %2673 = vmatprep.subr.mxu0 0.0
    %2674 = vmatpush1.msra.mxu0 %v1716
    %2675 = vmatprep.subr.mxu0 0.0
    %2676 = vmatpush1.msra.mxu0 %v1717
    %2677 = vmatprep.subr.mxu0 0.0
    %2678 = vmatpush1.msra.mxu0 %v1718
    %2679 = vmatprep.subr.mxu0 0.0
    %2680 = vmatpush1.msra.mxu0 %v1719
    %2681 = vmatprep.subr.mxu0 0.0
    %2682 = vmatpush1.msra.mxu0 0.0
    %2683 = vmatprep.subr.mxu0 0.0
    %2684 = vmatpush1.msra.mxu0 0.0
    %2685 = vmatprep.subr.mxu0 0.0
    %2686 = vmatpush1.msra.mxu0 0.0
    %2687 = vmatprep.subr.mxu0 0.0
    %2688 = vmatpush1.msra.mxu0 0.0
    %2689 = vmatprep.subr.mxu0 0.0
    %2690 = vmatpush1.msra.mxu0 0.0
    %2691 = vmatprep.subr.mxu0 0.0
    %2692 = vmatpush1.msra.mxu0 0.0
    %2693 = vmatprep.subr.mxu0 0.0
    %2694 = vmatpush1.msra.mxu0 0.0
    %2695 = vmatprep.subr.mxu0 0.0
    %2696 = vmatpush1.msra.mxu0 0.0
    %2697 = vmatprep.subr.mxu0 0.0
    %2698 = vmatpush1.msra.mxu0 0.0
    %2699 = vmatprep.subr.mxu0 0.0
    %2700 = vmatpush1.msra.mxu0 0.0
    %2701 = vmatprep.subr.mxu0 0.0
    %2702 = vmatpush1.msra.mxu0 0.0
    %2703 = vmatprep.subr.mxu0 0.0
    %2704 = vmatpush1.msra.mxu0 0.0
    %2705 = vmatprep.subr.mxu0 0.0
    %2706 = vmatpush1.msra.mxu0 0.0
    %2707 = vmatprep.subr.mxu0 0.0
    %2708 = vmatpush1.msra.mxu0 0.0
    %2709 = vmatprep.subr.mxu0 0.0
    %2710 = vmatpush1.msra.mxu0 0.0
    %2711 = vmatprep.subr.mxu0 0.0
    %2712 = vmatpush1.msra.mxu0 0.0
    %2713 = vmatprep.subr.mxu0 0.0
    %2714 = vmatpush1.msra.mxu0 0.0
    %2715 = vmatprep.subr.mxu0 0.0
    %2716 = vmatpush1.msra.mxu0 0.0
    %2717 = vmatprep.subr.mxu0 0.0
    %2718 = vmatpush1.msra.mxu0 0.0
    %2719 = vmatprep.subr.mxu0 0.0
    %2720 = vmatpush1.msra.mxu0 0.0
    %2721 = vmatprep.subr.mxu0 0.0
    %2722 = vmatpush1.msra.mxu0 0.0
    %2723 = vmatprep.subr.mxu0 0.0
    %2724 = vmatpush1.msra.mxu0 0.0
    %2725 = vmatprep.subr.mxu0 0.0
    %2726 = vmatpush1.msra.mxu0 0.0
    %2727 = vmatprep.subr.mxu0 0.0
    %2728 = vmatpush1.msra.mxu0 0.0
    %2729 = vmatprep.subr.mxu0 0.0
    %2730 = vmatpush1.msra.mxu0 0.0
    %2731 = vmatprep.subr.mxu0 0.0
    %2732 = vmatpush1.msra.mxu0 0.0
    %2733 = vmatprep.subr.mxu0 0.0
    %2734 = vmatpush1.msra.mxu0 0.0
    %2735 = vmatprep.subr.mxu0 0.0
    %2736 = vmatpush1.msra.mxu0 0.0
    %2737 = vmatprep.mubr.f32.mxu0 0.0
    %2738 = vmatmul.mubr.f32.gmra.mrb[0].mxu0 %v2671
    %v2739 = vpop.f32.mrb[0].mxu0
    %v2740 = vadd.f32 0.0, %v2739
    %v2741 = vpop.f32.mrb[0].mxu0
    %2742 = vdwg.mxu0
    %v2744 = vrot.slane %v2740, 1
    %v2747 = vadd.f32 %v2660, %v2740
    %v2748 = vadd.f32 %v2666, %v2744
    %v2749 = vxor.u32 %v2747, 2147483648
    %v2750 = vxor.u32 %v2748, 2147483648
    %v2751 = vmul.f32 %v2749, 1.442695
    %v2752 = vpow.pop %v2751
    %v2753 = vmul.f32 %v2750, 1.442695
    %v2754 = vpow.pop %v2753
    %v2755 = vadd.f32 %v2752, 1.0
    %v2756 = vadd.f32 %v2754, 1.0
    %v2757 = vrcp.pop %v2755
    %v2758 = vmul.f32 1.0, %v2757
    %v2759 = vrcp.pop %v2756
    %v2760 = vmul.f32 1.0, %v2759
    %v2761 = vtanh.pop %v2747
    %v2762 = vtanh.pop %v2748
    %v2763 = vmul.f32 %v2758, %v2289
    %v2764 = vmul.f32 %v2760, %v2290
    %2767 = vrot.lane.b32.xlu0 %v2761, 64
    %v2768 = vpop.permute.xlu0 %2767
    %2769 = vrot.lane.b32.xlu0 %v2762, 64
    %v2770 = vpop.permute.xlu0 %2769
    %v2773 = vmul.f32 %v2758, %v2768
    %v2774 = vmul.f32 %v2760, %v2770
    %2777 = vrot.lane.b32.xlu0 %v2773, 32
    %v2778 = vpop.permute.xlu0 %2777
    %2779 = vrot.lane.b32.xlu0 %v2774, 32
    %v2780 = vpop.permute.xlu0 %2779
    %v2783 = vadd.f32 %v2763, %v2778
    %v2784 = vadd.f32 %v2764, %v2780
    %v2785 = vtanh.pop %v2783
    %v2786 = vtanh.pop %v2784
    %2789 = vrot.lane.b32.xlu0 %v2785, 64
    %v2790 = vpop.permute.xlu0 %2789
    %2791 = vrot.lane.b32.xlu0 %v2786, 64
    %v2792 = vpop.permute.xlu0 %2791
    %v2795 = vmul.f32 %v2758, %v2790
    %v2796 = vmul.f32 %v2760, %v2792
    %v2799 = vrot.slane %v2796, 7
    %v2800 = vsel %vm380, %v2799, %v2795
    %2801 = vrot.lane.b32.xlu0 %v2800, 32
    %v2802 = vpop.permute.xlu0 %2801
    %v2803 = vsel %vm164, %v2802, 0
    %2805 = vmatprep.subr.mxu0 0.0
    %2806 = vmatpush1.msra.mxu0 %v1720
    %2807 = vmatprep.subr.mxu0 0.0
    %2808 = vmatpush1.msra.mxu0 %v1721
    %2809 = vmatprep.subr.mxu0 0.0
    %2810 = vmatpush1.msra.mxu0 %v1722
    %2811 = vmatprep.subr.mxu0 0.0
    %2812 = vmatpush1.msra.mxu0 %v1723
    %2813 = vmatprep.subr.mxu0 0.0
    %2814 = vmatpush1.msra.mxu0 0.0
    %2815 = vmatprep.subr.mxu0 0.0
    %2816 = vmatpush1.msra.mxu0 0.0
    %2817 = vmatprep.subr.mxu0 0.0
    %2818 = vmatpush1.msra.mxu0 0.0
    %2819 = vmatprep.subr.mxu0 0.0
    %2820 = vmatpush1.msra.mxu0 0.0
    %2821 = vmatprep.subr.mxu0 0.0
    %2822 = vmatpush1.msra.mxu0 0.0
    %2823 = vmatprep.subr.mxu0 0.0
    %2824 = vmatpush1.msra.mxu0 0.0
    %2825 = vmatprep.subr.mxu0 0.0
    %2826 = vmatpush1.msra.mxu0 0.0
    %2827 = vmatprep.subr.mxu0 0.0
    %2828 = vmatpush1.msra.mxu0 0.0
    %2829 = vmatprep.subr.mxu0 0.0
    %2830 = vmatpush1.msra.mxu0 0.0
    %2831 = vmatprep.subr.mxu0 0.0
    %2832 = vmatpush1.msra.mxu0 0.0
    %2833 = vmatprep.subr.mxu0 0.0
    %2834 = vmatpush1.msra.mxu0 0.0
    %2835 = vmatprep.subr.mxu0 0.0
    %2836 = vmatpush1.msra.mxu0 0.0
    %2837 = vmatprep.subr.mxu0 0.0
    %2838 = vmatpush1.msra.mxu0 0.0
    %2839 = vmatprep.subr.mxu0 0.0
    %2840 = vmatpush1.msra.mxu0 0.0
    %2841 = vmatprep.subr.mxu0 0.0
    %2842 = vmatpush1.msra.mxu0 0.0
    %2843 = vmatprep.subr.mxu0 0.0
    %2844 = vmatpush1.msra.mxu0 0.0
    %2845 = vmatprep.subr.mxu0 0.0
    %2846 = vmatpush1.msra.mxu0 0.0
    %2847 = vmatprep.subr.mxu0 0.0
    %2848 = vmatpush1.msra.mxu0 0.0
    %2849 = vmatprep.subr.mxu0 0.0
    %2850 = vmatpush1.msra.mxu0 0.0
    %2851 = vmatprep.subr.mxu0 0.0
    %2852 = vmatpush1.msra.mxu0 0.0
    %2853 = vmatprep.subr.mxu0 0.0
    %2854 = vmatpush1.msra.mxu0 0.0
    %2855 = vmatprep.subr.mxu0 0.0
    %2856 = vmatpush1.msra.mxu0 0.0
    %2857 = vmatprep.subr.mxu0 0.0
    %2858 = vmatpush1.msra.mxu0 0.0
    %2859 = vmatprep.subr.mxu0 0.0
    %2860 = vmatpush1.msra.mxu0 0.0
    %2861 = vmatprep.subr.mxu0 0.0
    %2862 = vmatpush1.msra.mxu0 0.0
    %2863 = vmatprep.subr.mxu0 0.0
    %2864 = vmatpush1.msra.mxu0 0.0
    %2865 = vmatprep.subr.mxu0 0.0
    %2866 = vmatpush1.msra.mxu0 0.0
    %2867 = vmatprep.subr.mxu0 0.0
    %2868 = vmatpush1.msra.mxu0 0.0
    %2869 = vmatprep.mubr.f32.mxu0 0.0
    %2870 = vmatmul.mubr.f32.gmra.mrb[0].mxu0 %v2803
    %v2871 = vpop.f32.mrb[0].mxu0
    %v2872 = vadd.f32 %v1847, %v2871
    %v2873 = vpop.f32.mrb[0].mxu0
    %2874 = vdwg.mxu0
    %v2877 = vunpack.c.l.s4 1966171168
    %v2878 = vunpack.c.0.s8 %v2877
    %v2879 = vlaneseq
    %v2880 = vshrl.u32 %v2879, 7
    %v2881 = vsub.s32 %v2878, %v2880
    %v2882 = vrot.slane %v2872, %v2881
    %v2883 = vcombine.high %v2882, %v2882
    %v2885 = vunpack.c.l.s4 1966171168
    %v2886 = vunpack.c.0.s8 %v2885
    %v2887 = vlaneseq
    %v2888 = vshrl.u32 %v2887, 7
    %v2889 = vsub.s32 %v2886, %v2888
    %v2890 = vrot.slane %v2882, %v2889
    %v2892 = vunpack.c.l.s4 1966171168
    %v2893 = vunpack.c.0.s8 %v2892
    %v2894 = vlaneseq
    %v2895 = vshrl.u32 %v2894, 7
    %v2896 = vsub.s32 %v2893, %v2895
    %v2897 = vrot.slane %v2883, %v2896
    %v2898 = vlaneseq
    %v2899 = vshrl.u32 %v2898, 7
    %v2900 = vsub.s32 0, %v2899
    %v2901 = vrot.slane %v2890, %v2900
    %v2902 = vlaneseq
    %v2903 = vshrl.u32 %v2902, 7
    %v2904 = vsub.s32 0, %v2903
    %v2905 = vrot.slane %v2897, %v2904
    %v2908 = vadd.f32 %v2901, %v1463
    %v2909 = vadd.f32 %v2905, %v1468
    %v2910 = vtanh.pop %v2908
    %v2911 = vtanh.pop %v2909
    %v2912 = vmul.f32 %v2910, %v1965
    %v2913 = vmul.f32 %v2911, %v1965
    %v2914 = vsel %vm164, %v2912, 0.0
    %2915 = vadd.xlane.f32.xlu0 %v2914
    %v2916 = vpop.xlane.xlu0 %2915
    %v2917 = vsel %vm164, %v2913, 0.0
    %2918 = vadd.xlane.f32.xlu0 %v2917
    %v2919 = vpop.xlane.xlu0 %2918
    %v2920 = vsub.f32 %v2638, 1.0
    %v2921 = vmul.f32 %v2920, 1e+30
    %v2923 = vlaneseq
    %v2924 = vshrl.u32 %v2923, 7
    %v2925 = vsub.s32 0, %v2924
    %v2926 = vrot.slane %v2921, %v2925
    %2928 = vbcast.lane.b32.xlu0 %v2926, 256
    %v2929 = vpop.permute.xlu0 %2928
    %v2930 = vlaneseq
    %v2931 = vshrl.u32 %v2930, 7
    %v2932 = vsub.s32 1, %v2931
    %v2933 = vrot.slane %v2921, %v2932
    %2935 = vbcast.lane.b32.xlu0 %v2933, 256
    %v2936 = vpop.permute.xlu0 %2935
    %v2939 = vadd.f32 %v2916, %v2929
    %v2940 = vadd.f32 %v2919, %v2936
    %2943 = vset.pattern.permute.xlu0 0
    %2944 = vperm.xlu0 %2943, %v2939
    %v2945 = vpop.permute.xlu0 %2944
    %2946 = vset.pattern.permute.xlu0 0
    %2947 = vperm.xlu0 %2946, %v2940
    %v2948 = vpop.permute.xlu0 %2947
    %v2949 = vlaneseq
    %v2950 = vshrl.u32 %v2949, 7
    %v2951 = vsub.s32 %v1731, %v2950
    %v2952 = vrot.slane %v2945, %v2951
    %v2953 = vlaneseq
    %v2954 = vshrl.u32 %v2953, 7
    %v2955 = vsub.s32 %v1731, %v2954
    %v2956 = vrot.slane %v2948, %v2955
    %v2957 = vsel %vm380, %v2956, %v2952
    %v2959 = vsel %vm1989, %v2957, -inf
    %2960 = vmax.xlane.f32.xlu0 %v2959
    %v2961 = vpop.xlane.xlu0 %2960
    %v2963 = vlaneseq
    %v2964 = vshrl.u32 %v2963, 7
    %v2965 = vsub.s32 0, %v2964
    %v2966 = vrot.slane %v2961, %v2965
    %v2967 = vlaneseq
    %v2968 = vshrl.u32 %v2967, 7
    %v2969 = vsub.s32 1, %v2968
    %v2970 = vrot.slane %v2961, %v2969
    %v2973 = vsub.f32 %v2939, %v2966
    %v2974 = vsub.f32 %v2940, %v2970
    %v2975 = vmul.f32 %v2973, 1.442695
    %v2976 = vpow.pop %v2975
    %v2977 = vmul.f32 %v2974, 1.442695
    %v2978 = vpow.pop %v2977
    %2981 = vset.pattern.permute.xlu0 0
    %2982 = vperm.xlu0 %2981, %v2976
    %v2983 = vpop.permute.xlu0 %2982
    %2984 = vset.pattern.permute.xlu0 0
    %2985 = vperm.xlu0 %2984, %v2978
    %v2986 = vpop.permute.xlu0 %2985
    %v2987 = vlaneseq
    %v2988 = vshrl.u32 %v2987, 7
    %v2989 = vsub.s32 %v1731, %v2988
    %v2990 = vrot.slane %v2983, %v2989
    %v2991 = vlaneseq
    %v2992 = vshrl.u32 %v2991, 7
    %v2993 = vsub.s32 %v1731, %v2992
    %v2994 = vrot.slane %v2986, %v2993
    %v2995 = vsel %vm380, %v2994, %v2990
    %v2997 = vsel %vm1989, %v2995, 0.0
    %2998 = vadd.xlane.f32.xlu0 %v2997
    %v2999 = vpop.xlane.xlu0 %2998
    %v3001 = vlaneseq
    %v3002 = vshrl.u32 %v3001, 7
    %v3003 = vsub.s32 0, %v3002
    %v3004 = vrot.slane %v2999, %v3003
    %v3005 = vlaneseq
    %v3006 = vshrl.u32 %v3005, 7
    %v3007 = vsub.s32 1, %v3006
    %v3008 = vrot.slane %v2999, %v3007
    %v3011 = vrcp.pop %v3004
    %v3012 = vmul.f32 %v2976, %v3011
    %v3013 = vrcp.pop %v3008
    %v3014 = vmul.f32 %v2978, %v3013
    %3016 = vset.pattern.permute.xlu0 0
    %3017 = vperm.xlu0 %3016, %v3012
    %v3018 = vpop.permute.xlu0 %3017
    %3021 = vset.pattern.permute.xlu0 0
    %3022 = vperm.xlu0 %3021, %v3014
    %v3023 = vpop.permute.xlu0 %3022
    %v3025 = vmul.f32 %v1548, %v3018
    %v3026 = vmul.f32 %v1553, %v3023
    %v3027 = vsel %vm164, %v3025, 0.0
    %v3028 = vrot.slane %v3027, 4
    %v3029 = vadd.f32 %v3027, %v3028
    %v3030 = vrot.slane %v3029, 2
    %v3031 = vadd.f32 %v3029, %v3030
    %v3032 = vrot.slane %v3031, 1
    %v3033 = vadd.f32 %v3031, %v3032
    %v3034 = vsel %vm164, %v3026, 0.0
    %v3035 = vrot.slane %v3034, 4
    %v3036 = vadd.f32 %v3034, %v3035
    %v3037 = vrot.slane %v3036, 2
    %v3038 = vadd.f32 %v3036, %v3037
    %v3039 = vrot.slane %v3038, 1
    %v3040 = vadd.f32 %v3038, %v3039
    %v3041 = vrot.slane %v2872, 1
    %3042 = vrot.lane.b32.xlu0 %v2872, 96
    %v3043 = vpop.permute.xlu0 %3042
    %3044 = vrot.lane.b32.xlu0 %v3041, 96
    %v3045 = vpop.permute.xlu0 %3044
    %v3048 = vadd.f32 %v3033, %v3043
    %v3049 = vadd.f32 %v3040, %v3045
    %v3050 = vtanh.pop %v3048
    %v3051 = vtanh.pop %v3049
    %v3053 = vlaneseq
    %v3054 = vshrl.u32 %v3053, 7
    %v3055 = vsub.s32 0, %v3054
    %v3056 = vrot.slane %v2638, %v3055
    %3058 = vbcast.lane.b32.xlu0 %v3056, 256
    %v3059 = vpop.permute.xlu0 %3058
    %v3060 = vlaneseq
    %v3061 = vshrl.u32 %v3060, 7
    %v3062 = vsub.s32 1, %v3061
    %v3063 = vrot.slane %v2638, %v3062
    %3065 = vbcast.lane.b32.xlu0 %v3063, 256
    %v3066 = vpop.permute.xlu0 %3065
    %v3069 = vmul.f32 %v3012, %v3059
    %v3070 = vmul.f32 %v3014, %v3066
    %3073 = vset.pattern.permute.xlu0 0
    %3074 = vperm.xlu0 %3073, %v3069
    %v3075 = vpop.permute.xlu0 %3074
    %3076 = vset.pattern.permute.xlu0 0
    %3077 = vperm.xlu0 %3076, %v3070
    %v3078 = vpop.permute.xlu0 %3077
    %v3079 = vlaneseq
    %v3080 = vshrl.u32 %v3079, 7
    %v3081 = vsub.s32 %v1731, %v3080
    %v3082 = vrot.slane %v3075, %v3081
    %v3083 = vlaneseq
    %v3084 = vshrl.u32 %v3083, 7
    %v3085 = vsub.s32 %v1731, %v3084
    %v3086 = vrot.slane %v3078, %v3085
    %v3087 = vsel %vm380, %v3086, %v3082
    %v3089 = vsel %vm1989, %v3087, -inf
    %3090 = vmax.xlane.f32.xlu0 %v3089
    %v3091 = vpop.xlane.xlu0 %3090
    %v3093 = vlaneseq
    %v3094 = vshrl.u32 %v3093, 7
    %v3095 = vsub.s32 0, %v3094
    %v3096 = vrot.slane %v3091, %v3095
    %v3097 = vlaneseq
    %v3098 = vshrl.u32 %v3097, 7
    %v3099 = vsub.s32 1, %v3098
    %v3100 = vrot.slane %v3091, %v3099
    %vm3103 = vcmp.eq.f32.partialorder %v3069, %v3096
    %vm3104 = vcmp.eq.f32.partialorder %v3070, %v3100
    %v3105 = vsel %vm3103, %v2112, 8.0
    %v3106 = vsel %vm3104, %v2112, 8.0
    %3109 = vset.pattern.permute.xlu0 0
    %3110 = vperm.xlu0 %3109, %v3105
    %v3111 = vpop.permute.xlu0 %3110
    %3112 = vset.pattern.permute.xlu0 0
    %3113 = vperm.xlu0 %3112, %v3106
    %v3114 = vpop.permute.xlu0 %3113
    %v3115 = vlaneseq
    %v3116 = vshrl.u32 %v3115, 7
    %v3117 = vsub.s32 %v1731, %v3116
    %v3118 = vrot.slane %v3111, %v3117
    %v3119 = vlaneseq
    %v3120 = vshrl.u32 %v3119, 7
    %v3121 = vsub.s32 %v1731, %v3120
    %v3122 = vrot.slane %v3114, %v3121
    %v3123 = vsel %vm380, %v3122, %v3118
    %v3125 = vsel %vm1989, %v3123, inf
    %3126 = vmin.xlane.f32.xlu0 %v3125
    %v3127 = vpop.xlane.xlu0 %3126
    %vm3128 = vcmp.eq.f32.partialorder %v1732, %v3127
    %v3129 = vsel %vm3128, 1, 0
    %v3130 = vcvt.s32.f32 %v3129
    %v3131 = vsub.f32 1.0, %v3130
    %v3132 = vmul.f32 %v2638, %v3131
    %v3133 = vlaneseq
    %v3134 = vshrl.u32 %v3133, 7
    %v3135 = vsub.s32 0, %v3134
    %v3136 = vrot.slane %v3130, %v3135
    %3138 = vbcast.lane.b32.xlu0 %v3136, 256
    %v3139 = vpop.permute.xlu0 %3138
    %v3140 = vlaneseq
    %v3141 = vshrl.u32 %v3140, 7
    %v3142 = vsub.s32 1, %v3141
    %v3143 = vrot.slane %v3130, %v3142
    %3145 = vbcast.lane.b32.xlu0 %v3143, 256
    %v3146 = vpop.permute.xlu0 %3145
    %v3147 = vmul.f32 %v3139, %v1634
    %v3148 = vmul.f32 %v3146, %v1639
    %v3149 = vrot.slane %v3147, 4
    %v3150 = vadd.f32 %v3147, %v3149
    %v3151 = vrot.slane %v3150, 2
    %v3152 = vadd.f32 %v3150, %v3151
    %v3153 = vrot.slane %v3152, 1
    %v3154 = vadd.f32 %v3152, %v3153
    %v3155 = vrot.slane %v3148, 4
    %v3156 = vadd.f32 %v3148, %v3155
    %v3157 = vrot.slane %v3156, 2
    %v3158 = vadd.f32 %v3156, %v3157
    %v3159 = vrot.slane %v3158, 1
    %v3160 = vadd.f32 %v3158, %v3159
    %v3163 = vrot.slane %v3051, 7
    %v3164 = vsel %vm380, %v3163, %v3050
    %v3165 = vsel %vm164, %v3164, 0
    %3167 = vmatprep.subr.mxu0 0.0
    %3168 = vmatpush1.msra.mxu0 %v1716
    %3169 = vmatprep.subr.mxu0 0.0
    %3170 = vmatpush1.msra.mxu0 %v1717
    %3171 = vmatprep.subr.mxu0 0.0
    %3172 = vmatpush1.msra.mxu0 %v1718
    %3173 = vmatprep.subr.mxu0 0.0
    %3174 = vmatpush1.msra.mxu0 %v1719
    %3175 = vmatprep.subr.mxu0 0.0
    %3176 = vmatpush1.msra.mxu0 0.0
    %3177 = vmatprep.subr.mxu0 0.0
    %3178 = vmatpush1.msra.mxu0 0.0
    %3179 = vmatprep.subr.mxu0 0.0
    %3180 = vmatpush1.msra.mxu0 0.0
    %3181 = vmatprep.subr.mxu0 0.0
    %3182 = vmatpush1.msra.mxu0 0.0
    %3183 = vmatprep.subr.mxu0 0.0
    %3184 = vmatpush1.msra.mxu0 0.0
    %3185 = vmatprep.subr.mxu0 0.0
    %3186 = vmatpush1.msra.mxu0 0.0
    %3187 = vmatprep.subr.mxu0 0.0
    %3188 = vmatpush1.msra.mxu0 0.0
    %3189 = vmatprep.subr.mxu0 0.0
    %3190 = vmatpush1.msra.mxu0 0.0
    %3191 = vmatprep.subr.mxu0 0.0
    %3192 = vmatpush1.msra.mxu0 0.0
    %3193 = vmatprep.subr.mxu0 0.0
    %3194 = vmatpush1.msra.mxu0 0.0
    %3195 = vmatprep.subr.mxu0 0.0
    %3196 = vmatpush1.msra.mxu0 0.0
    %3197 = vmatprep.subr.mxu0 0.0
    %3198 = vmatpush1.msra.mxu0 0.0
    %3199 = vmatprep.subr.mxu0 0.0
    %3200 = vmatpush1.msra.mxu0 0.0
    %3201 = vmatprep.subr.mxu0 0.0
    %3202 = vmatpush1.msra.mxu0 0.0
    %3203 = vmatprep.subr.mxu0 0.0
    %3204 = vmatpush1.msra.mxu0 0.0
    %3205 = vmatprep.subr.mxu0 0.0
    %3206 = vmatpush1.msra.mxu0 0.0
    %3207 = vmatprep.subr.mxu0 0.0
    %3208 = vmatpush1.msra.mxu0 0.0
    %3209 = vmatprep.subr.mxu0 0.0
    %3210 = vmatpush1.msra.mxu0 0.0
    %3211 = vmatprep.subr.mxu0 0.0
    %3212 = vmatpush1.msra.mxu0 0.0
    %3213 = vmatprep.subr.mxu0 0.0
    %3214 = vmatpush1.msra.mxu0 0.0
    %3215 = vmatprep.subr.mxu0 0.0
    %3216 = vmatpush1.msra.mxu0 0.0
    %3217 = vmatprep.subr.mxu0 0.0
    %3218 = vmatpush1.msra.mxu0 0.0
    %3219 = vmatprep.subr.mxu0 0.0
    %3220 = vmatpush1.msra.mxu0 0.0
    %3221 = vmatprep.subr.mxu0 0.0
    %3222 = vmatpush1.msra.mxu0 0.0
    %3223 = vmatprep.subr.mxu0 0.0
    %3224 = vmatpush1.msra.mxu0 0.0
    %3225 = vmatprep.subr.mxu0 0.0
    %3226 = vmatpush1.msra.mxu0 0.0
    %3227 = vmatprep.subr.mxu0 0.0
    %3228 = vmatpush1.msra.mxu0 0.0
    %3229 = vmatprep.subr.mxu0 0.0
    %3230 = vmatpush1.msra.mxu0 0.0
    %3231 = vmatprep.mubr.f32.mxu0 0.0
    %3232 = vmatmul.mubr.f32.gmra.mrb[0].mxu0 %v3165
    %v3233 = vpop.f32.mrb[0].mxu0
    %v3234 = vadd.f32 0.0, %v3233
    %v3235 = vpop.f32.mrb[0].mxu0
    %3236 = vdwg.mxu0
    %v3238 = vrot.slane %v3234, 1
    %v3241 = vadd.f32 %v3154, %v3234
    %v3242 = vadd.f32 %v3160, %v3238
    %v3243 = vxor.u32 %v3241, 2147483648
    %v3244 = vxor.u32 %v3242, 2147483648
    %v3245 = vmul.f32 %v3243, 1.442695
    %v3246 = vpow.pop %v3245
    %v3247 = vmul.f32 %v3244, 1.442695
    %v3248 = vpow.pop %v3247
    %v3249 = vadd.f32 %v3246, 1.0
    %v3250 = vadd.f32 %v3248, 1.0
    %v3251 = vrcp.pop %v3249
    %v3252 = vmul.f32 1.0, %v3251
    %v3253 = vrcp.pop %v3250
    %v3254 = vmul.f32 1.0, %v3253
    %v3255 = vtanh.pop %v3241
    %v3256 = vtanh.pop %v3242
    %v3257 = vmul.f32 %v3252, %v2783
    %v3258 = vmul.f32 %v3254, %v2784
    %3261 = vrot.lane.b32.xlu0 %v3255, 64
    %v3262 = vpop.permute.xlu0 %3261
    %3263 = vrot.lane.b32.xlu0 %v3256, 64
    %v3264 = vpop.permute.xlu0 %3263
    %v3267 = vmul.f32 %v3252, %v3262
    %v3268 = vmul.f32 %v3254, %v3264
    %3271 = vrot.lane.b32.xlu0 %v3267, 32
    %v3272 = vpop.permute.xlu0 %3271
    %3273 = vrot.lane.b32.xlu0 %v3268, 32
    %v3274 = vpop.permute.xlu0 %3273
    %v3277 = vadd.f32 %v3257, %v3272
    %v3278 = vadd.f32 %v3258, %v3274
    %v3279 = vtanh.pop %v3277
    %v3280 = vtanh.pop %v3278
    %3283 = vrot.lane.b32.xlu0 %v3279, 64
    %v3284 = vpop.permute.xlu0 %3283
    %3285 = vrot.lane.b32.xlu0 %v3280, 64
    %v3286 = vpop.permute.xlu0 %3285
    %v3289 = vmul.f32 %v3252, %v3284
    %v3290 = vmul.f32 %v3254, %v3286
    %v3293 = vrot.slane %v3290, 7
    %v3294 = vsel %vm380, %v3293, %v3289
    %3295 = vrot.lane.b32.xlu0 %v3294, 32
    %v3296 = vpop.permute.xlu0 %3295
    %v3297 = vsel %vm164, %v3296, 0
    %3299 = vmatprep.subr.mxu0 0.0
    %3300 = vmatpush1.msra.mxu0 %v1720
    %3301 = vmatprep.subr.mxu0 0.0
    %3302 = vmatpush1.msra.mxu0 %v1721
    %3303 = vmatprep.subr.mxu0 0.0
    %3304 = vmatpush1.msra.mxu0 %v1722
    %3305 = vmatprep.subr.mxu0 0.0
    %3306 = vmatpush1.msra.mxu0 %v1723
    %3307 = vmatprep.subr.mxu0 0.0
    %3308 = vmatpush1.msra.mxu0 0.0
    %3309 = vmatprep.subr.mxu0 0.0
    %3310 = vmatpush1.msra.mxu0 0.0
    %3311 = vmatprep.subr.mxu0 0.0
    %3312 = vmatpush1.msra.mxu0 0.0
    %3313 = vmatprep.subr.mxu0 0.0
    %3314 = vmatpush1.msra.mxu0 0.0
    %3315 = vmatprep.subr.mxu0 0.0
    %3316 = vmatpush1.msra.mxu0 0.0
    %3317 = vmatprep.subr.mxu0 0.0
    %3318 = vmatpush1.msra.mxu0 0.0
    %3319 = vmatprep.subr.mxu0 0.0
    %3320 = vmatpush1.msra.mxu0 0.0
    %3321 = vmatprep.subr.mxu0 0.0
    %3322 = vmatpush1.msra.mxu0 0.0
    %3323 = vmatprep.subr.mxu0 0.0
    %3324 = vmatpush1.msra.mxu0 0.0
    %3325 = vmatprep.subr.mxu0 0.0
    %3326 = vmatpush1.msra.mxu0 0.0
    %3327 = vmatprep.subr.mxu0 0.0
    %3328 = vmatpush1.msra.mxu0 0.0
    %3329 = vmatprep.subr.mxu0 0.0
    %3330 = vmatpush1.msra.mxu0 0.0
    %3331 = vmatprep.subr.mxu0 0.0
    %3332 = vmatpush1.msra.mxu0 0.0
    %3333 = vmatprep.subr.mxu0 0.0
    %3334 = vmatpush1.msra.mxu0 0.0
    %3335 = vmatprep.subr.mxu0 0.0
    %3336 = vmatpush1.msra.mxu0 0.0
    %3337 = vmatprep.subr.mxu0 0.0
    %3338 = vmatpush1.msra.mxu0 0.0
    %3339 = vmatprep.subr.mxu0 0.0
    %3340 = vmatpush1.msra.mxu0 0.0
    %3341 = vmatprep.subr.mxu0 0.0
    %3342 = vmatpush1.msra.mxu0 0.0
    %3343 = vmatprep.subr.mxu0 0.0
    %3344 = vmatpush1.msra.mxu0 0.0
    %3345 = vmatprep.subr.mxu0 0.0
    %3346 = vmatpush1.msra.mxu0 0.0
    %3347 = vmatprep.subr.mxu0 0.0
    %3348 = vmatpush1.msra.mxu0 0.0
    %3349 = vmatprep.subr.mxu0 0.0
    %3350 = vmatpush1.msra.mxu0 0.0
    %3351 = vmatprep.subr.mxu0 0.0
    %3352 = vmatpush1.msra.mxu0 0.0
    %3353 = vmatprep.subr.mxu0 0.0
    %3354 = vmatpush1.msra.mxu0 0.0
    %3355 = vmatprep.subr.mxu0 0.0
    %3356 = vmatpush1.msra.mxu0 0.0
    %3357 = vmatprep.subr.mxu0 0.0
    %3358 = vmatpush1.msra.mxu0 0.0
    %3359 = vmatprep.subr.mxu0 0.0
    %3360 = vmatpush1.msra.mxu0 0.0
    %3361 = vmatprep.subr.mxu0 0.0
    %3362 = vmatpush1.msra.mxu0 0.0
    %3363 = vmatprep.mubr.f32.mxu0 0.0
    %3364 = vmatmul.mubr.f32.gmra.mrb[0].mxu0 %v3297
    %v3365 = vpop.f32.mrb[0].mxu0
    %v3366 = vadd.f32 %v1847, %v3365
    %v3367 = vpop.f32.mrb[0].mxu0
    %3368 = vdwg.mxu0
    %v3371 = vunpack.c.l.s4 1966171168
    %v3372 = vunpack.c.0.s8 %v3371
    %v3373 = vlaneseq
    %v3374 = vshrl.u32 %v3373, 7
    %v3375 = vsub.s32 %v3372, %v3374
    %v3376 = vrot.slane %v3366, %v3375
    %v3377 = vcombine.high %v3376, %v3376
    %v3379 = vunpack.c.l.s4 1966171168
    %v3380 = vunpack.c.0.s8 %v3379
    %v3381 = vlaneseq
    %v3382 = vshrl.u32 %v3381, 7
    %v3383 = vsub.s32 %v3380, %v3382
    %v3384 = vrot.slane %v3376, %v3383
    %v3386 = vunpack.c.l.s4 1966171168
    %v3387 = vunpack.c.0.s8 %v3386
    %v3388 = vlaneseq
    %v3389 = vshrl.u32 %v3388, 7
    %v3390 = vsub.s32 %v3387, %v3389
    %v3391 = vrot.slane %v3377, %v3390
    %v3392 = vlaneseq
    %v3393 = vshrl.u32 %v3392, 7
    %v3394 = vsub.s32 0, %v3393
    %v3395 = vrot.slane %v3384, %v3394
    %v3396 = vlaneseq
    %v3397 = vshrl.u32 %v3396, 7
    %v3398 = vsub.s32 0, %v3397
    %v3399 = vrot.slane %v3391, %v3398
    %v3402 = vadd.f32 %v3395, %v1463
    %v3403 = vadd.f32 %v3399, %v1468
    %v3404 = vtanh.pop %v3402
    %v3405 = vtanh.pop %v3403
    %v3406 = vmul.f32 %v3404, %v1965
    %v3407 = vmul.f32 %v3405, %v1965
    %v3408 = vsel %vm164, %v3406, 0.0
    %3409 = vadd.xlane.f32.xlu0 %v3408
    %v3410 = vpop.xlane.xlu0 %3409
    %v3411 = vsel %vm164, %v3407, 0.0
    %3412 = vadd.xlane.f32.xlu0 %v3411
    %v3413 = vpop.xlane.xlu0 %3412
    %v3414 = vsub.f32 %v3132, 1.0
    %v3415 = vmul.f32 %v3414, 1e+30
    %v3417 = vlaneseq
    %v3418 = vshrl.u32 %v3417, 7
    %v3419 = vsub.s32 0, %v3418
    %v3420 = vrot.slane %v3415, %v3419
    %3422 = vbcast.lane.b32.xlu0 %v3420, 256
    %v3423 = vpop.permute.xlu0 %3422
    %v3424 = vlaneseq
    %v3425 = vshrl.u32 %v3424, 7
    %v3426 = vsub.s32 1, %v3425
    %v3427 = vrot.slane %v3415, %v3426
    %3429 = vbcast.lane.b32.xlu0 %v3427, 256
    %v3430 = vpop.permute.xlu0 %3429
    %v3433 = vadd.f32 %v3410, %v3423
    %v3434 = vadd.f32 %v3413, %v3430
    %3437 = vset.pattern.permute.xlu0 0
    %3438 = vperm.xlu0 %3437, %v3433
    %v3439 = vpop.permute.xlu0 %3438
    %3440 = vset.pattern.permute.xlu0 0
    %3441 = vperm.xlu0 %3440, %v3434
    %v3442 = vpop.permute.xlu0 %3441
    %v3443 = vlaneseq
    %v3444 = vshrl.u32 %v3443, 7
    %v3445 = vsub.s32 %v1731, %v3444
    %v3446 = vrot.slane %v3439, %v3445
    %v3447 = vlaneseq
    %v3448 = vshrl.u32 %v3447, 7
    %v3449 = vsub.s32 %v1731, %v3448
    %v3450 = vrot.slane %v3442, %v3449
    %v3451 = vsel %vm380, %v3450, %v3446
    %v3453 = vsel %vm1989, %v3451, -inf
    %3454 = vmax.xlane.f32.xlu0 %v3453
    %v3455 = vpop.xlane.xlu0 %3454
    %v3457 = vlaneseq
    %v3458 = vshrl.u32 %v3457, 7
    %v3459 = vsub.s32 0, %v3458
    %v3460 = vrot.slane %v3455, %v3459
    %v3461 = vlaneseq
    %v3462 = vshrl.u32 %v3461, 7
    %v3463 = vsub.s32 1, %v3462
    %v3464 = vrot.slane %v3455, %v3463
    %v3467 = vsub.f32 %v3433, %v3460
    %v3468 = vsub.f32 %v3434, %v3464
    %v3469 = vmul.f32 %v3467, 1.442695
    %v3470 = vpow.pop %v3469
    %v3471 = vmul.f32 %v3468, 1.442695
    %v3472 = vpow.pop %v3471
    %3475 = vset.pattern.permute.xlu0 0
    %3476 = vperm.xlu0 %3475, %v3470
    %v3477 = vpop.permute.xlu0 %3476
    %3478 = vset.pattern.permute.xlu0 0
    %3479 = vperm.xlu0 %3478, %v3472
    %v3480 = vpop.permute.xlu0 %3479
    %v3481 = vlaneseq
    %v3482 = vshrl.u32 %v3481, 7
    %v3483 = vsub.s32 %v1731, %v3482
    %v3484 = vrot.slane %v3477, %v3483
    %v3485 = vlaneseq
    %v3486 = vshrl.u32 %v3485, 7
    %v3487 = vsub.s32 %v1731, %v3486
    %v3488 = vrot.slane %v3480, %v3487
    %v3489 = vsel %vm380, %v3488, %v3484
    %v3491 = vsel %vm1989, %v3489, 0.0
    %3492 = vadd.xlane.f32.xlu0 %v3491
    %v3493 = vpop.xlane.xlu0 %3492
    %v3495 = vlaneseq
    %v3496 = vshrl.u32 %v3495, 7
    %v3497 = vsub.s32 0, %v3496
    %v3498 = vrot.slane %v3493, %v3497
    %v3499 = vlaneseq
    %v3500 = vshrl.u32 %v3499, 7
    %v3501 = vsub.s32 1, %v3500
    %v3502 = vrot.slane %v3493, %v3501
    %v3505 = vrcp.pop %v3498
    %v3506 = vmul.f32 %v3470, %v3505
    %v3507 = vrcp.pop %v3502
    %v3508 = vmul.f32 %v3472, %v3507
    %3510 = vset.pattern.permute.xlu0 0
    %3511 = vperm.xlu0 %3510, %v3506
    %v3512 = vpop.permute.xlu0 %3511
    %3515 = vset.pattern.permute.xlu0 0
    %3516 = vperm.xlu0 %3515, %v3508
    %v3517 = vpop.permute.xlu0 %3516
    %v3519 = vmul.f32 %v1548, %v3512
    %v3520 = vmul.f32 %v1553, %v3517
    %v3521 = vsel %vm164, %v3519, 0.0
    %v3522 = vrot.slane %v3521, 4
    %v3523 = vadd.f32 %v3521, %v3522
    %v3524 = vrot.slane %v3523, 2
    %v3525 = vadd.f32 %v3523, %v3524
    %v3526 = vrot.slane %v3525, 1
    %v3527 = vadd.f32 %v3525, %v3526
    %v3528 = vsel %vm164, %v3520, 0.0
    %v3529 = vrot.slane %v3528, 4
    %v3530 = vadd.f32 %v3528, %v3529
    %v3531 = vrot.slane %v3530, 2
    %v3532 = vadd.f32 %v3530, %v3531
    %v3533 = vrot.slane %v3532, 1
    %v3534 = vadd.f32 %v3532, %v3533
    %v3535 = vrot.slane %v3366, 1
    %3536 = vrot.lane.b32.xlu0 %v3366, 96
    %v3537 = vpop.permute.xlu0 %3536
    %3538 = vrot.lane.b32.xlu0 %v3535, 96
    %v3539 = vpop.permute.xlu0 %3538
    %v3542 = vadd.f32 %v3527, %v3537
    %v3543 = vadd.f32 %v3534, %v3539
    %v3544 = vtanh.pop %v3542
    %v3545 = vtanh.pop %v3543
    %v3547 = vlaneseq
    %v3548 = vshrl.u32 %v3547, 7
    %v3549 = vsub.s32 0, %v3548
    %v3550 = vrot.slane %v3132, %v3549
    %3552 = vbcast.lane.b32.xlu0 %v3550, 256
    %v3553 = vpop.permute.xlu0 %3552
    %v3554 = vlaneseq
    %v3555 = vshrl.u32 %v3554, 7
    %v3556 = vsub.s32 1, %v3555
    %v3557 = vrot.slane %v3132, %v3556
    %3559 = vbcast.lane.b32.xlu0 %v3557, 256
    %v3560 = vpop.permute.xlu0 %3559
    %v3563 = vmul.f32 %v3506, %v3553
    %v3564 = vmul.f32 %v3508, %v3560
    %3567 = vset.pattern.permute.xlu0 0
    %3568 = vperm.xlu0 %3567, %v3563
    %v3569 = vpop.permute.xlu0 %3568
    %3570 = vset.pattern.permute.xlu0 0
    %3571 = vperm.xlu0 %3570, %v3564
    %v3572 = vpop.permute.xlu0 %3571
    %v3573 = vlaneseq
    %v3574 = vshrl.u32 %v3573, 7
    %v3575 = vsub.s32 %v1731, %v3574
    %v3576 = vrot.slane %v3569, %v3575
    %v3577 = vlaneseq
    %v3578 = vshrl.u32 %v3577, 7
    %v3579 = vsub.s32 %v1731, %v3578
    %v3580 = vrot.slane %v3572, %v3579
    %v3581 = vsel %vm380, %v3580, %v3576
    %v3583 = vsel %vm1989, %v3581, -inf
    %3584 = vmax.xlane.f32.xlu0 %v3583
    %v3585 = vpop.xlane.xlu0 %3584
    %v3587 = vlaneseq
    %v3588 = vshrl.u32 %v3587, 7
    %v3589 = vsub.s32 0, %v3588
    %v3590 = vrot.slane %v3585, %v3589
    %v3591 = vlaneseq
    %v3592 = vshrl.u32 %v3591, 7
    %v3593 = vsub.s32 1, %v3592
    %v3594 = vrot.slane %v3585, %v3593
    %vm3597 = vcmp.eq.f32.partialorder %v3563, %v3590
    %vm3598 = vcmp.eq.f32.partialorder %v3564, %v3594
    %v3599 = vsel %vm3597, %v2112, 8.0
    %v3600 = vsel %vm3598, %v2112, 8.0
    %3603 = vset.pattern.permute.xlu0 0
    %3604 = vperm.xlu0 %3603, %v3599
    %v3605 = vpop.permute.xlu0 %3604
    %3606 = vset.pattern.permute.xlu0 0
    %3607 = vperm.xlu0 %3606, %v3600
    %v3608 = vpop.permute.xlu0 %3607
    %v3609 = vlaneseq
    %v3610 = vshrl.u32 %v3609, 7
    %v3611 = vsub.s32 %v1731, %v3610
    %v3612 = vrot.slane %v3605, %v3611
    %v3613 = vlaneseq
    %v3614 = vshrl.u32 %v3613, 7
    %v3615 = vsub.s32 %v1731, %v3614
    %v3616 = vrot.slane %v3608, %v3615
    %v3617 = vsel %vm380, %v3616, %v3612
    %v3619 = vsel %vm1989, %v3617, inf
    %3620 = vmin.xlane.f32.xlu0 %v3619
    %v3621 = vpop.xlane.xlu0 %3620
    %vm3622 = vcmp.eq.f32.partialorder %v1732, %v3621
    %v3623 = vsel %vm3622, 1, 0
    %v3624 = vcvt.s32.f32 %v3623
    %v3625 = vsub.f32 1.0, %v3624
    %v3626 = vmul.f32 %v3132, %v3625
    %v3627 = vlaneseq
    %v3628 = vshrl.u32 %v3627, 7
    %v3629 = vsub.s32 0, %v3628
    %v3630 = vrot.slane %v3624, %v3629
    %3632 = vbcast.lane.b32.xlu0 %v3630, 256
    %v3633 = vpop.permute.xlu0 %3632
    %v3634 = vlaneseq
    %v3635 = vshrl.u32 %v3634, 7
    %v3636 = vsub.s32 1, %v3635
    %v3637 = vrot.slane %v3624, %v3636
    %3639 = vbcast.lane.b32.xlu0 %v3637, 256
    %v3640 = vpop.permute.xlu0 %3639
    %v3641 = vmul.f32 %v3633, %v1634
    %v3642 = vmul.f32 %v3640, %v1639
    %v3643 = vrot.slane %v3641, 4
    %v3644 = vadd.f32 %v3641, %v3643
    %v3645 = vrot.slane %v3644, 2
    %v3646 = vadd.f32 %v3644, %v3645
    %v3647 = vrot.slane %v3646, 1
    %v3648 = vadd.f32 %v3646, %v3647
    %v3649 = vrot.slane %v3642, 4
    %v3650 = vadd.f32 %v3642, %v3649
    %v3651 = vrot.slane %v3650, 2
    %v3652 = vadd.f32 %v3650, %v3651
    %v3653 = vrot.slane %v3652, 1
    %v3654 = vadd.f32 %v3652, %v3653
    %v3657 = vrot.slane %v3545, 7
    %v3658 = vsel %vm380, %v3657, %v3544
    %v3659 = vsel %vm164, %v3658, 0
    %3661 = vmatprep.subr.mxu0 0.0
    %3662 = vmatpush1.msra.mxu0 %v1716
    %3663 = vmatprep.subr.mxu0 0.0
    %3664 = vmatpush1.msra.mxu0 %v1717
    %3665 = vmatprep.subr.mxu0 0.0
    %3666 = vmatpush1.msra.mxu0 %v1718
    %3667 = vmatprep.subr.mxu0 0.0
    %3668 = vmatpush1.msra.mxu0 %v1719
    %3669 = vmatprep.subr.mxu0 0.0
    %3670 = vmatpush1.msra.mxu0 0.0
    %3671 = vmatprep.subr.mxu0 0.0
    %3672 = vmatpush1.msra.mxu0 0.0
    %3673 = vmatprep.subr.mxu0 0.0
    %3674 = vmatpush1.msra.mxu0 0.0
    %3675 = vmatprep.subr.mxu0 0.0
    %3676 = vmatpush1.msra.mxu0 0.0
    %3677 = vmatprep.subr.mxu0 0.0
    %3678 = vmatpush1.msra.mxu0 0.0
    %3679 = vmatprep.subr.mxu0 0.0
    %3680 = vmatpush1.msra.mxu0 0.0
    %3681 = vmatprep.subr.mxu0 0.0
    %3682 = vmatpush1.msra.mxu0 0.0
    %3683 = vmatprep.subr.mxu0 0.0
    %3684 = vmatpush1.msra.mxu0 0.0
    %3685 = vmatprep.subr.mxu0 0.0
    %3686 = vmatpush1.msra.mxu0 0.0
    %3687 = vmatprep.subr.mxu0 0.0
    %3688 = vmatpush1.msra.mxu0 0.0
    %3689 = vmatprep.subr.mxu0 0.0
    %3690 = vmatpush1.msra.mxu0 0.0
    %3691 = vmatprep.subr.mxu0 0.0
    %3692 = vmatpush1.msra.mxu0 0.0
    %3693 = vmatprep.subr.mxu0 0.0
    %3694 = vmatpush1.msra.mxu0 0.0
    %3695 = vmatprep.subr.mxu0 0.0
    %3696 = vmatpush1.msra.mxu0 0.0
    %3697 = vmatprep.subr.mxu0 0.0
    %3698 = vmatpush1.msra.mxu0 0.0
    %3699 = vmatprep.subr.mxu0 0.0
    %3700 = vmatpush1.msra.mxu0 0.0
    %3701 = vmatprep.subr.mxu0 0.0
    %3702 = vmatpush1.msra.mxu0 0.0
    %3703 = vmatprep.subr.mxu0 0.0
    %3704 = vmatpush1.msra.mxu0 0.0
    %3705 = vmatprep.subr.mxu0 0.0
    %3706 = vmatpush1.msra.mxu0 0.0
    %3707 = vmatprep.subr.mxu0 0.0
    %3708 = vmatpush1.msra.mxu0 0.0
    %3709 = vmatprep.subr.mxu0 0.0
    %3710 = vmatpush1.msra.mxu0 0.0
    %3711 = vmatprep.subr.mxu0 0.0
    %3712 = vmatpush1.msra.mxu0 0.0
    %3713 = vmatprep.subr.mxu0 0.0
    %3714 = vmatpush1.msra.mxu0 0.0
    %3715 = vmatprep.subr.mxu0 0.0
    %3716 = vmatpush1.msra.mxu0 0.0
    %3717 = vmatprep.subr.mxu0 0.0
    %3718 = vmatpush1.msra.mxu0 0.0
    %3719 = vmatprep.subr.mxu0 0.0
    %3720 = vmatpush1.msra.mxu0 0.0
    %3721 = vmatprep.subr.mxu0 0.0
    %3722 = vmatpush1.msra.mxu0 0.0
    %3723 = vmatprep.subr.mxu0 0.0
    %3724 = vmatpush1.msra.mxu0 0.0
    %3725 = vmatprep.mubr.f32.mxu0 0.0
    %3726 = vmatmul.mubr.f32.gmra.mrb[0].mxu0 %v3659
    %v3727 = vpop.f32.mrb[0].mxu0
    %v3728 = vadd.f32 0.0, %v3727
    %v3729 = vpop.f32.mrb[0].mxu0
    %3730 = vdwg.mxu0
    %v3732 = vrot.slane %v3728, 1
    %v3735 = vadd.f32 %v3648, %v3728
    %v3736 = vadd.f32 %v3654, %v3732
    %v3737 = vxor.u32 %v3735, 2147483648
    %v3738 = vxor.u32 %v3736, 2147483648
    %v3739 = vmul.f32 %v3737, 1.442695
    %v3740 = vpow.pop %v3739
    %v3741 = vmul.f32 %v3738, 1.442695
    %v3742 = vpow.pop %v3741
    %v3743 = vadd.f32 %v3740, 1.0
    %v3744 = vadd.f32 %v3742, 1.0
    %v3745 = vrcp.pop %v3743
    %v3746 = vmul.f32 1.0, %v3745
    %v3747 = vrcp.pop %v3744
    %v3748 = vmul.f32 1.0, %v3747
    %v3749 = vtanh.pop %v3735
    %v3750 = vtanh.pop %v3736
    %v3751 = vmul.f32 %v3746, %v3277
    %v3752 = vmul.f32 %v3748, %v3278
    %3755 = vrot.lane.b32.xlu0 %v3749, 64
    %v3756 = vpop.permute.xlu0 %3755
    %3757 = vrot.lane.b32.xlu0 %v3750, 64
    %v3758 = vpop.permute.xlu0 %3757
    %v3761 = vmul.f32 %v3746, %v3756
    %v3762 = vmul.f32 %v3748, %v3758
    %3765 = vrot.lane.b32.xlu0 %v3761, 32
    %v3766 = vpop.permute.xlu0 %3765
    %3767 = vrot.lane.b32.xlu0 %v3762, 32
    %v3768 = vpop.permute.xlu0 %3767
    %v3771 = vadd.f32 %v3751, %v3766
    %v3772 = vadd.f32 %v3752, %v3768
    %v3773 = vtanh.pop %v3771
    %v3774 = vtanh.pop %v3772
    %3777 = vrot.lane.b32.xlu0 %v3773, 64
    %v3778 = vpop.permute.xlu0 %3777
    %3779 = vrot.lane.b32.xlu0 %v3774, 64
    %v3780 = vpop.permute.xlu0 %3779
    %v3783 = vmul.f32 %v3746, %v3778
    %v3784 = vmul.f32 %v3748, %v3780
    %v3787 = vrot.slane %v3784, 7
    %v3788 = vsel %vm380, %v3787, %v3783
    %3789 = vrot.lane.b32.xlu0 %v3788, 32
    %v3790 = vpop.permute.xlu0 %3789
    %v3791 = vsel %vm164, %v3790, 0
    %3793 = vmatprep.subr.mxu0 0.0
    %3794 = vmatpush1.msra.mxu0 %v1720
    %3795 = vmatprep.subr.mxu0 0.0
    %3796 = vmatpush1.msra.mxu0 %v1721
    %3797 = vmatprep.subr.mxu0 0.0
    %3798 = vmatpush1.msra.mxu0 %v1722
    %3799 = vmatprep.subr.mxu0 0.0
    %3800 = vmatpush1.msra.mxu0 %v1723
    %3801 = vmatprep.subr.mxu0 0.0
    %3802 = vmatpush1.msra.mxu0 0.0
    %3803 = vmatprep.subr.mxu0 0.0
    %3804 = vmatpush1.msra.mxu0 0.0
    %3805 = vmatprep.subr.mxu0 0.0
    %3806 = vmatpush1.msra.mxu0 0.0
    %3807 = vmatprep.subr.mxu0 0.0
    %3808 = vmatpush1.msra.mxu0 0.0
    %3809 = vmatprep.subr.mxu0 0.0
    %3810 = vmatpush1.msra.mxu0 0.0
    %3811 = vmatprep.subr.mxu0 0.0
    %3812 = vmatpush1.msra.mxu0 0.0
    %3813 = vmatprep.subr.mxu0 0.0
    %3814 = vmatpush1.msra.mxu0 0.0
    %3815 = vmatprep.subr.mxu0 0.0
    %3816 = vmatpush1.msra.mxu0 0.0
    %3817 = vmatprep.subr.mxu0 0.0
    %3818 = vmatpush1.msra.mxu0 0.0
    %3819 = vmatprep.subr.mxu0 0.0
    %3820 = vmatpush1.msra.mxu0 0.0
    %3821 = vmatprep.subr.mxu0 0.0
    %3822 = vmatpush1.msra.mxu0 0.0
    %3823 = vmatprep.subr.mxu0 0.0
    %3824 = vmatpush1.msra.mxu0 0.0
    %3825 = vmatprep.subr.mxu0 0.0
    %3826 = vmatpush1.msra.mxu0 0.0
    %3827 = vmatprep.subr.mxu0 0.0
    %3828 = vmatpush1.msra.mxu0 0.0
    %3829 = vmatprep.subr.mxu0 0.0
    %3830 = vmatpush1.msra.mxu0 0.0
    %3831 = vmatprep.subr.mxu0 0.0
    %3832 = vmatpush1.msra.mxu0 0.0
    %3833 = vmatprep.subr.mxu0 0.0
    %3834 = vmatpush1.msra.mxu0 0.0
    %3835 = vmatprep.subr.mxu0 0.0
    %3836 = vmatpush1.msra.mxu0 0.0
    %3837 = vmatprep.subr.mxu0 0.0
    %3838 = vmatpush1.msra.mxu0 0.0
    %3839 = vmatprep.subr.mxu0 0.0
    %3840 = vmatpush1.msra.mxu0 0.0
    %3841 = vmatprep.subr.mxu0 0.0
    %3842 = vmatpush1.msra.mxu0 0.0
    %3843 = vmatprep.subr.mxu0 0.0
    %3844 = vmatpush1.msra.mxu0 0.0
    %3845 = vmatprep.subr.mxu0 0.0
    %3846 = vmatpush1.msra.mxu0 0.0
    %3847 = vmatprep.subr.mxu0 0.0
    %3848 = vmatpush1.msra.mxu0 0.0
    %3849 = vmatprep.subr.mxu0 0.0
    %3850 = vmatpush1.msra.mxu0 0.0
    %3851 = vmatprep.subr.mxu0 0.0
    %3852 = vmatpush1.msra.mxu0 0.0
    %3853 = vmatprep.subr.mxu0 0.0
    %3854 = vmatpush1.msra.mxu0 0.0
    %3855 = vmatprep.subr.mxu0 0.0
    %3856 = vmatpush1.msra.mxu0 0.0
    %3857 = vmatprep.mubr.f32.mxu0 0.0
    %3858 = vmatmul.mubr.f32.gmra.mrb[0].mxu0 %v3791
    %v3859 = vpop.f32.mrb[0].mxu0
    %v3860 = vadd.f32 %v1847, %v3859
    %v3861 = vpop.f32.mrb[0].mxu0
    %3862 = vdwg.mxu0
    %v3865 = vunpack.c.l.s4 1966171168
    %v3866 = vunpack.c.0.s8 %v3865
    %v3867 = vlaneseq
    %v3868 = vshrl.u32 %v3867, 7
    %v3869 = vsub.s32 %v3866, %v3868
    %v3870 = vrot.slane %v3860, %v3869
    %v3871 = vcombine.high %v3870, %v3870
    %v3873 = vunpack.c.l.s4 1966171168
    %v3874 = vunpack.c.0.s8 %v3873
    %v3875 = vlaneseq
    %v3876 = vshrl.u32 %v3875, 7
    %v3877 = vsub.s32 %v3874, %v3876
    %v3878 = vrot.slane %v3870, %v3877
    %v3880 = vunpack.c.l.s4 1966171168
    %v3881 = vunpack.c.0.s8 %v3880
    %v3882 = vlaneseq
    %v3883 = vshrl.u32 %v3882, 7
    %v3884 = vsub.s32 %v3881, %v3883
    %v3885 = vrot.slane %v3871, %v3884
    %v3886 = vlaneseq
    %v3887 = vshrl.u32 %v3886, 7
    %v3888 = vsub.s32 0, %v3887
    %v3889 = vrot.slane %v3878, %v3888
    %v3890 = vlaneseq
    %v3891 = vshrl.u32 %v3890, 7
    %v3892 = vsub.s32 0, %v3891
    %v3893 = vrot.slane %v3885, %v3892
    %v3896 = vadd.f32 %v3889, %v1463
    %v3897 = vadd.f32 %v3893, %v1468
    %v3898 = vtanh.pop %v3896
    %v3899 = vtanh.pop %v3897
    %v3900 = vmul.f32 %v3898, %v1965
    %v3901 = vmul.f32 %v3899, %v1965
    %v3902 = vsel %vm164, %v3900, 0.0
    %3903 = vadd.xlane.f32.xlu0 %v3902
    %v3904 = vpop.xlane.xlu0 %3903
    %v3905 = vsel %vm164, %v3901, 0.0
    %3906 = vadd.xlane.f32.xlu0 %v3905
    %v3907 = vpop.xlane.xlu0 %3906
    %v3908 = vsub.f32 %v3626, 1.0
    %v3909 = vmul.f32 %v3908, 1e+30
    %v3911 = vlaneseq
    %v3912 = vshrl.u32 %v3911, 7
    %v3913 = vsub.s32 0, %v3912
    %v3914 = vrot.slane %v3909, %v3913
    %3916 = vbcast.lane.b32.xlu0 %v3914, 256
    %v3917 = vpop.permute.xlu0 %3916
    %v3918 = vlaneseq
    %v3919 = vshrl.u32 %v3918, 7
    %v3920 = vsub.s32 1, %v3919
    %v3921 = vrot.slane %v3909, %v3920
    %3923 = vbcast.lane.b32.xlu0 %v3921, 256
    %v3924 = vpop.permute.xlu0 %3923
    %v3927 = vadd.f32 %v3904, %v3917
    %v3928 = vadd.f32 %v3907, %v3924
    %3931 = vset.pattern.permute.xlu0 0
    %3932 = vperm.xlu0 %3931, %v3927
    %v3933 = vpop.permute.xlu0 %3932
    %3934 = vset.pattern.permute.xlu0 0
    %3935 = vperm.xlu0 %3934, %v3928
    %v3936 = vpop.permute.xlu0 %3935
    %v3937 = vlaneseq
    %v3938 = vshrl.u32 %v3937, 7
    %v3939 = vsub.s32 %v1731, %v3938
    %v3940 = vrot.slane %v3933, %v3939
    %v3941 = vlaneseq
    %v3942 = vshrl.u32 %v3941, 7
    %v3943 = vsub.s32 %v1731, %v3942
    %v3944 = vrot.slane %v3936, %v3943
    %v3945 = vsel %vm380, %v3944, %v3940
    %v3947 = vsel %vm1989, %v3945, -inf
    %3948 = vmax.xlane.f32.xlu0 %v3947
    %v3949 = vpop.xlane.xlu0 %3948
    %v3951 = vlaneseq
    %v3952 = vshrl.u32 %v3951, 7
    %v3953 = vsub.s32 0, %v3952
    %v3954 = vrot.slane %v3949, %v3953
    %v3955 = vlaneseq
    %v3956 = vshrl.u32 %v3955, 7
    %v3957 = vsub.s32 1, %v3956
    %v3958 = vrot.slane %v3949, %v3957
    %v3961 = vsub.f32 %v3927, %v3954
    %v3962 = vsub.f32 %v3928, %v3958
    %v3963 = vmul.f32 %v3961, 1.442695
    %v3964 = vpow.pop %v3963
    %v3965 = vmul.f32 %v3962, 1.442695
    %v3966 = vpow.pop %v3965
    %3969 = vset.pattern.permute.xlu0 0
    %3970 = vperm.xlu0 %3969, %v3964
    %v3971 = vpop.permute.xlu0 %3970
    %3972 = vset.pattern.permute.xlu0 0
    %3973 = vperm.xlu0 %3972, %v3966
    %v3974 = vpop.permute.xlu0 %3973
    %v3975 = vlaneseq
    %v3976 = vshrl.u32 %v3975, 7
    %v3977 = vsub.s32 %v1731, %v3976
    %v3978 = vrot.slane %v3971, %v3977
    %v3979 = vlaneseq
    %v3980 = vshrl.u32 %v3979, 7
    %v3981 = vsub.s32 %v1731, %v3980
    %v3982 = vrot.slane %v3974, %v3981
    %v3983 = vsel %vm380, %v3982, %v3978
    %v3985 = vsel %vm1989, %v3983, 0.0
    %3986 = vadd.xlane.f32.xlu0 %v3985
    %v3987 = vpop.xlane.xlu0 %3986
    %v3989 = vlaneseq
    %v3990 = vshrl.u32 %v3989, 7
    %v3991 = vsub.s32 0, %v3990
    %v3992 = vrot.slane %v3987, %v3991
    %v3993 = vlaneseq
    %v3994 = vshrl.u32 %v3993, 7
    %v3995 = vsub.s32 1, %v3994
    %v3996 = vrot.slane %v3987, %v3995
    %v3999 = vrcp.pop %v3992
    %v4000 = vmul.f32 %v3964, %v3999
    %v4001 = vrcp.pop %v3996
    %v4002 = vmul.f32 %v3966, %v4001
    %4004 = vset.pattern.permute.xlu0 0
    %4005 = vperm.xlu0 %4004, %v4000
    %v4006 = vpop.permute.xlu0 %4005
    %4009 = vset.pattern.permute.xlu0 0
    %4010 = vperm.xlu0 %4009, %v4002
    %v4011 = vpop.permute.xlu0 %4010
    %v4013 = vmul.f32 %v1548, %v4006
    %v4014 = vmul.f32 %v1553, %v4011
    %v4015 = vsel %vm164, %v4013, 0.0
    %v4016 = vrot.slane %v4015, 4
    %v4017 = vadd.f32 %v4015, %v4016
    %v4018 = vrot.slane %v4017, 2
    %v4019 = vadd.f32 %v4017, %v4018
    %v4020 = vrot.slane %v4019, 1
    %v4021 = vadd.f32 %v4019, %v4020
    %v4022 = vsel %vm164, %v4014, 0.0
    %v4023 = vrot.slane %v4022, 4
    %v4024 = vadd.f32 %v4022, %v4023
    %v4025 = vrot.slane %v4024, 2
    %v4026 = vadd.f32 %v4024, %v4025
    %v4027 = vrot.slane %v4026, 1
    %v4028 = vadd.f32 %v4026, %v4027
    %v4029 = vrot.slane %v3860, 1
    %4030 = vrot.lane.b32.xlu0 %v3860, 96
    %v4031 = vpop.permute.xlu0 %4030
    %4032 = vrot.lane.b32.xlu0 %v4029, 96
    %v4033 = vpop.permute.xlu0 %4032
    %v4036 = vadd.f32 %v4021, %v4031
    %v4037 = vadd.f32 %v4028, %v4033
    %v4038 = vtanh.pop %v4036
    %v4039 = vtanh.pop %v4037
    %v4041 = vlaneseq
    %v4042 = vshrl.u32 %v4041, 7
    %v4043 = vsub.s32 0, %v4042
    %v4044 = vrot.slane %v3626, %v4043
    %4046 = vbcast.lane.b32.xlu0 %v4044, 256
    %v4047 = vpop.permute.xlu0 %4046
    %v4048 = vlaneseq
    %v4049 = vshrl.u32 %v4048, 7
    %v4050 = vsub.s32 1, %v4049
    %v4051 = vrot.slane %v3626, %v4050
    %4053 = vbcast.lane.b32.xlu0 %v4051, 256
    %v4054 = vpop.permute.xlu0 %4053
    %v4057 = vmul.f32 %v4000, %v4047
    %v4058 = vmul.f32 %v4002, %v4054
    %4061 = vset.pattern.permute.xlu0 0
    %4062 = vperm.xlu0 %4061, %v4057
    %v4063 = vpop.permute.xlu0 %4062
    %4064 = vset.pattern.permute.xlu0 0
    %4065 = vperm.xlu0 %4064, %v4058
    %v4066 = vpop.permute.xlu0 %4065
    %v4067 = vlaneseq
    %v4068 = vshrl.u32 %v4067, 7
    %v4069 = vsub.s32 %v1731, %v4068
    %v4070 = vrot.slane %v4063, %v4069
    %v4071 = vlaneseq
    %v4072 = vshrl.u32 %v4071, 7
    %v4073 = vsub.s32 %v1731, %v4072
    %v4074 = vrot.slane %v4066, %v4073
    %v4075 = vsel %vm380, %v4074, %v4070
    %v4077 = vsel %vm1989, %v4075, -inf
    %4078 = vmax.xlane.f32.xlu0 %v4077
    %v4079 = vpop.xlane.xlu0 %4078
    %v4081 = vlaneseq
    %v4082 = vshrl.u32 %v4081, 7
    %v4083 = vsub.s32 0, %v4082
    %v4084 = vrot.slane %v4079, %v4083
    %v4085 = vlaneseq
    %v4086 = vshrl.u32 %v4085, 7
    %v4087 = vsub.s32 1, %v4086
    %v4088 = vrot.slane %v4079, %v4087
    %vm4091 = vcmp.eq.f32.partialorder %v4057, %v4084
    %vm4092 = vcmp.eq.f32.partialorder %v4058, %v4088
    %v4093 = vsel %vm4091, %v2112, 8.0
    %v4094 = vsel %vm4092, %v2112, 8.0
    %4097 = vset.pattern.permute.xlu0 0
    %4098 = vperm.xlu0 %4097, %v4093
    %v4099 = vpop.permute.xlu0 %4098
    %4100 = vset.pattern.permute.xlu0 0
    %4101 = vperm.xlu0 %4100, %v4094
    %v4102 = vpop.permute.xlu0 %4101
    %v4103 = vlaneseq
    %v4104 = vshrl.u32 %v4103, 7
    %v4105 = vsub.s32 %v1731, %v4104
    %v4106 = vrot.slane %v4099, %v4105
    %v4107 = vlaneseq
    %v4108 = vshrl.u32 %v4107, 7
    %v4109 = vsub.s32 %v1731, %v4108
    %v4110 = vrot.slane %v4102, %v4109
    %v4111 = vsel %vm380, %v4110, %v4106
    %v4113 = vsel %vm1989, %v4111, inf
    %4114 = vmin.xlane.f32.xlu0 %v4113
    %v4115 = vpop.xlane.xlu0 %4114
    %vm4116 = vcmp.eq.f32.partialorder %v1732, %v4115
    %v4117 = vsel %vm4116, 1, 0
    %v4118 = vcvt.s32.f32 %v4117
    %v4119 = vsub.f32 1.0, %v4118
    %v4120 = vmul.f32 %v3626, %v4119
    %v4121 = vlaneseq
    %v4122 = vshrl.u32 %v4121, 7
    %v4123 = vsub.s32 0, %v4122
    %v4124 = vrot.slane %v4118, %v4123
    %4126 = vbcast.lane.b32.xlu0 %v4124, 256
    %v4127 = vpop.permute.xlu0 %4126
    %v4128 = vlaneseq
    %v4129 = vshrl.u32 %v4128, 7
    %v4130 = vsub.s32 1, %v4129
    %v4131 = vrot.slane %v4118, %v4130
    %4133 = vbcast.lane.b32.xlu0 %v4131, 256
    %v4134 = vpop.permute.xlu0 %4133
    %v4135 = vmul.f32 %v4127, %v1634
    %v4136 = vmul.f32 %v4134, %v1639
    %v4137 = vrot.slane %v4135, 4
    %v4138 = vadd.f32 %v4135, %v4137
    %v4139 = vrot.slane %v4138, 2
    %v4140 = vadd.f32 %v4138, %v4139
    %v4141 = vrot.slane %v4140, 1
    %v4142 = vadd.f32 %v4140, %v4141
    %v4143 = vrot.slane %v4136, 4
    %v4144 = vadd.f32 %v4136, %v4143
    %v4145 = vrot.slane %v4144, 2
    %v4146 = vadd.f32 %v4144, %v4145
    %v4147 = vrot.slane %v4146, 1
    %v4148 = vadd.f32 %v4146, %v4147
    %v4151 = vrot.slane %v4039, 7
    %v4152 = vsel %vm380, %v4151, %v4038
    %v4153 = vsel %vm164, %v4152, 0
    %4155 = vmatprep.subr.mxu0 0.0
    %4156 = vmatpush1.msra.mxu0 %v1716
    %4157 = vmatprep.subr.mxu0 0.0
    %4158 = vmatpush1.msra.mxu0 %v1717
    %4159 = vmatprep.subr.mxu0 0.0
    %4160 = vmatpush1.msra.mxu0 %v1718
    %4161 = vmatprep.subr.mxu0 0.0
    %4162 = vmatpush1.msra.mxu0 %v1719
    %4163 = vmatprep.subr.mxu0 0.0
    %4164 = vmatpush1.msra.mxu0 0.0
    %4165 = vmatprep.subr.mxu0 0.0
    %4166 = vmatpush1.msra.mxu0 0.0
    %4167 = vmatprep.subr.mxu0 0.0
    %4168 = vmatpush1.msra.mxu0 0.0
    %4169 = vmatprep.subr.mxu0 0.0
    %4170 = vmatpush1.msra.mxu0 0.0
    %4171 = vmatprep.subr.mxu0 0.0
    %4172 = vmatpush1.msra.mxu0 0.0
    %4173 = vmatprep.subr.mxu0 0.0
    %4174 = vmatpush1.msra.mxu0 0.0
    %4175 = vmatprep.subr.mxu0 0.0
    %4176 = vmatpush1.msra.mxu0 0.0
    %4177 = vmatprep.subr.mxu0 0.0
    %4178 = vmatpush1.msra.mxu0 0.0
    %4179 = vmatprep.subr.mxu0 0.0
    %4180 = vmatpush1.msra.mxu0 0.0
    %4181 = vmatprep.subr.mxu0 0.0
    %4182 = vmatpush1.msra.mxu0 0.0
    %4183 = vmatprep.subr.mxu0 0.0
    %4184 = vmatpush1.msra.mxu0 0.0
    %4185 = vmatprep.subr.mxu0 0.0
    %4186 = vmatpush1.msra.mxu0 0.0
    %4187 = vmatprep.subr.mxu0 0.0
    %4188 = vmatpush1.msra.mxu0 0.0
    %4189 = vmatprep.subr.mxu0 0.0
    %4190 = vmatpush1.msra.mxu0 0.0
    %4191 = vmatprep.subr.mxu0 0.0
    %4192 = vmatpush1.msra.mxu0 0.0
    %4193 = vmatprep.subr.mxu0 0.0
    %4194 = vmatpush1.msra.mxu0 0.0
    %4195 = vmatprep.subr.mxu0 0.0
    %4196 = vmatpush1.msra.mxu0 0.0
    %4197 = vmatprep.subr.mxu0 0.0
    %4198 = vmatpush1.msra.mxu0 0.0
    %4199 = vmatprep.subr.mxu0 0.0
    %4200 = vmatpush1.msra.mxu0 0.0
    %4201 = vmatprep.subr.mxu0 0.0
    %4202 = vmatpush1.msra.mxu0 0.0
    %4203 = vmatprep.subr.mxu0 0.0
    %4204 = vmatpush1.msra.mxu0 0.0
    %4205 = vmatprep.subr.mxu0 0.0
    %4206 = vmatpush1.msra.mxu0 0.0
    %4207 = vmatprep.subr.mxu0 0.0
    %4208 = vmatpush1.msra.mxu0 0.0
    %4209 = vmatprep.subr.mxu0 0.0
    %4210 = vmatpush1.msra.mxu0 0.0
    %4211 = vmatprep.subr.mxu0 0.0
    %4212 = vmatpush1.msra.mxu0 0.0
    %4213 = vmatprep.subr.mxu0 0.0
    %4214 = vmatpush1.msra.mxu0 0.0
    %4215 = vmatprep.subr.mxu0 0.0
    %4216 = vmatpush1.msra.mxu0 0.0
    %4217 = vmatprep.subr.mxu0 0.0
    %4218 = vmatpush1.msra.mxu0 0.0
    %4219 = vmatprep.mubr.f32.mxu0 0.0
    %4220 = vmatmul.mubr.f32.gmra.mrb[0].mxu0 %v4153
    %v4221 = vpop.f32.mrb[0].mxu0
    %v4222 = vadd.f32 0.0, %v4221
    %v4223 = vpop.f32.mrb[0].mxu0
    %4224 = vdwg.mxu0
    %v4226 = vrot.slane %v4222, 1
    %v4229 = vadd.f32 %v4142, %v4222
    %v4230 = vadd.f32 %v4148, %v4226
    %v4231 = vxor.u32 %v4229, 2147483648
    %v4232 = vxor.u32 %v4230, 2147483648
    %v4233 = vmul.f32 %v4231, 1.442695
    %v4234 = vpow.pop %v4233
    %v4235 = vmul.f32 %v4232, 1.442695
    %v4236 = vpow.pop %v4235
    %v4237 = vadd.f32 %v4234, 1.0
    %v4238 = vadd.f32 %v4236, 1.0
    %v4239 = vrcp.pop %v4237
    %v4240 = vmul.f32 1.0, %v4239
    %v4241 = vrcp.pop %v4238
    %v4242 = vmul.f32 1.0, %v4241
    %v4243 = vtanh.pop %v4229
    %v4244 = vtanh.pop %v4230
    %v4245 = vmul.f32 %v4240, %v3771
    %v4246 = vmul.f32 %v4242, %v3772
    %4249 = vrot.lane.b32.xlu0 %v4243, 64
    %v4250 = vpop.permute.xlu0 %4249
    %4251 = vrot.lane.b32.xlu0 %v4244, 64
    %v4252 = vpop.permute.xlu0 %4251
    %v4255 = vmul.f32 %v4240, %v4250
    %v4256 = vmul.f32 %v4242, %v4252
    %4259 = vrot.lane.b32.xlu0 %v4255, 32
    %v4260 = vpop.permute.xlu0 %4259
    %4261 = vrot.lane.b32.xlu0 %v4256, 32
    %v4262 = vpop.permute.xlu0 %4261
    %v4265 = vadd.f32 %v4245, %v4260
    %v4266 = vadd.f32 %v4246, %v4262
    %v4267 = vtanh.pop %v4265
    %v4268 = vtanh.pop %v4266
    %4271 = vrot.lane.b32.xlu0 %v4267, 64
    %v4272 = vpop.permute.xlu0 %4271
    %4273 = vrot.lane.b32.xlu0 %v4268, 64
    %v4274 = vpop.permute.xlu0 %4273
    %v4277 = vmul.f32 %v4240, %v4272
    %v4278 = vmul.f32 %v4242, %v4274
    %v4281 = vrot.slane %v4278, 7
    %v4282 = vsel %vm380, %v4281, %v4277
    %4283 = vrot.lane.b32.xlu0 %v4282, 32
    %v4284 = vpop.permute.xlu0 %4283
    %v4285 = vsel %vm164, %v4284, 0
    %4287 = vmatprep.subr.mxu0 0.0
    %4288 = vmatpush1.msra.mxu0 %v1720
    %4289 = vmatprep.subr.mxu0 0.0
    %4290 = vmatpush1.msra.mxu0 %v1721
    %4291 = vmatprep.subr.mxu0 0.0
    %4292 = vmatpush1.msra.mxu0 %v1722
    %4293 = vmatprep.subr.mxu0 0.0
    %4294 = vmatpush1.msra.mxu0 %v1723
    %4295 = vmatprep.subr.mxu0 0.0
    %4296 = vmatpush1.msra.mxu0 0.0
    %4297 = vmatprep.subr.mxu0 0.0
    %4298 = vmatpush1.msra.mxu0 0.0
    %4299 = vmatprep.subr.mxu0 0.0
    %4300 = vmatpush1.msra.mxu0 0.0
    %4301 = vmatprep.subr.mxu0 0.0
    %4302 = vmatpush1.msra.mxu0 0.0
    %4303 = vmatprep.subr.mxu0 0.0
    %4304 = vmatpush1.msra.mxu0 0.0
    %4305 = vmatprep.subr.mxu0 0.0
    %4306 = vmatpush1.msra.mxu0 0.0
    %4307 = vmatprep.subr.mxu0 0.0
    %4308 = vmatpush1.msra.mxu0 0.0
    %4309 = vmatprep.subr.mxu0 0.0
    %4310 = vmatpush1.msra.mxu0 0.0
    %4311 = vmatprep.subr.mxu0 0.0
    %4312 = vmatpush1.msra.mxu0 0.0
    %4313 = vmatprep.subr.mxu0 0.0
    %4314 = vmatpush1.msra.mxu0 0.0
    %4315 = vmatprep.subr.mxu0 0.0
    %4316 = vmatpush1.msra.mxu0 0.0
    %4317 = vmatprep.subr.mxu0 0.0
    %4318 = vmatpush1.msra.mxu0 0.0
    %4319 = vmatprep.subr.mxu0 0.0
    %4320 = vmatpush1.msra.mxu0 0.0
    %4321 = vmatprep.subr.mxu0 0.0
    %4322 = vmatpush1.msra.mxu0 0.0
    %4323 = vmatprep.subr.mxu0 0.0
    %4324 = vmatpush1.msra.mxu0 0.0
    %4325 = vmatprep.subr.mxu0 0.0
    %4326 = vmatpush1.msra.mxu0 0.0
    %4327 = vmatprep.subr.mxu0 0.0
    %4328 = vmatpush1.msra.mxu0 0.0
    %4329 = vmatprep.subr.mxu0 0.0
    %4330 = vmatpush1.msra.mxu0 0.0
    %4331 = vmatprep.subr.mxu0 0.0
    %4332 = vmatpush1.msra.mxu0 0.0
    %4333 = vmatprep.subr.mxu0 0.0
    %4334 = vmatpush1.msra.mxu0 0.0
    %4335 = vmatprep.subr.mxu0 0.0
    %4336 = vmatpush1.msra.mxu0 0.0
    %4337 = vmatprep.subr.mxu0 0.0
    %4338 = vmatpush1.msra.mxu0 0.0
    %4339 = vmatprep.subr.mxu0 0.0
    %4340 = vmatpush1.msra.mxu0 0.0
    %4341 = vmatprep.subr.mxu0 0.0
    %4342 = vmatpush1.msra.mxu0 0.0
    %4343 = vmatprep.subr.mxu0 0.0
    %4344 = vmatpush1.msra.mxu0 0.0
    %4345 = vmatprep.subr.mxu0 0.0
    %4346 = vmatpush1.msra.mxu0 0.0
    %4347 = vmatprep.subr.mxu0 0.0
    %4348 = vmatpush1.msra.mxu0 0.0
    %4349 = vmatprep.subr.mxu0 0.0
    %4350 = vmatpush1.msra.mxu0 0.0
    %4351 = vmatprep.mubr.f32.mxu0 0.0
    %4352 = vmatmul.mubr.f32.gmra.mrb[0].mxu0 %v4285
    %v4353 = vpop.f32.mrb[0].mxu0
    %v4354 = vadd.f32 %v1847, %v4353
    %v4355 = vpop.f32.mrb[0].mxu0
    %4356 = vdwg.mxu0
    %v4359 = vunpack.c.l.s4 1966171168
    %v4360 = vunpack.c.0.s8 %v4359
    %v4361 = vlaneseq
    %v4362 = vshrl.u32 %v4361, 7
    %v4363 = vsub.s32 %v4360, %v4362
    %v4364 = vrot.slane %v4354, %v4363
    %v4365 = vcombine.high %v4364, %v4364
    %v4367 = vunpack.c.l.s4 1966171168
    %v4368 = vunpack.c.0.s8 %v4367
    %v4369 = vlaneseq
    %v4370 = vshrl.u32 %v4369, 7
    %v4371 = vsub.s32 %v4368, %v4370
    %v4372 = vrot.slane %v4364, %v4371
    %v4374 = vunpack.c.l.s4 1966171168
    %v4375 = vunpack.c.0.s8 %v4374
    %v4376 = vlaneseq
    %v4377 = vshrl.u32 %v4376, 7
    %v4378 = vsub.s32 %v4375, %v4377
    %v4379 = vrot.slane %v4365, %v4378
    %v4380 = vlaneseq
    %v4381 = vshrl.u32 %v4380, 7
    %v4382 = vsub.s32 0, %v4381
    %v4383 = vrot.slane %v4372, %v4382
    %v4384 = vlaneseq
    %v4385 = vshrl.u32 %v4384, 7
    %v4386 = vsub.s32 0, %v4385
    %v4387 = vrot.slane %v4379, %v4386
    %v4390 = vadd.f32 %v4383, %v1463
    %v4391 = vadd.f32 %v4387, %v1468
    %v4392 = vtanh.pop %v4390
    %v4393 = vtanh.pop %v4391
    %v4394 = vmul.f32 %v4392, %v1965
    %v4395 = vmul.f32 %v4393, %v1965
    %v4396 = vsel %vm164, %v4394, 0.0
    %4397 = vadd.xlane.f32.xlu0 %v4396
    %v4398 = vpop.xlane.xlu0 %4397
    %v4399 = vsel %vm164, %v4395, 0.0
    %4400 = vadd.xlane.f32.xlu0 %v4399
    %v4401 = vpop.xlane.xlu0 %4400
    %v4402 = vsub.f32 %v4120, 1.0
    %v4403 = vmul.f32 %v4402, 1e+30
    %v4405 = vlaneseq
    %v4406 = vshrl.u32 %v4405, 7
    %v4407 = vsub.s32 0, %v4406
    %v4408 = vrot.slane %v4403, %v4407
    %4410 = vbcast.lane.b32.xlu0 %v4408, 256
    %v4411 = vpop.permute.xlu0 %4410
    %v4412 = vlaneseq
    %v4413 = vshrl.u32 %v4412, 7
    %v4414 = vsub.s32 1, %v4413
    %v4415 = vrot.slane %v4403, %v4414
    %4417 = vbcast.lane.b32.xlu0 %v4415, 256
    %v4418 = vpop.permute.xlu0 %4417
    %v4421 = vadd.f32 %v4398, %v4411
    %v4422 = vadd.f32 %v4401, %v4418
    %4425 = vset.pattern.permute.xlu0 0
    %4426 = vperm.xlu0 %4425, %v4421
    %v4427 = vpop.permute.xlu0 %4426
    %4428 = vset.pattern.permute.xlu0 0
    %4429 = vperm.xlu0 %4428, %v4422
    %v4430 = vpop.permute.xlu0 %4429
    %v4431 = vlaneseq
    %v4432 = vshrl.u32 %v4431, 7
    %v4433 = vsub.s32 %v1731, %v4432
    %v4434 = vrot.slane %v4427, %v4433
    %v4435 = vlaneseq
    %v4436 = vshrl.u32 %v4435, 7
    %v4437 = vsub.s32 %v1731, %v4436
    %v4438 = vrot.slane %v4430, %v4437
    %v4439 = vsel %vm380, %v4438, %v4434
    %v4441 = vsel %vm1989, %v4439, -inf
    %4442 = vmax.xlane.f32.xlu0 %v4441
    %v4443 = vpop.xlane.xlu0 %4442
    %v4445 = vlaneseq
    %v4446 = vshrl.u32 %v4445, 7
    %v4447 = vsub.s32 0, %v4446
    %v4448 = vrot.slane %v4443, %v4447
    %v4449 = vlaneseq
    %v4450 = vshrl.u32 %v4449, 7
    %v4451 = vsub.s32 1, %v4450
    %v4452 = vrot.slane %v4443, %v4451
    %v4455 = vsub.f32 %v4421, %v4448
    %v4456 = vsub.f32 %v4422, %v4452
    %v4457 = vmul.f32 %v4455, 1.442695
    %v4458 = vpow.pop %v4457
    %v4459 = vmul.f32 %v4456, 1.442695
    %v4460 = vpow.pop %v4459
    %4463 = vset.pattern.permute.xlu0 0
    %4464 = vperm.xlu0 %4463, %v4458
    %v4465 = vpop.permute.xlu0 %4464
    %4466 = vset.pattern.permute.xlu0 0
    %4467 = vperm.xlu0 %4466, %v4460
    %v4468 = vpop.permute.xlu0 %4467
    %v4469 = vlaneseq
    %v4470 = vshrl.u32 %v4469, 7
    %v4471 = vsub.s32 %v1731, %v4470
    %v4472 = vrot.slane %v4465, %v4471
    %v4473 = vlaneseq
    %v4474 = vshrl.u32 %v4473, 7
    %v4475 = vsub.s32 %v1731, %v4474
    %v4476 = vrot.slane %v4468, %v4475
    %v4477 = vsel %vm380, %v4476, %v4472
    %v4479 = vsel %vm1989, %v4477, 0.0
    %4480 = vadd.xlane.f32.xlu0 %v4479
    %v4481 = vpop.xlane.xlu0 %4480
    %v4483 = vlaneseq
    %v4484 = vshrl.u32 %v4483, 7
    %v4485 = vsub.s32 0, %v4484
    %v4486 = vrot.slane %v4481, %v4485
    %v4487 = vlaneseq
    %v4488 = vshrl.u32 %v4487, 7
    %v4489 = vsub.s32 1, %v4488
    %v4490 = vrot.slane %v4481, %v4489
    %v4493 = vrcp.pop %v4486
    %v4494 = vmul.f32 %v4458, %v4493
    %v4495 = vrcp.pop %v4490
    %v4496 = vmul.f32 %v4460, %v4495
    %4498 = vset.pattern.permute.xlu0 0
    %4499 = vperm.xlu0 %4498, %v4494
    %v4500 = vpop.permute.xlu0 %4499
    %4503 = vset.pattern.permute.xlu0 0
    %4504 = vperm.xlu0 %4503, %v4496
    %v4505 = vpop.permute.xlu0 %4504
    %v4507 = vmul.f32 %v1548, %v4500
    %v4508 = vmul.f32 %v1553, %v4505
    %v4509 = vsel %vm164, %v4507, 0.0
    %v4510 = vrot.slane %v4509, 4
    %v4511 = vadd.f32 %v4509, %v4510
    %v4512 = vrot.slane %v4511, 2
    %v4513 = vadd.f32 %v4511, %v4512
    %v4514 = vrot.slane %v4513, 1
    %v4515 = vadd.f32 %v4513, %v4514
    %v4516 = vsel %vm164, %v4508, 0.0
    %v4517 = vrot.slane %v4516, 4
    %v4518 = vadd.f32 %v4516, %v4517
    %v4519 = vrot.slane %v4518, 2
    %v4520 = vadd.f32 %v4518, %v4519
    %v4521 = vrot.slane %v4520, 1
    %v4522 = vadd.f32 %v4520, %v4521
    %v4523 = vrot.slane %v4354, 1
    %4524 = vrot.lane.b32.xlu0 %v4354, 96
    %v4525 = vpop.permute.xlu0 %4524
    %4526 = vrot.lane.b32.xlu0 %v4523, 96
    %v4527 = vpop.permute.xlu0 %4526
    %v4530 = vadd.f32 %v4515, %v4525
    %v4531 = vadd.f32 %v4522, %v4527
    %v4532 = vtanh.pop %v4530
    %v4533 = vtanh.pop %v4531
    %v4535 = vlaneseq
    %v4536 = vshrl.u32 %v4535, 7
    %v4537 = vsub.s32 0, %v4536
    %v4538 = vrot.slane %v4120, %v4537
    %4540 = vbcast.lane.b32.xlu0 %v4538, 256
    %v4541 = vpop.permute.xlu0 %4540
    %v4542 = vlaneseq
    %v4543 = vshrl.u32 %v4542, 7
    %v4544 = vsub.s32 1, %v4543
    %v4545 = vrot.slane %v4120, %v4544
    %4547 = vbcast.lane.b32.xlu0 %v4545, 256
    %v4548 = vpop.permute.xlu0 %4547
    %v4551 = vmul.f32 %v4494, %v4541
    %v4552 = vmul.f32 %v4496, %v4548
    %4555 = vset.pattern.permute.xlu0 0
    %4556 = vperm.xlu0 %4555, %v4551
    %v4557 = vpop.permute.xlu0 %4556
    %4558 = vset.pattern.permute.xlu0 0
    %4559 = vperm.xlu0 %4558, %v4552
    %v4560 = vpop.permute.xlu0 %4559
    %v4561 = vlaneseq
    %v4562 = vshrl.u32 %v4561, 7
    %v4563 = vsub.s32 %v1731, %v4562
    %v4564 = vrot.slane %v4557, %v4563
    %v4565 = vlaneseq
    %v4566 = vshrl.u32 %v4565, 7
    %v4567 = vsub.s32 %v1731, %v4566
    %v4568 = vrot.slane %v4560, %v4567
    %v4569 = vsel %vm380, %v4568, %v4564
    %v4571 = vsel %vm1989, %v4569, -inf
    %4572 = vmax.xlane.f32.xlu0 %v4571
    %v4573 = vpop.xlane.xlu0 %4572
    %v4575 = vlaneseq
    %v4576 = vshrl.u32 %v4575, 7
    %v4577 = vsub.s32 0, %v4576
    %v4578 = vrot.slane %v4573, %v4577
    %v4579 = vlaneseq
    %v4580 = vshrl.u32 %v4579, 7
    %v4581 = vsub.s32 1, %v4580
    %v4582 = vrot.slane %v4573, %v4581
    %vm4585 = vcmp.eq.f32.partialorder %v4551, %v4578
    %vm4586 = vcmp.eq.f32.partialorder %v4552, %v4582
    %v4587 = vsel %vm4585, %v2112, 8.0
    %v4588 = vsel %vm4586, %v2112, 8.0
    %4591 = vset.pattern.permute.xlu0 0
    %4592 = vperm.xlu0 %4591, %v4587
    %v4593 = vpop.permute.xlu0 %4592
    %4594 = vset.pattern.permute.xlu0 0
    %4595 = vperm.xlu0 %4594, %v4588
    %v4596 = vpop.permute.xlu0 %4595
    %v4597 = vlaneseq
    %v4598 = vshrl.u32 %v4597, 7
    %v4599 = vsub.s32 %v1731, %v4598
    %v4600 = vrot.slane %v4593, %v4599
    %v4601 = vlaneseq
    %v4602 = vshrl.u32 %v4601, 7
    %v4603 = vsub.s32 %v1731, %v4602
    %v4604 = vrot.slane %v4596, %v4603
    %v4605 = vsel %vm380, %v4604, %v4600
    %v4607 = vsel %vm1989, %v4605, inf
    %4608 = vmin.xlane.f32.xlu0 %v4607
    %v4609 = vpop.xlane.xlu0 %4608
    %vm4610 = vcmp.eq.f32.partialorder %v1732, %v4609
    %v4611 = vsel %vm4610, 1, 0
    %v4612 = vcvt.s32.f32 %v4611
    %v4613 = vsub.f32 1.0, %v4612
    %v4614 = vmul.f32 %v4120, %v4613
    %v4615 = vlaneseq
    %v4616 = vshrl.u32 %v4615, 7
    %v4617 = vsub.s32 0, %v4616
    %v4618 = vrot.slane %v4612, %v4617
    %4620 = vbcast.lane.b32.xlu0 %v4618, 256
    %v4621 = vpop.permute.xlu0 %4620
    %v4622 = vlaneseq
    %v4623 = vshrl.u32 %v4622, 7
    %v4624 = vsub.s32 1, %v4623
    %v4625 = vrot.slane %v4612, %v4624
    %4627 = vbcast.lane.b32.xlu0 %v4625, 256
    %v4628 = vpop.permute.xlu0 %4627
    %v4629 = vmul.f32 %v4621, %v1634
    %v4630 = vmul.f32 %v4628, %v1639
    %v4631 = vrot.slane %v4629, 4
    %v4632 = vadd.f32 %v4629, %v4631
    %v4633 = vrot.slane %v4632, 2
    %v4634 = vadd.f32 %v4632, %v4633
    %v4635 = vrot.slane %v4634, 1
    %v4636 = vadd.f32 %v4634, %v4635
    %v4637 = vrot.slane %v4630, 4
    %v4638 = vadd.f32 %v4630, %v4637
    %v4639 = vrot.slane %v4638, 2
    %v4640 = vadd.f32 %v4638, %v4639
    %v4641 = vrot.slane %v4640, 1
    %v4642 = vadd.f32 %v4640, %v4641
    %v4645 = vrot.slane %v4533, 7
    %v4646 = vsel %vm380, %v4645, %v4532
    %v4647 = vsel %vm164, %v4646, 0
    %4649 = vmatprep.subr.mxu0 0.0
    %4650 = vmatpush1.msra.mxu0 %v1716
    %4651 = vmatprep.subr.mxu0 0.0
    %4652 = vmatpush1.msra.mxu0 %v1717
    %4653 = vmatprep.subr.mxu0 0.0
    %4654 = vmatpush1.msra.mxu0 %v1718
    %4655 = vmatprep.subr.mxu0 0.0
    %4656 = vmatpush1.msra.mxu0 %v1719
    %4657 = vmatprep.subr.mxu0 0.0
    %4658 = vmatpush1.msra.mxu0 0.0
    %4659 = vmatprep.subr.mxu0 0.0
    %4660 = vmatpush1.msra.mxu0 0.0
    %4661 = vmatprep.subr.mxu0 0.0
    %4662 = vmatpush1.msra.mxu0 0.0
    %4663 = vmatprep.subr.mxu0 0.0
    %4664 = vmatpush1.msra.mxu0 0.0
    %4665 = vmatprep.subr.mxu0 0.0
    %4666 = vmatpush1.msra.mxu0 0.0
    %4667 = vmatprep.subr.mxu0 0.0
    %4668 = vmatpush1.msra.mxu0 0.0
    %4669 = vmatprep.subr.mxu0 0.0
    %4670 = vmatpush1.msra.mxu0 0.0
    %4671 = vmatprep.subr.mxu0 0.0
    %4672 = vmatpush1.msra.mxu0 0.0
    %4673 = vmatprep.subr.mxu0 0.0
    %4674 = vmatpush1.msra.mxu0 0.0
    %4675 = vmatprep.subr.mxu0 0.0
    %4676 = vmatpush1.msra.mxu0 0.0
    %4677 = vmatprep.subr.mxu0 0.0
    %4678 = vmatpush1.msra.mxu0 0.0
    %4679 = vmatprep.subr.mxu0 0.0
    %4680 = vmatpush1.msra.mxu0 0.0
    %4681 = vmatprep.subr.mxu0 0.0
    %4682 = vmatpush1.msra.mxu0 0.0
    %4683 = vmatprep.subr.mxu0 0.0
    %4684 = vmatpush1.msra.mxu0 0.0
    %4685 = vmatprep.subr.mxu0 0.0
    %4686 = vmatpush1.msra.mxu0 0.0
    %4687 = vmatprep.subr.mxu0 0.0
    %4688 = vmatpush1.msra.mxu0 0.0
    %4689 = vmatprep.subr.mxu0 0.0
    %4690 = vmatpush1.msra.mxu0 0.0
    %4691 = vmatprep.subr.mxu0 0.0
    %4692 = vmatpush1.msra.mxu0 0.0
    %4693 = vmatprep.subr.mxu0 0.0
    %4694 = vmatpush1.msra.mxu0 0.0
    %4695 = vmatprep.subr.mxu0 0.0
    %4696 = vmatpush1.msra.mxu0 0.0
    %4697 = vmatprep.subr.mxu0 0.0
    %4698 = vmatpush1.msra.mxu0 0.0
    %4699 = vmatprep.subr.mxu0 0.0
    %4700 = vmatpush1.msra.mxu0 0.0
    %4701 = vmatprep.subr.mxu0 0.0
    %4702 = vmatpush1.msra.mxu0 0.0
    %4703 = vmatprep.subr.mxu0 0.0
    %4704 = vmatpush1.msra.mxu0 0.0
    %4705 = vmatprep.subr.mxu0 0.0
    %4706 = vmatpush1.msra.mxu0 0.0
    %4707 = vmatprep.subr.mxu0 0.0
    %4708 = vmatpush1.msra.mxu0 0.0
    %4709 = vmatprep.subr.mxu0 0.0
    %4710 = vmatpush1.msra.mxu0 0.0
    %4711 = vmatprep.subr.mxu0 0.0
    %4712 = vmatpush1.msra.mxu0 0.0
    %4713 = vmatprep.mubr.f32.mxu0 0.0
    %4714 = vmatmul.mubr.f32.gmra.mrb[0].mxu0 %v4647
    %v4715 = vpop.f32.mrb[0].mxu0
    %v4716 = vadd.f32 0.0, %v4715
    %v4717 = vpop.f32.mrb[0].mxu0
    %4718 = vdwg.mxu0
    %v4720 = vrot.slane %v4716, 1
    %v4723 = vadd.f32 %v4636, %v4716
    %v4724 = vadd.f32 %v4642, %v4720
    %v4725 = vxor.u32 %v4723, 2147483648
    %v4726 = vxor.u32 %v4724, 2147483648
    %v4727 = vmul.f32 %v4725, 1.442695
    %v4728 = vpow.pop %v4727
    %v4729 = vmul.f32 %v4726, 1.442695
    %v4730 = vpow.pop %v4729
    %v4731 = vadd.f32 %v4728, 1.0
    %v4732 = vadd.f32 %v4730, 1.0
    %v4733 = vrcp.pop %v4731
    %v4734 = vmul.f32 1.0, %v4733
    %v4735 = vrcp.pop %v4732
    %v4736 = vmul.f32 1.0, %v4735
    %v4737 = vtanh.pop %v4723
    %v4738 = vtanh.pop %v4724
    %v4739 = vmul.f32 %v4734, %v4265
    %v4740 = vmul.f32 %v4736, %v4266
    %4743 = vrot.lane.b32.xlu0 %v4737, 64
    %v4744 = vpop.permute.xlu0 %4743
    %4745 = vrot.lane.b32.xlu0 %v4738, 64
    %v4746 = vpop.permute.xlu0 %4745
    %v4749 = vmul.f32 %v4734, %v4744
    %v4750 = vmul.f32 %v4736, %v4746
    %4753 = vrot.lane.b32.xlu0 %v4749, 32
    %v4754 = vpop.permute.xlu0 %4753
    %4755 = vrot.lane.b32.xlu0 %v4750, 32
    %v4756 = vpop.permute.xlu0 %4755
    %v4759 = vadd.f32 %v4739, %v4754
    %v4760 = vadd.f32 %v4740, %v4756
    %v4761 = vtanh.pop %v4759
    %v4762 = vtanh.pop %v4760
    %4765 = vrot.lane.b32.xlu0 %v4761, 64
    %v4766 = vpop.permute.xlu0 %4765
    %4767 = vrot.lane.b32.xlu0 %v4762, 64
    %v4768 = vpop.permute.xlu0 %4767
    %v4771 = vmul.f32 %v4734, %v4766
    %v4772 = vmul.f32 %v4736, %v4768
    %v4775 = vrot.slane %v4772, 7
    %v4776 = vsel %vm380, %v4775, %v4771
    %4777 = vrot.lane.b32.xlu0 %v4776, 32
    %v4778 = vpop.permute.xlu0 %4777
    %v4779 = vsel %vm164, %v4778, 0
    %4781 = vmatprep.subr.mxu0 0.0
    %4782 = vmatpush1.msra.mxu0 %v1720
    %4783 = vmatprep.subr.mxu0 0.0
    %4784 = vmatpush1.msra.mxu0 %v1721
    %4785 = vmatprep.subr.mxu0 0.0
    %4786 = vmatpush1.msra.mxu0 %v1722
    %4787 = vmatprep.subr.mxu0 0.0
    %4788 = vmatpush1.msra.mxu0 %v1723
    %4789 = vmatprep.subr.mxu0 0.0
    %4790 = vmatpush1.msra.mxu0 0.0
    %4791 = vmatprep.subr.mxu0 0.0
    %4792 = vmatpush1.msra.mxu0 0.0
    %4793 = vmatprep.subr.mxu0 0.0
    %4794 = vmatpush1.msra.mxu0 0.0
    %4795 = vmatprep.subr.mxu0 0.0
    %4796 = vmatpush1.msra.mxu0 0.0
    %4797 = vmatprep.subr.mxu0 0.0
    %4798 = vmatpush1.msra.mxu0 0.0
    %4799 = vmatprep.subr.mxu0 0.0
    %4800 = vmatpush1.msra.mxu0 0.0
    %4801 = vmatprep.subr.mxu0 0.0
    %4802 = vmatpush1.msra.mxu0 0.0
    %4803 = vmatprep.subr.mxu0 0.0
    %4804 = vmatpush1.msra.mxu0 0.0
    %4805 = vmatprep.subr.mxu0 0.0
    %4806 = vmatpush1.msra.mxu0 0.0
    %4807 = vmatprep.subr.mxu0 0.0
    %4808 = vmatpush1.msra.mxu0 0.0
    %4809 = vmatprep.subr.mxu0 0.0
    %4810 = vmatpush1.msra.mxu0 0.0
    %4811 = vmatprep.subr.mxu0 0.0
    %4812 = vmatpush1.msra.mxu0 0.0
    %4813 = vmatprep.subr.mxu0 0.0
    %4814 = vmatpush1.msra.mxu0 0.0
    %4815 = vmatprep.subr.mxu0 0.0
    %4816 = vmatpush1.msra.mxu0 0.0
    %4817 = vmatprep.subr.mxu0 0.0
    %4818 = vmatpush1.msra.mxu0 0.0
    %4819 = vmatprep.subr.mxu0 0.0
    %4820 = vmatpush1.msra.mxu0 0.0
    %4821 = vmatprep.subr.mxu0 0.0
    %4822 = vmatpush1.msra.mxu0 0.0
    %4823 = vmatprep.subr.mxu0 0.0
    %4824 = vmatpush1.msra.mxu0 0.0
    %4825 = vmatprep.subr.mxu0 0.0
    %4826 = vmatpush1.msra.mxu0 0.0
    %4827 = vmatprep.subr.mxu0 0.0
    %4828 = vmatpush1.msra.mxu0 0.0
    %4829 = vmatprep.subr.mxu0 0.0
    %4830 = vmatpush1.msra.mxu0 0.0
    %4831 = vmatprep.subr.mxu0 0.0
    %4832 = vmatpush1.msra.mxu0 0.0
    %4833 = vmatprep.subr.mxu0 0.0
    %4834 = vmatpush1.msra.mxu0 0.0
    %4835 = vmatprep.subr.mxu0 0.0
    %4836 = vmatpush1.msra.mxu0 0.0
    %4837 = vmatprep.subr.mxu0 0.0
    %4838 = vmatpush1.msra.mxu0 0.0
    %4839 = vmatprep.subr.mxu0 0.0
    %4840 = vmatpush1.msra.mxu0 0.0
    %4841 = vmatprep.subr.mxu0 0.0
    %4842 = vmatpush1.msra.mxu0 0.0
    %4843 = vmatprep.subr.mxu0 0.0
    %4844 = vmatpush1.msra.mxu0 0.0
    %4845 = vmatprep.mubr.f32.mxu0 0.0
    %4846 = vmatmul.mubr.f32.gmra.mrb[0].mxu0 %v4779
    %v4847 = vpop.f32.mrb[0].mxu0
    %v4848 = vadd.f32 %v1847, %v4847
    %v4849 = vpop.f32.mrb[0].mxu0
    %4850 = vdwg.mxu0
    %v4853 = vunpack.c.l.s4 1966171168
    %v4854 = vunpack.c.0.s8 %v4853
    %v4855 = vlaneseq
    %v4856 = vshrl.u32 %v4855, 7
    %v4857 = vsub.s32 %v4854, %v4856
    %v4858 = vrot.slane %v4848, %v4857
    %v4859 = vcombine.high %v4858, %v4858
    %v4861 = vunpack.c.l.s4 1966171168
    %v4862 = vunpack.c.0.s8 %v4861
    %v4863 = vlaneseq
    %v4864 = vshrl.u32 %v4863, 7
    %v4865 = vsub.s32 %v4862, %v4864
    %v4866 = vrot.slane %v4858, %v4865
    %v4868 = vunpack.c.l.s4 1966171168
    %v4869 = vunpack.c.0.s8 %v4868
    %v4870 = vlaneseq
    %v4871 = vshrl.u32 %v4870, 7
    %v4872 = vsub.s32 %v4869, %v4871
    %v4873 = vrot.slane %v4859, %v4872
    %v4874 = vlaneseq
    %v4875 = vshrl.u32 %v4874, 7
    %v4876 = vsub.s32 0, %v4875
    %v4877 = vrot.slane %v4866, %v4876
    %v4878 = vlaneseq
    %v4879 = vshrl.u32 %v4878, 7
    %v4880 = vsub.s32 0, %v4879
    %v4881 = vrot.slane %v4873, %v4880
    %v4884 = vadd.f32 %v4877, %v1463
    %v4885 = vadd.f32 %v4881, %v1468
    %v4886 = vtanh.pop %v4884
    %v4887 = vtanh.pop %v4885
    %v4888 = vmul.f32 %v4886, %v1965
    %v4889 = vmul.f32 %v4887, %v1965
    %v4890 = vsel %vm164, %v4888, 0.0
    %4891 = vadd.xlane.f32.xlu0 %v4890
    %v4892 = vpop.xlane.xlu0 %4891
    %v4893 = vsel %vm164, %v4889, 0.0
    %4894 = vadd.xlane.f32.xlu0 %v4893
    %v4895 = vpop.xlane.xlu0 %4894
    %v4896 = vsub.f32 %v4614, 1.0
    %v4897 = vmul.f32 %v4896, 1e+30
    %v4899 = vlaneseq
    %v4900 = vshrl.u32 %v4899, 7
    %v4901 = vsub.s32 0, %v4900
    %v4902 = vrot.slane %v4897, %v4901
    %4904 = vbcast.lane.b32.xlu0 %v4902, 256
    %v4905 = vpop.permute.xlu0 %4904
    %v4906 = vlaneseq
    %v4907 = vshrl.u32 %v4906, 7
    %v4908 = vsub.s32 1, %v4907
    %v4909 = vrot.slane %v4897, %v4908
    %4911 = vbcast.lane.b32.xlu0 %v4909, 256
    %v4912 = vpop.permute.xlu0 %4911
    %v4915 = vadd.f32 %v4892, %v4905
    %v4916 = vadd.f32 %v4895, %v4912
    %4919 = vset.pattern.permute.xlu0 0
    %4920 = vperm.xlu0 %4919, %v4915
    %v4921 = vpop.permute.xlu0 %4920
    %4922 = vset.pattern.permute.xlu0 0
    %4923 = vperm.xlu0 %4922, %v4916
    %v4924 = vpop.permute.xlu0 %4923
    %v4925 = vlaneseq
    %v4926 = vshrl.u32 %v4925, 7
    %v4927 = vsub.s32 %v1731, %v4926
    %v4928 = vrot.slane %v4921, %v4927
    %v4929 = vlaneseq
    %v4930 = vshrl.u32 %v4929, 7
    %v4931 = vsub.s32 %v1731, %v4930
    %v4932 = vrot.slane %v4924, %v4931
    %v4933 = vsel %vm380, %v4932, %v4928
    %v4935 = vsel %vm1989, %v4933, -inf
    %4936 = vmax.xlane.f32.xlu0 %v4935
    %v4937 = vpop.xlane.xlu0 %4936
    %v4939 = vlaneseq
    %v4940 = vshrl.u32 %v4939, 7
    %v4941 = vsub.s32 0, %v4940
    %v4942 = vrot.slane %v4937, %v4941
    %v4943 = vlaneseq
    %v4944 = vshrl.u32 %v4943, 7
    %v4945 = vsub.s32 1, %v4944
    %v4946 = vrot.slane %v4937, %v4945
    %v4949 = vsub.f32 %v4915, %v4942
    %v4950 = vsub.f32 %v4916, %v4946
    %v4951 = vmul.f32 %v4949, 1.442695
    %v4952 = vpow.pop %v4951
    %v4953 = vmul.f32 %v4950, 1.442695
    %v4954 = vpow.pop %v4953
    %4957 = vset.pattern.permute.xlu0 0
    %4958 = vperm.xlu0 %4957, %v4952
    %v4959 = vpop.permute.xlu0 %4958
    %4960 = vset.pattern.permute.xlu0 0
    %4961 = vperm.xlu0 %4960, %v4954
    %v4962 = vpop.permute.xlu0 %4961
    %v4963 = vlaneseq
    %v4964 = vshrl.u32 %v4963, 7
    %v4965 = vsub.s32 %v1731, %v4964
    %v4966 = vrot.slane %v4959, %v4965
    %v4967 = vlaneseq
    %v4968 = vshrl.u32 %v4967, 7
    %v4969 = vsub.s32 %v1731, %v4968
    %v4970 = vrot.slane %v4962, %v4969
    %v4971 = vsel %vm380, %v4970, %v4966
    %v4973 = vsel %vm1989, %v4971, 0.0
    %4974 = vadd.xlane.f32.xlu0 %v4973
    %v4975 = vpop.xlane.xlu0 %4974
    %v4977 = vlaneseq
    %v4978 = vshrl.u32 %v4977, 7
    %v4979 = vsub.s32 0, %v4978
    %v4980 = vrot.slane %v4975, %v4979
    %v4981 = vlaneseq
    %v4982 = vshrl.u32 %v4981, 7
    %v4983 = vsub.s32 1, %v4982
    %v4984 = vrot.slane %v4975, %v4983
    %v4987 = vrcp.pop %v4980
    %v4988 = vmul.f32 %v4952, %v4987
    %v4989 = vrcp.pop %v4984
    %v4990 = vmul.f32 %v4954, %v4989
    %4992 = vset.pattern.permute.xlu0 0
    %4993 = vperm.xlu0 %4992, %v4988
    %v4994 = vpop.permute.xlu0 %4993
    %4997 = vset.pattern.permute.xlu0 0
    %4998 = vperm.xlu0 %4997, %v4990
    %v4999 = vpop.permute.xlu0 %4998
    %v5001 = vmul.f32 %v1548, %v4994
    %v5002 = vmul.f32 %v1553, %v4999
    %v5003 = vsel %vm164, %v5001, 0.0
    %v5004 = vrot.slane %v5003, 4
    %v5005 = vadd.f32 %v5003, %v5004
    %v5006 = vrot.slane %v5005, 2
    %v5007 = vadd.f32 %v5005, %v5006
    %v5008 = vrot.slane %v5007, 1
    %v5009 = vadd.f32 %v5007, %v5008
    %v5010 = vsel %vm164, %v5002, 0.0
    %v5011 = vrot.slane %v5010, 4
    %v5012 = vadd.f32 %v5010, %v5011
    %v5013 = vrot.slane %v5012, 2
    %v5014 = vadd.f32 %v5012, %v5013
    %v5015 = vrot.slane %v5014, 1
    %v5016 = vadd.f32 %v5014, %v5015
    %v5017 = vrot.slane %v4848, 1
    %5018 = vrot.lane.b32.xlu0 %v4848, 96
    %v5019 = vpop.permute.xlu0 %5018
    %5020 = vrot.lane.b32.xlu0 %v5017, 96
    %v5021 = vpop.permute.xlu0 %5020
    %v5024 = vadd.f32 %v5009, %v5019
    %v5025 = vadd.f32 %v5016, %v5021
    %v5026 = vtanh.pop %v5024
    %v5027 = vtanh.pop %v5025
    %v5029 = vlaneseq
    %v5030 = vshrl.u32 %v5029, 7
    %v5031 = vsub.s32 0, %v5030
    %v5032 = vrot.slane %v4614, %v5031
    %5034 = vbcast.lane.b32.xlu0 %v5032, 256
    %v5035 = vpop.permute.xlu0 %5034
    %v5036 = vlaneseq
    %v5037 = vshrl.u32 %v5036, 7
    %v5038 = vsub.s32 1, %v5037
    %v5039 = vrot.slane %v4614, %v5038
    %5041 = vbcast.lane.b32.xlu0 %v5039, 256
    %v5042 = vpop.permute.xlu0 %5041
    %v5045 = vmul.f32 %v4988, %v5035
    %v5046 = vmul.f32 %v4990, %v5042
    %5049 = vset.pattern.permute.xlu0 0
    %5050 = vperm.xlu0 %5049, %v5045
    %v5051 = vpop.permute.xlu0 %5050
    %5052 = vset.pattern.permute.xlu0 0
    %5053 = vperm.xlu0 %5052, %v5046
    %v5054 = vpop.permute.xlu0 %5053
    %v5055 = vlaneseq
    %v5056 = vshrl.u32 %v5055, 7
    %v5057 = vsub.s32 %v1731, %v5056
    %v5058 = vrot.slane %v5051, %v5057
    %v5059 = vlaneseq
    %v5060 = vshrl.u32 %v5059, 7
    %v5061 = vsub.s32 %v1731, %v5060
    %v5062 = vrot.slane %v5054, %v5061
    %v5063 = vsel %vm380, %v5062, %v5058
    %v5065 = vsel %vm1989, %v5063, -inf
    %5066 = vmax.xlane.f32.xlu0 %v5065
    %v5067 = vpop.xlane.xlu0 %5066
    %v5069 = vlaneseq
    %v5070 = vshrl.u32 %v5069, 7
    %v5071 = vsub.s32 0, %v5070
    %v5072 = vrot.slane %v5067, %v5071
    %v5073 = vlaneseq
    %v5074 = vshrl.u32 %v5073, 7
    %v5075 = vsub.s32 1, %v5074
    %v5076 = vrot.slane %v5067, %v5075
    %vm5079 = vcmp.eq.f32.partialorder %v5045, %v5072
    %vm5080 = vcmp.eq.f32.partialorder %v5046, %v5076
    %v5081 = vsel %vm5079, %v2112, 8.0
    %v5082 = vsel %vm5080, %v2112, 8.0
    %5085 = vset.pattern.permute.xlu0 0
    %5086 = vperm.xlu0 %5085, %v5081
    %v5087 = vpop.permute.xlu0 %5086
    %5088 = vset.pattern.permute.xlu0 0
    %5089 = vperm.xlu0 %5088, %v5082
    %v5090 = vpop.permute.xlu0 %5089
    %v5091 = vlaneseq
    %v5092 = vshrl.u32 %v5091, 7
    %v5093 = vsub.s32 %v1731, %v5092
    %v5094 = vrot.slane %v5087, %v5093
    %v5095 = vlaneseq
    %v5096 = vshrl.u32 %v5095, 7
    %v5097 = vsub.s32 %v1731, %v5096
    %v5098 = vrot.slane %v5090, %v5097
    %v5099 = vsel %vm380, %v5098, %v5094
    %v5101 = vsel %vm1989, %v5099, inf
    %5102 = vmin.xlane.f32.xlu0 %v5101
    %v5103 = vpop.xlane.xlu0 %5102
    %vm5104 = vcmp.eq.f32.partialorder %v1732, %v5103
    %v5105 = vsel %vm5104, 1, 0
    %v5106 = vcvt.s32.f32 %v5105
    %v5107 = vsub.f32 1.0, %v5106
    %v5108 = vmul.f32 %v4614, %v5107
    %v5109 = vlaneseq
    %v5110 = vshrl.u32 %v5109, 7
    %v5111 = vsub.s32 0, %v5110
    %v5112 = vrot.slane %v5106, %v5111
    %5114 = vbcast.lane.b32.xlu0 %v5112, 256
    %v5115 = vpop.permute.xlu0 %5114
    %v5116 = vlaneseq
    %v5117 = vshrl.u32 %v5116, 7
    %v5118 = vsub.s32 1, %v5117
    %v5119 = vrot.slane %v5106, %v5118
    %5121 = vbcast.lane.b32.xlu0 %v5119, 256
    %v5122 = vpop.permute.xlu0 %5121
    %v5123 = vmul.f32 %v5115, %v1634
    %v5124 = vmul.f32 %v5122, %v1639
    %v5125 = vrot.slane %v5123, 4
    %v5126 = vadd.f32 %v5123, %v5125
    %v5127 = vrot.slane %v5126, 2
    %v5128 = vadd.f32 %v5126, %v5127
    %v5129 = vrot.slane %v5128, 1
    %v5130 = vadd.f32 %v5128, %v5129
    %v5131 = vrot.slane %v5124, 4
    %v5132 = vadd.f32 %v5124, %v5131
    %v5133 = vrot.slane %v5132, 2
    %v5134 = vadd.f32 %v5132, %v5133
    %v5135 = vrot.slane %v5134, 1
    %v5136 = vadd.f32 %v5134, %v5135
    %v5139 = vrot.slane %v5027, 7
    %v5140 = vsel %vm380, %v5139, %v5026
    %v5141 = vsel %vm164, %v5140, 0
    %5143 = vmatprep.subr.mxu0 0.0
    %5144 = vmatpush1.msra.mxu0 %v1716
    %5145 = vmatprep.subr.mxu0 0.0
    %5146 = vmatpush1.msra.mxu0 %v1717
    %5147 = vmatprep.subr.mxu0 0.0
    %5148 = vmatpush1.msra.mxu0 %v1718
    %5149 = vmatprep.subr.mxu0 0.0
    %5150 = vmatpush1.msra.mxu0 %v1719
    %5151 = vmatprep.subr.mxu0 0.0
    %5152 = vmatpush1.msra.mxu0 0.0
    %5153 = vmatprep.subr.mxu0 0.0
    %5154 = vmatpush1.msra.mxu0 0.0
    %5155 = vmatprep.subr.mxu0 0.0
    %5156 = vmatpush1.msra.mxu0 0.0
    %5157 = vmatprep.subr.mxu0 0.0
    %5158 = vmatpush1.msra.mxu0 0.0
    %5159 = vmatprep.subr.mxu0 0.0
    %5160 = vmatpush1.msra.mxu0 0.0
    %5161 = vmatprep.subr.mxu0 0.0
    %5162 = vmatpush1.msra.mxu0 0.0
    %5163 = vmatprep.subr.mxu0 0.0
    %5164 = vmatpush1.msra.mxu0 0.0
    %5165 = vmatprep.subr.mxu0 0.0
    %5166 = vmatpush1.msra.mxu0 0.0
    %5167 = vmatprep.subr.mxu0 0.0
    %5168 = vmatpush1.msra.mxu0 0.0
    %5169 = vmatprep.subr.mxu0 0.0
    %5170 = vmatpush1.msra.mxu0 0.0
    %5171 = vmatprep.subr.mxu0 0.0
    %5172 = vmatpush1.msra.mxu0 0.0
    %5173 = vmatprep.subr.mxu0 0.0
    %5174 = vmatpush1.msra.mxu0 0.0
    %5175 = vmatprep.subr.mxu0 0.0
    %5176 = vmatpush1.msra.mxu0 0.0
    %5177 = vmatprep.subr.mxu0 0.0
    %5178 = vmatpush1.msra.mxu0 0.0
    %5179 = vmatprep.subr.mxu0 0.0
    %5180 = vmatpush1.msra.mxu0 0.0
    %5181 = vmatprep.subr.mxu0 0.0
    %5182 = vmatpush1.msra.mxu0 0.0
    %5183 = vmatprep.subr.mxu0 0.0
    %5184 = vmatpush1.msra.mxu0 0.0
    %5185 = vmatprep.subr.mxu0 0.0
    %5186 = vmatpush1.msra.mxu0 0.0
    %5187 = vmatprep.subr.mxu0 0.0
    %5188 = vmatpush1.msra.mxu0 0.0
    %5189 = vmatprep.subr.mxu0 0.0
    %5190 = vmatpush1.msra.mxu0 0.0
    %5191 = vmatprep.subr.mxu0 0.0
    %5192 = vmatpush1.msra.mxu0 0.0
    %5193 = vmatprep.subr.mxu0 0.0
    %5194 = vmatpush1.msra.mxu0 0.0
    %5195 = vmatprep.subr.mxu0 0.0
    %5196 = vmatpush1.msra.mxu0 0.0
    %5197 = vmatprep.subr.mxu0 0.0
    %5198 = vmatpush1.msra.mxu0 0.0
    %5199 = vmatprep.subr.mxu0 0.0
    %5200 = vmatpush1.msra.mxu0 0.0
    %5201 = vmatprep.subr.mxu0 0.0
    %5202 = vmatpush1.msra.mxu0 0.0
    %5203 = vmatprep.subr.mxu0 0.0
    %5204 = vmatpush1.msra.mxu0 0.0
    %5205 = vmatprep.subr.mxu0 0.0
    %5206 = vmatpush1.msra.mxu0 0.0
    %5207 = vmatprep.mubr.f32.mxu0 0.0
    %5208 = vmatmul.mubr.f32.gmra.mrb[0].mxu0 %v5141
    %v5209 = vpop.f32.mrb[0].mxu0
    %v5210 = vadd.f32 0.0, %v5209
    %v5211 = vpop.f32.mrb[0].mxu0
    %5212 = vdwg.mxu0
    %v5214 = vrot.slane %v5210, 1
    %v5217 = vadd.f32 %v5130, %v5210
    %v5218 = vadd.f32 %v5136, %v5214
    %v5219 = vxor.u32 %v5217, 2147483648
    %v5220 = vxor.u32 %v5218, 2147483648
    %v5221 = vmul.f32 %v5219, 1.442695
    %v5222 = vpow.pop %v5221
    %v5223 = vmul.f32 %v5220, 1.442695
    %v5224 = vpow.pop %v5223
    %v5225 = vadd.f32 %v5222, 1.0
    %v5226 = vadd.f32 %v5224, 1.0
    %v5227 = vrcp.pop %v5225
    %v5228 = vmul.f32 1.0, %v5227
    %v5229 = vrcp.pop %v5226
    %v5230 = vmul.f32 1.0, %v5229
    %v5231 = vtanh.pop %v5217
    %v5232 = vtanh.pop %v5218
    %v5233 = vmul.f32 %v5228, %v4759
    %v5234 = vmul.f32 %v5230, %v4760
    %5237 = vrot.lane.b32.xlu0 %v5231, 64
    %v5238 = vpop.permute.xlu0 %5237
    %5239 = vrot.lane.b32.xlu0 %v5232, 64
    %v5240 = vpop.permute.xlu0 %5239
    %v5243 = vmul.f32 %v5228, %v5238
    %v5244 = vmul.f32 %v5230, %v5240
    %5247 = vrot.lane.b32.xlu0 %v5243, 32
    %v5248 = vpop.permute.xlu0 %5247
    %5249 = vrot.lane.b32.xlu0 %v5244, 32
    %v5250 = vpop.permute.xlu0 %5249
    %v5253 = vadd.f32 %v5233, %v5248
    %v5254 = vadd.f32 %v5234, %v5250
    %v5255 = vtanh.pop %v5253
    %v5256 = vtanh.pop %v5254
    %5259 = vrot.lane.b32.xlu0 %v5255, 64
    %v5260 = vpop.permute.xlu0 %5259
    %5261 = vrot.lane.b32.xlu0 %v5256, 64
    %v5262 = vpop.permute.xlu0 %5261
    %v5265 = vmul.f32 %v5228, %v5260
    %v5266 = vmul.f32 %v5230, %v5262
    %v5269 = vrot.slane %v5266, 7
    %v5270 = vsel %vm380, %v5269, %v5265
    %5271 = vrot.lane.b32.xlu0 %v5270, 32
    %v5272 = vpop.permute.xlu0 %5271
    %v5273 = vsel %vm164, %v5272, 0
    %5275 = vmatprep.subr.mxu0 0.0
    %5276 = vmatpush1.msra.mxu0 %v1720
    %5277 = vmatprep.subr.mxu0 0.0
    %5278 = vmatpush1.msra.mxu0 %v1721
    %5279 = vmatprep.subr.mxu0 0.0
    %5280 = vmatpush1.msra.mxu0 %v1722
    %5281 = vmatprep.subr.mxu0 0.0
    %5282 = vmatpush1.msra.mxu0 %v1723
    %5283 = vmatprep.subr.mxu0 0.0
    %5284 = vmatpush1.msra.mxu0 0.0
    %5285 = vmatprep.subr.mxu0 0.0
    %5286 = vmatpush1.msra.mxu0 0.0
    %5287 = vmatprep.subr.mxu0 0.0
    %5288 = vmatpush1.msra.mxu0 0.0
    %5289 = vmatprep.subr.mxu0 0.0
    %5290 = vmatpush1.msra.mxu0 0.0
    %5291 = vmatprep.subr.mxu0 0.0
    %5292 = vmatpush1.msra.mxu0 0.0
    %5293 = vmatprep.subr.mxu0 0.0
    %5294 = vmatpush1.msra.mxu0 0.0
    %5295 = vmatprep.subr.mxu0 0.0
    %5296 = vmatpush1.msra.mxu0 0.0
    %5297 = vmatprep.subr.mxu0 0.0
    %5298 = vmatpush1.msra.mxu0 0.0
    %5299 = vmatprep.subr.mxu0 0.0
    %5300 = vmatpush1.msra.mxu0 0.0
    %5301 = vmatprep.subr.mxu0 0.0
    %5302 = vmatpush1.msra.mxu0 0.0
    %5303 = vmatprep.subr.mxu0 0.0
    %5304 = vmatpush1.msra.mxu0 0.0
    %5305 = vmatprep.subr.mxu0 0.0
    %5306 = vmatpush1.msra.mxu0 0.0
    %5307 = vmatprep.subr.mxu0 0.0
    %5308 = vmatpush1.msra.mxu0 0.0
    %5309 = vmatprep.subr.mxu0 0.0
    %5310 = vmatpush1.msra.mxu0 0.0
    %5311 = vmatprep.subr.mxu0 0.0
    %5312 = vmatpush1.msra.mxu0 0.0
    %5313 = vmatprep.subr.mxu0 0.0
    %5314 = vmatpush1.msra.mxu0 0.0
    %5315 = vmatprep.subr.mxu0 0.0
    %5316 = vmatpush1.msra.mxu0 0.0
    %5317 = vmatprep.subr.mxu0 0.0
    %5318 = vmatpush1.msra.mxu0 0.0
    %5319 = vmatprep.subr.mxu0 0.0
    %5320 = vmatpush1.msra.mxu0 0.0
    %5321 = vmatprep.subr.mxu0 0.0
    %5322 = vmatpush1.msra.mxu0 0.0
    %5323 = vmatprep.subr.mxu0 0.0
    %5324 = vmatpush1.msra.mxu0 0.0
    %5325 = vmatprep.subr.mxu0 0.0
    %5326 = vmatpush1.msra.mxu0 0.0
    %5327 = vmatprep.subr.mxu0 0.0
    %5328 = vmatpush1.msra.mxu0 0.0
    %5329 = vmatprep.subr.mxu0 0.0
    %5330 = vmatpush1.msra.mxu0 0.0
    %5331 = vmatprep.subr.mxu0 0.0
    %5332 = vmatpush1.msra.mxu0 0.0
    %5333 = vmatprep.subr.mxu0 0.0
    %5334 = vmatpush1.msra.mxu0 0.0
    %5335 = vmatprep.subr.mxu0 0.0
    %5336 = vmatpush1.msra.mxu0 0.0
    %5337 = vmatprep.subr.mxu0 0.0
    %5338 = vmatpush1.msra.mxu0 0.0
    %5339 = vmatprep.mubr.f32.mxu0 0.0
    %5340 = vmatmul.mubr.f32.gmra.mrb[0].mxu0 %v5273
    %v5341 = vpop.f32.mrb[0].mxu0
    %v5342 = vadd.f32 %v1847, %v5341
    %v5343 = vpop.f32.mrb[0].mxu0
    %5344 = vdwg.mxu0
    %v5347 = vunpack.c.l.s4 1966171168
    %v5348 = vunpack.c.0.s8 %v5347
    %v5349 = vlaneseq
    %v5350 = vshrl.u32 %v5349, 7
    %v5351 = vsub.s32 %v5348, %v5350
    %v5352 = vrot.slane %v5342, %v5351
    %v5353 = vcombine.high %v5352, %v5352
    %v5355 = vunpack.c.l.s4 1966171168
    %v5356 = vunpack.c.0.s8 %v5355
    %v5357 = vlaneseq
    %v5358 = vshrl.u32 %v5357, 7
    %v5359 = vsub.s32 %v5356, %v5358
    %v5360 = vrot.slane %v5352, %v5359
    %v5362 = vunpack.c.l.s4 1966171168
    %v5363 = vunpack.c.0.s8 %v5362
    %v5364 = vlaneseq
    %v5365 = vshrl.u32 %v5364, 7
    %v5366 = vsub.s32 %v5363, %v5365
    %v5367 = vrot.slane %v5353, %v5366
    %v5368 = vlaneseq
    %v5369 = vshrl.u32 %v5368, 7
    %v5370 = vsub.s32 0, %v5369
    %v5371 = vrot.slane %v5360, %v5370
    %v5372 = vlaneseq
    %v5373 = vshrl.u32 %v5372, 7
    %v5374 = vsub.s32 0, %v5373
    %v5375 = vrot.slane %v5367, %v5374
    %v5378 = vadd.f32 %v5371, %v1463
    %v5379 = vadd.f32 %v5375, %v1468
    %v5380 = vtanh.pop %v5378
    %v5381 = vtanh.pop %v5379
    %v5382 = vmul.f32 %v5380, %v1965
    %v5383 = vmul.f32 %v5381, %v1965
    %v5384 = vsel %vm164, %v5382, 0.0
    %5385 = vadd.xlane.f32.xlu0 %v5384
    %v5386 = vpop.xlane.xlu0 %5385
    %v5387 = vsel %vm164, %v5383, 0.0
    %5388 = vadd.xlane.f32.xlu0 %v5387
    %v5389 = vpop.xlane.xlu0 %5388
    %v5390 = vsub.f32 %v5108, 1.0
    %v5391 = vmul.f32 %v5390, 1e+30
    %v5393 = vlaneseq
    %v5394 = vshrl.u32 %v5393, 7
    %v5395 = vsub.s32 0, %v5394
    %v5396 = vrot.slane %v5391, %v5395
    %5398 = vbcast.lane.b32.xlu0 %v5396, 256
    %v5399 = vpop.permute.xlu0 %5398
    %v5400 = vlaneseq
    %v5401 = vshrl.u32 %v5400, 7
    %v5402 = vsub.s32 1, %v5401
    %v5403 = vrot.slane %v5391, %v5402
    %5405 = vbcast.lane.b32.xlu0 %v5403, 256
    %v5406 = vpop.permute.xlu0 %5405
    %v5409 = vadd.f32 %v5386, %v5399
    %v5410 = vadd.f32 %v5389, %v5406
    %5413 = vset.pattern.permute.xlu0 0
    %5414 = vperm.xlu0 %5413, %v5409
    %v5415 = vpop.permute.xlu0 %5414
    %5416 = vset.pattern.permute.xlu0 0
    %5417 = vperm.xlu0 %5416, %v5410
    %v5418 = vpop.permute.xlu0 %5417
    %v5419 = vlaneseq
    %v5420 = vshrl.u32 %v5419, 7
    %v5421 = vsub.s32 %v1731, %v5420
    %v5422 = vrot.slane %v5415, %v5421
    %v5423 = vlaneseq
    %v5424 = vshrl.u32 %v5423, 7
    %v5425 = vsub.s32 %v1731, %v5424
    %v5426 = vrot.slane %v5418, %v5425
    %v5427 = vsel %vm380, %v5426, %v5422
    %v5429 = vsel %vm1989, %v5427, -inf
    %5430 = vmax.xlane.f32.xlu0 %v5429
    %v5431 = vpop.xlane.xlu0 %5430
    %v5433 = vlaneseq
    %v5434 = vshrl.u32 %v5433, 7
    %v5435 = vsub.s32 0, %v5434
    %v5436 = vrot.slane %v5431, %v5435
    %v5437 = vlaneseq
    %v5438 = vshrl.u32 %v5437, 7
    %v5439 = vsub.s32 1, %v5438
    %v5440 = vrot.slane %v5431, %v5439
    %v5443 = vsub.f32 %v5409, %v5436
    %v5444 = vsub.f32 %v5410, %v5440
    %v5445 = vmul.f32 %v5443, 1.442695
    %v5446 = vpow.pop %v5445
    %v5447 = vmul.f32 %v5444, 1.442695
    %v5448 = vpow.pop %v5447
    %5451 = vset.pattern.permute.xlu0 0
    %5452 = vperm.xlu0 %5451, %v5446
    %v5453 = vpop.permute.xlu0 %5452
    %5454 = vset.pattern.permute.xlu0 0
    %5455 = vperm.xlu0 %5454, %v5448
    %v5456 = vpop.permute.xlu0 %5455
    %v5457 = vlaneseq
    %v5458 = vshrl.u32 %v5457, 7
    %v5459 = vsub.s32 %v1731, %v5458
    %v5460 = vrot.slane %v5453, %v5459
    %v5461 = vlaneseq
    %v5462 = vshrl.u32 %v5461, 7
    %v5463 = vsub.s32 %v1731, %v5462
    %v5464 = vrot.slane %v5456, %v5463
    %v5465 = vsel %vm380, %v5464, %v5460
    %v5467 = vsel %vm1989, %v5465, 0.0
    %5468 = vadd.xlane.f32.xlu0 %v5467
    %v5469 = vpop.xlane.xlu0 %5468
    %v5471 = vlaneseq
    %v5472 = vshrl.u32 %v5471, 7
    %v5473 = vsub.s32 0, %v5472
    %v5474 = vrot.slane %v5469, %v5473
    %v5475 = vlaneseq
    %v5476 = vshrl.u32 %v5475, 7
    %v5477 = vsub.s32 1, %v5476
    %v5478 = vrot.slane %v5469, %v5477
    %v5481 = vrcp.pop %v5474
    %v5482 = vmul.f32 %v5446, %v5481
    %v5483 = vrcp.pop %v5478
    %v5484 = vmul.f32 %v5448, %v5483
    %v5486 = vlaneseq
    %v5487 = vshrl.u32 %v5486, 7
    %v5488 = vsub.s32 0, %v5487
    %v5489 = vrot.slane %v5108, %v5488
    %5491 = vbcast.lane.b32.xlu0 %v5489, 256
    %v5492 = vpop.permute.xlu0 %5491
    %v5493 = vlaneseq
    %v5494 = vshrl.u32 %v5493, 7
    %v5495 = vsub.s32 1, %v5494
    %v5496 = vrot.slane %v5108, %v5495
    %5498 = vbcast.lane.b32.xlu0 %v5496, 256
    %v5499 = vpop.permute.xlu0 %5498
    %v5502 = vmul.f32 %v5482, %v5492
    %v5503 = vmul.f32 %v5484, %v5499
    %5506 = vset.pattern.permute.xlu0 0
    %5507 = vperm.xlu0 %5506, %v5502
    %v5508 = vpop.permute.xlu0 %5507
    %5509 = vset.pattern.permute.xlu0 0
    %5510 = vperm.xlu0 %5509, %v5503
    %v5511 = vpop.permute.xlu0 %5510
    %v5512 = vlaneseq
    %v5513 = vshrl.u32 %v5512, 7
    %v5514 = vsub.s32 %v1731, %v5513
    %v5515 = vrot.slane %v5508, %v5514
    %v5516 = vlaneseq
    %v5517 = vshrl.u32 %v5516, 7
    %v5518 = vsub.s32 %v1731, %v5517
    %v5519 = vrot.slane %v5511, %v5518
    %v5520 = vsel %vm380, %v5519, %v5515
    %v5522 = vsel %vm1989, %v5520, -inf
    %5523 = vmax.xlane.f32.xlu0 %v5522
    %v5524 = vpop.xlane.xlu0 %5523
    %v5526 = vlaneseq
    %v5527 = vshrl.u32 %v5526, 7
    %v5528 = vsub.s32 0, %v5527
    %v5529 = vrot.slane %v5524, %v5528
    %v5530 = vlaneseq
    %v5531 = vshrl.u32 %v5530, 7
    %v5532 = vsub.s32 1, %v5531
    %v5533 = vrot.slane %v5524, %v5532
    %vm5536 = vcmp.eq.f32.partialorder %v5502, %v5529
    %vm5537 = vcmp.eq.f32.partialorder %v5503, %v5533
    %v5538 = vsel %vm5536, %v2112, 8.0
    %v5539 = vsel %vm5537, %v2112, 8.0
    %5542 = vset.pattern.permute.xlu0 0
    %5543 = vperm.xlu0 %5542, %v5538
    %v5544 = vpop.permute.xlu0 %5543
    %5545 = vset.pattern.permute.xlu0 0
    %5546 = vperm.xlu0 %5545, %v5539
    %v5547 = vpop.permute.xlu0 %5546
    %v5548 = vlaneseq
    %v5549 = vshrl.u32 %v5548, 7
    %v5550 = vsub.s32 %v1731, %v5549
    %v5551 = vrot.slane %v5544, %v5550
    %v5552 = vlaneseq
    %v5553 = vshrl.u32 %v5552, 7
    %v5554 = vsub.s32 %v1731, %v5553
    %v5555 = vrot.slane %v5547, %v5554
    %v5556 = vsel %vm380, %v5555, %v5551
    %v5558 = vsel %vm1989, %v5556, inf
    %5559 = vmin.xlane.f32.xlu0 %v5558
    %v5560 = vpop.xlane.xlu0 %5559
    %v5563 = vlaneseq
    %v5564 = vshrl.u32 %v5563, 7
    %v5565 = vsub.s32 %v1731, %v5564
    %v5566 = vrot.slane %v2524, %v5565
    %v5567 = vlaneseq
    %v5568 = vshrl.u32 %v5567, 7
    %v5569 = vsub.s32 %v1731, %v5568
    %v5570 = vrot.slane %v2529, %v5569
    %v5573 = vlaneseq
    %v5574 = vshrl.u32 %v5573, 7
    %v5575 = vsub.s32 %v1731, %v5574
    %v5576 = vrot.slane %v3018, %v5575
    %v5577 = vlaneseq
    %v5578 = vshrl.u32 %v5577, 7
    %v5579 = vsub.s32 %v1731, %v5578
    %v5580 = vrot.slane %v3023, %v5579
    %v5583 = vlaneseq
    %v5584 = vshrl.u32 %v5583, 7
    %v5585 = vsub.s32 %v1731, %v5584
    %v5586 = vrot.slane %v3512, %v5585
    %v5587 = vlaneseq
    %v5588 = vshrl.u32 %v5587, 7
    %v5589 = vsub.s32 %v1731, %v5588
    %v5590 = vrot.slane %v3517, %v5589
    %v5593 = vlaneseq
    %v5594 = vshrl.u32 %v5593, 7
    %v5595 = vsub.s32 %v1731, %v5594
    %v5596 = vrot.slane %v4006, %v5595
    %v5597 = vlaneseq
    %v5598 = vshrl.u32 %v5597, 7
    %v5599 = vsub.s32 %v1731, %v5598
    %v5600 = vrot.slane %v4011, %v5599
    %v5603 = vlaneseq
    %v5604 = vshrl.u32 %v5603, 7
    %v5605 = vsub.s32 %v1731, %v5604
    %v5606 = vrot.slane %v4500, %v5605
    %v5607 = vlaneseq
    %v5608 = vshrl.u32 %v5607, 7
    %v5609 = vsub.s32 %v1731, %v5608
    %v5610 = vrot.slane %v4505, %v5609
    %v5613 = vlaneseq
    %v5614 = vshrl.u32 %v5613, 7
    %v5615 = vsub.s32 %v1731, %v5614
    %v5616 = vrot.slane %v4994, %v5615
    %v5617 = vlaneseq
    %v5618 = vshrl.u32 %v5617, 7
    %v5619 = vsub.s32 %v1731, %v5618
    %v5620 = vrot.slane %v4999, %v5619
    %5625 = vset.pattern.permute.xlu0 0
    %5626 = vperm.xlu0 %5625, %v5482
    %v5627 = vpop.permute.xlu0 %5626
    %5628 = vset.pattern.permute.xlu0 0
    %5629 = vperm.xlu0 %5628, %v5484
    %v5630 = vpop.permute.xlu0 %5629
    %v5631 = vlaneseq
    %v5632 = vshrl.u32 %v5631, 7
    %v5633 = vsub.s32 %v1731, %v5632
    %v5634 = vrot.slane %v5627, %v5633
    %v5635 = vlaneseq
    %v5636 = vshrl.u32 %v5635, 7
    %v5637 = vsub.s32 %v1731, %v5636
    %v5638 = vrot.slane %v5630, %v5637
    %v5641 = vsel %vm1355, %v2086, %v5566
    %v5642 = vsel %vm1355, %v2090, %v5570
    %v5643 = vsel %vm74, %v5641, %v5576
    %v5644 = vsel %vm74, %v5642, %v5580
    %v5645 = vsel %vm1360, %v5643, %v5586
    %v5646 = vsel %vm1360, %v5644, %v5590
    %v5647 = vsel %vm1363, %v5645, %v5596
    %v5648 = vsel %vm1363, %v5646, %v5600
    %v5649 = vsel %vm1366, %v5647, %v5606
    %v5650 = vsel %vm1366, %v5648, %v5610
    %v5651 = vsel %vm1369, %v5649, %v5616
    %v5652 = vsel %vm1369, %v5650, %v5620
    %v5653 = vsel %vm1372, %v5651, %v5634
    %v5654 = vsel %vm1372, %v5652, %v5638
    %vm5655 = vcmask 64512
    %5656 = vst.msk [vmem:[#allocation2] sm:$0xff] %vm5655, %v5653
    %5657 = vst.msk [vmem:[#allocation2 + $0x8] sm:$0xff] %vm5655, %v5654
    %vm5658 = vcmask 7168
    %v5659 = vsel %vm5658, %v2136, %v2633
    %v5660 = vsel %vm67, %v5659, %v3127
    %vm5661 = vcmask 23552
    %v5662 = vsel %vm5661, %v5660, %v3621
    %vm5663 = vcmask 31744
    %v5664 = vsel %vm5663, %v5662, %v4115
    %vm5665 = vcmask 39936
    %v5666 = vsel %vm5665, %v5664, %v4609
    %vm5667 = vcmask 48128
    %v5668 = vsel %vm5667, %v5666, %v5103
    %vm5669 = vcmask 56320
    %v5670 = vsel %vm5669, %v5668, %v5560
    %v5671 = vcvt.f32.s32.to.zero.pseudo %v5670
    %5672 = vst.msk [vmem:[#allocation4] sm:$0x3] %vm1989, %v5671
    // Predicated region
    $region66: #{pointer_net_forward.1} parent=1 // pred_check
      _
    $region67: #{pointer_net_forward.1} parent=1 // pred_check_branch
      %5674 = sbr.rel (0) target = $region69
    $region68: #{pointer_net_forward.1} parent=1 // pred_region
      %s5676 = ssub.s32 256, 256
      %5677 = vsyncadd [#allocation3], %s5676
      %s5678 = sshll.u32 [#allocation2], 4
      %s5679 = int_to_ptr.vmem [resolvable:$true] %s5678
      %5684 = dma.vmem_to_hbm [thread:$0]  %s5679, 256, %s16, [#allocation3], 128, 128, 8
    $region69: #{pointer_net_forward.1} parent=1 // pred_fallthru
      _
    // Predicated region
    $region70: #{pointer_net_forward.1} parent=1 // pred_check
      _
    $region71: #{pointer_net_forward.1} parent=1 // pred_check_branch
      %5686 = sbr.rel (0) target = $region73
    $region72: #{pointer_net_forward.1} parent=1 // pred_region
      %s5688 = ssub.s32 32, 32
      %5689 = vsyncadd [#allocation5], %s5688
      %s5691 = sshll.u32 [#allocation4], 4
      %s5692 = int_to_ptr.vmem [resolvable:$true] %s5691
      %5694 = dma.vmem_to_hbm [thread:$0]  %s5692, 32, %s17, [#allocation5]
    $region73: #{pointer_net_forward.1} parent=1 // pred_fallthru
      _
    // Predicated region
    $region74: #{pointer_net_forward.1} parent=1 // pred_check
      _
    $region75: #{pointer_net_forward.1} parent=1 // pred_check_branch
      %5696 = sbr.rel (0) target = $region77
    $region76: #{pointer_net_forward.1} parent=1 // pred_region
      %5697 = dma.done [#allocation3], 256
    $region77: #{pointer_net_forward.1} parent=1 // pred_fallthru
      _
    // Predicated region
    $region78: #{pointer_net_forward.1} parent=1 // pred_check
      _
    $region79: #{pointer_net_forward.1} parent=1 // pred_check_branch
      %5699 = sbr.rel (0) target = $region81
    $region80: #{pointer_net_forward.1} parent=1 // pred_region
      %5700 = dma.done [#allocation5], 32
    $region81: #{pointer_net_forward.1} parent=1 // pred_fallthru
      _
    %5701 = vsyncpa [#allocation3], 1
    %5702 = vsyncpa [#allocation5], 1

</llo_original>
